<compile_context>
chip_gen: v6e
topology: v6e:2x2x1
jax: 0.10.0
libtpu: 0.0.40
codegen_flags: <defaults>
</compile_context>

<pallas_src>
import functools
import math

import jax
import jax.numpy as jnp
from jax.experimental import pallas as pl
from jax.experimental.pallas import tpu as pltpu


# ----------------------------- VMEM budget -----------------------------

def _vmem_limit_bytes():
    cap = None
    try:
        info = pltpu.get_tpu_info()
        cap = getattr(info, "vmem_capacity_bytes", None)
    except Exception:
        cap = None
    if not cap or cap <= 0:
        cap = 64 * 1024 * 1024            # conservative fallback (v7x physical)
    return min(int(cap * 3 // 4), 100 * 1024 * 1024)


_VMEM_LIMIT = _vmem_limit_bytes()


# ----------------------------- tile pickers -----------------------------

def _row_tile(dim, target=256):
    """Second-to-last-dim tile: multiple of 8, else full dim (always legal)."""
    cands = [target] + [t for t in (256, 128, 64, 32, 16, 8) if t < target]
    for t in cands:
        if dim % t == 0:
            return t
    return dim


def _lane_tile(dim, target=512):
    """Lane-dim tile: prefer multiples of 256 (MXU depth), else 128, else full dim."""
    cands = [target] + [t for t in (512, 256, 128) if t < target]
    for t in cands:
        if dim % t == 0:
            return t
    return dim


# ----------------------------- Pallas kernels -----------------------------

def _linear_kernel(x_ref, w_ref, b_ref, o_ref, acc_ref):
    """o = x @ w + b; bf16 operands, f32 VMEM accumulator over the K grid axis."""
    @pl.when(pl.program_id(2) == 0)
    def _():
        acc_ref[...] = jnp.zeros_like(acc_ref)

    acc_ref[...] += jnp.dot(x_ref[...], w_ref[...],
                            preferred_element_type=jnp.float32)

    @pl.when(pl.program_id(2) == pl.num_programs(2) - 1)
    def _():
        o_ref[...] = (acc_ref[...] + b_ref[...]).astype(o_ref.dtype)


def _linear_add_ln_kernel(x_ref, w_ref, b_ref, r_ref, g_ref, beta_ref,
                          o_ref, acc_ref):
    """o = LayerNorm(r + x @ w + b); bf16 matmul, f32 epilogue (single fused store)."""
    @pl.when(pl.program_id(1) == 0)
    def _():
        acc_ref[...] = jnp.zeros_like(acc_ref)

    acc_ref[...] += jnp.dot(x_ref[...], w_ref[...],
                            preferred_element_type=jnp.float32)

    @pl.when(pl.program_id(1) == pl.num_programs(1) - 1)
    def _():
        y = acc_ref[...] + b_ref[...] + r_ref[...].astype(jnp.float32)
        mean = jnp.mean(y, axis=-1, keepdims=True)
        c = y - mean
        var = jnp.mean(c * c, axis=-1, keepdims=True)
        inv = jax.lax.rsqrt(var + 1e-5)
        o_ref[...] = (c * inv * g_ref[...] + beta_ref[...]).astype(o_ref.dtype)


def _ffn_ln_kernel(x_ref, w1_ref, b1_ref, w2_ref, b2_ref, g_ref, beta_ref,
                   o_ref, acc_ref):
    """o = LayerNorm(x + relu(x@w1+b1) @ w2 + b2), tiled over d_ff chunks (grid axis 1).

    Each step computes one (tm, tf) hidden slab (never touches HBM), applies ReLU,
    and accumulates its w2 contribution into a (tm, E) f32 scratch."""
    f = pl.program_id(1)

    @pl.when(f == 0)
    def _():
        acc_ref[...] = jnp.zeros_like(acc_ref)

    x = x_ref[...]                                                   # bf16 (tm, E)
    h = jnp.dot(x, w1_ref[...], preferred_element_type=jnp.float32) + b1_ref[...]
    h = jnp.maximum(h, 0.0).astype(jnp.bfloat16)                     # (tm, tf)
    acc_ref[...] += jnp.dot(h, w2_ref[...], preferred_element_type=jnp.float32)

    @pl.when(f == pl.num_programs(1) - 1)
    def _():
        y = acc_ref[...] + b2_ref[...] + x.astype(jnp.float32)
        mean = jnp.mean(y, axis=-1, keepdims=True)
        c = y - mean
        var = jnp.mean(c * c, axis=-1, keepdims=True)
        inv = jax.lax.rsqrt(var + 1e-5)
        o_ref[...] = (c * inv * g_ref[...] + beta_ref[...]).astype(o_ref.dtype)


def _layernorm_kernel(x_ref, g_ref, b_ref, o_ref):
    x = x_ref[...].astype(jnp.float32)
    mean = jnp.mean(x, axis=-1, keepdims=True)
    c = x - mean
    var = jnp.mean(c * c, axis=-1, keepdims=True)
    inv = jax.lax.rsqrt(var + 1e-5)
    o_ref[...] = (c * inv * g_ref[...] + b_ref[...]).astype(o_ref.dtype)


def _ln_linear_kernel(x_ref, g_ref, beta_ref, w_ref, b_ref, o_ref):
    """o = LayerNorm(x) @ w + b  (final decoder norm fused into the logits matmul)."""
    x = x_ref[...].astype(jnp.float32)                               # (tm, E)
    mean = jnp.mean(x, axis=-1, keepdims=True)
    c = x - mean
    var = jnp.mean(c * c, axis=-1, keepdims=True)
    xn = (c * jax.lax.rsqrt(var + 1e-5) * g_ref[...] + beta_ref[...]
          ).astype(jnp.bfloat16)
    o_ref[...] = (jnp.dot(xn, w_ref[...], preferred_element_type=jnp.float32)
                  + b_ref[...]).astype(o_ref.dtype)
    # TODO(synk): tile K (=d_model) too if d_model ever exceeds a few thousand.


def _mha_kernel(q_ref, k_ref, v_ref, o_ref, *, n_heads, scale):
    """One (batch, q-tile) step, all heads: softmax(q k^T * scale) v, heads merged.

    q_ref: (1, tq, E); k_ref/v_ref: (1, Lk, E); o_ref: (1, tq, E) lane-dense.
    Per-head loop keeps live scores at (tq, Lk) (no (H, Lq, Lk) VMEM blow-up)."""
    E = q_ref.shape[-1]
    dh = E // n_heads
    q = q_ref[0].astype(jnp.bfloat16)
    k = k_ref[0].astype(jnp.bfloat16)
    v = v_ref[0].astype(jnp.bfloat16)
    outs = []
    for h in range(n_heads):
        sl = slice(h * dh, (h + 1) * dh)
        s = jax.lax.dot_general(q[:, sl], k[:, sl],
                                (((1,), (1,)), ((), ())),
                                preferred_element_type=jnp.float32) * scale
        m = jnp.max(s, axis=-1, keepdims=True)
        e = jnp.exp(s - m)
        denom = jnp.sum(e, axis=-1, keepdims=True)
        p = (e * pl.reciprocal(denom, approx=True)).astype(jnp.bfloat16)
        outs.append(jnp.dot(p, v[:, sl], preferred_element_type=jnp.float32))
    o_ref[0] = jnp.concatenate(outs, axis=-1).astype(o_ref.dtype)
    # TODO(synk): flash-style online-softmax over Lk chunks for long sequences.


# ----------------------------- kernel wrappers -----------------------------

def linear(x2d, w, b, out_dtype=jnp.bfloat16):
    """x2d: (M, K); w: (K, N) pre-transposed bf16; b: (N,) f32."""
    x2d = x2d.astype(jnp.bfloat16)
    w = w.astype(jnp.bfloat16)
    M, K = x2d.shape
    N = w.shape[1]
    tm, tn, tk = _row_tile(M), _lane_tile(N), _lane_tile(K)
    return pl.pallas_call(
        _linear_kernel,
        grid=(M // tm, N // tn, K // tk),
        out_shape=jax.ShapeDtypeStruct((M, N), out_dtype),
        in_specs=[pl.BlockSpec((tm, tk), lambda i, j, k: (i, k)),
                  pl.BlockSpec((tk, tn), lambda i, j, k: (k, j)),
                  pl.BlockSpec((1, tn), lambda i, j, k: (0, j))],
        out_specs=pl.BlockSpec((tm, tn), lambda i, j, k: (i, j)),
        scratch_shapes=[pltpu.VMEM((tm, tn), jnp.float32)],
        compiler_params=pltpu.CompilerParams(
            dimension_semantics=("parallel", "parallel", "arbitrary"),
            vmem_limit_bytes=_VMEM_LIMIT),
    )(x2d, w, b.astype(jnp.float32).reshape(1, N))


def linear_add_layernorm(x2d, w, b, r2d, g, beta):
    """LayerNorm(r2d + x2d @ w + b); output width (= d_model) kept whole for the norm."""
    x2d = x2d.astype(jnp.bfloat16)
    w = w.astype(jnp.bfloat16)
    M, K = x2d.shape
    N = w.shape[1]
    tm, tk = _row_tile(M), _lane_tile(K)
    return pl.pallas_call(
        _linear_add_ln_kernel,
        grid=(M // tm, K // tk),
        out_shape=jax.ShapeDtypeStruct((M, N), jnp.bfloat16),
        in_specs=[pl.BlockSpec((tm, tk), lambda i, k: (i, k)),
                  pl.BlockSpec((tk, N), lambda i, k: (k, 0)),
                  pl.BlockSpec((1, N), lambda i, k: (0, 0)),
                  pl.BlockSpec((tm, N), lambda i, k: (i, 0)),
                  pl.BlockSpec((1, N), lambda i, k: (0, 0)),
                  pl.BlockSpec((1, N), lambda i, k: (0, 0))],
        out_specs=pl.BlockSpec((tm, N), lambda i, k: (i, 0)),
        scratch_shapes=[pltpu.VMEM((tm, N), jnp.float32)],
        compiler_params=pltpu.CompilerParams(
            dimension_semantics=("parallel", "arbitrary"),
            vmem_limit_bytes=_VMEM_LIMIT),
    )(x2d, w, b.astype(jnp.float32).reshape(1, N),
      r2d.astype(jnp.bfloat16),
      g.astype(jnp.float32).reshape(1, N), beta.astype(jnp.float32).reshape(1, N))


def ffn_layernorm(x2d, w1, b1, w2, b2, g, beta):
    """LayerNorm(x + relu(x@w1+b1) @ w2 + b2); d_ff tiled so weights never fill VMEM."""
    x2d = x2d.astype(jnp.bfloat16)
    M, E = x2d.shape
    F = w1.shape[1]
    tm = _row_tile(M, target=128)
    tf = _lane_tile(F, target=512)
    return pl.pallas_call(
        _ffn_ln_kernel,
        grid=(M // tm, F // tf),
        out_shape=jax.ShapeDtypeStruct((M, E), jnp.bfloat16),
        in_specs=[pl.BlockSpec((tm, E), lambda i, f: (i, 0)),
                  pl.BlockSpec((E, tf), lambda i, f: (0, f)),
                  pl.BlockSpec((1, tf), lambda i, f: (0, f)),
                  pl.BlockSpec((tf, E), lambda i, f: (f, 0)),
                  pl.BlockSpec((1, E), lambda i, f: (0, 0)),
                  pl.BlockSpec((1, E), lambda i, f: (0, 0)),
                  pl.BlockSpec((1, E), lambda i, f: (0, 0))],
        out_specs=pl.BlockSpec((tm, E), lambda i, f: (i, 0)),
        scratch_shapes=[pltpu.VMEM((tm, E), jnp.float32)],
        compiler_params=pltpu.CompilerParams(
            dimension_semantics=("parallel", "arbitrary"),
            vmem_limit_bytes=_VMEM_LIMIT),
    )(x2d, w1.astype(jnp.bfloat16), b1.astype(jnp.float32).reshape(1, F),
      w2.astype(jnp.bfloat16), b2.astype(jnp.float32).reshape(1, E),
      g.astype(jnp.float32).reshape(1, E), beta.astype(jnp.float32).reshape(1, E))


def layernorm(x2d, g, b):
    M, E = x2d.shape
    tm = _row_tile(M)
    return pl.pallas_call(
        _layernorm_kernel,
        grid=(M // tm,),
        out_shape=jax.ShapeDtypeStruct((M, E), jnp.bfloat16),
        in_specs=[pl.BlockSpec((tm, E), lambda i: (i, 0)),
                  pl.BlockSpec((1, E), lambda i: (0, 0)),
                  pl.BlockSpec((1, E), lambda i: (0, 0))],
        out_specs=pl.BlockSpec((tm, E), lambda i: (i, 0)),
        compiler_params=pltpu.CompilerParams(
            dimension_semantics=("parallel",),
            vmem_limit_bytes=_VMEM_LIMIT),
    )(x2d.astype(jnp.bfloat16), g.astype(jnp.float32).reshape(1, E),
      b.astype(jnp.float32).reshape(1, E))


def ln_linear(x2d, g, beta, w, b):
    """logits = LayerNorm(x2d) @ w + b  (norm fused into prologue; output f32)."""
    x2d = x2d.astype(jnp.bfloat16)
    w = w.astype(jnp.bfloat16)
    M, E = x2d.shape
    N = w.shape[1]
    tm, tn = _row_tile(M), _lane_tile(N)
    # TODO(synk): pad vocab to a multiple of 256 for production shapes.
    return pl.pallas_call(
        _ln_linear_kernel,
        grid=(M // tm, N // tn),
        out_shape=jax.ShapeDtypeStruct((M, N), jnp.float32),
        in_specs=[pl.BlockSpec((tm, E), lambda i, j: (i, 0)),
                  pl.BlockSpec((1, E), lambda i, j: (0, 0)),
                  pl.BlockSpec((1, E), lambda i, j: (0, 0)),
                  pl.BlockSpec((E, tn), lambda i, j: (0, j)),
                  pl.BlockSpec((1, tn), lambda i, j: (0, j))],
        out_specs=pl.BlockSpec((tm, tn), lambda i, j: (i, j)),
        compiler_params=pltpu.CompilerParams(
            dimension_semantics=("parallel", "parallel"),
            vmem_limit_bytes=_VMEM_LIMIT),
    )(x2d, g.astype(jnp.float32).reshape(1, E), beta.astype(jnp.float32).reshape(1, E),
      w, b.astype(jnp.float32).reshape(1, N))


def _mha_call(q_src, kv_src, n_heads, d_model, q_blk, k_blk, v_blk):
    """Batch-major attention. q_src: (Nb, Lq, *) holding Q in column-block q_blk;
    kv_src: (Nb, Lk, *) holding K/V in column-blocks k_blk/v_blk (blocks of width E).
    Returns (Nb, Lq, E) bf16 with heads merged (lane-dense E output)."""
    Nb, Lq, _ = q_src.shape
    Lk = kv_src.shape[1]
    E = d_model
    scale = 1.0 / math.sqrt(E // n_heads)
    tq = _row_tile(Lq, target=128)
    return pl.pallas_call(
        functools.partial(_mha_kernel, n_heads=n_heads, scale=scale),
        grid=(Nb, Lq // tq),
        out_shape=jax.ShapeDtypeStruct((Nb, Lq, E), jnp.bfloat16),
        in_specs=[pl.BlockSpec((1, tq, E), lambda n, i: (n, i, q_blk)),
                  pl.BlockSpec((1, Lk, E), lambda n, i: (n, 0, k_blk)),
                  pl.BlockSpec((1, Lk, E), lambda n, i: (n, 0, v_blk))],
        out_specs=pl.BlockSpec((1, tq, E), lambda n, i: (n, i, 0)),
        compiler_params=pltpu.CompilerParams(
            dimension_semantics=("parallel", "parallel"),
            vmem_limit_bytes=_VMEM_LIMIT),
    )(q_src, kv_src, kv_src)


# ----------------------------- transformer layers -----------------------------
# Activations are batch-major (N, S, E) bf16 throughout -> no HBM transposes.

def encoder_layer(x3, p, n_heads):
    Nb, S, E = x3.shape
    x2d = x3.reshape(Nb * S, E)
    qkv = linear(x2d, p['self_attn']['in_proj_w'], p['self_attn']['in_proj_b'])
    sa = _mha_call(qkv.reshape(Nb, S, 3 * E), qkv.reshape(Nb, S, 3 * E),
                   n_heads, E, 0, 1, 2)
    x2d = linear_add_layernorm(sa.reshape(Nb * S, E),
                               p['self_attn']['out_proj_w'],
                               p['self_attn']['out_proj_b'],
                               x2d, p['norm1_w'], p['norm1_b'])
    x2d = ffn_layernorm(x2d, p['lin1_w'], p['lin1_b'], p['lin2_w'], p['lin2_b'],
                        p['norm2_w'], p['norm2_b'])
    return x2d.reshape(Nb, S, E)


def decoder_layer(x3, mem3, p, n_heads):
    Nb, S, E = x3.shape
    Lk = mem3.shape[1]
    x2d = x3.reshape(Nb * S, E)

    # Self-attention (no causal mask — matches the reference forward).
    qkv = linear(x2d, p['self_attn']['in_proj_w'], p['self_attn']['in_proj_b'])
    sa = _mha_call(qkv.reshape(Nb, S, 3 * E), qkv.reshape(Nb, S, 3 * E),
                   n_heads, E, 0, 1, 2)
    x2d = linear_add_layernorm(sa.reshape(Nb * S, E),
                               p['self_attn']['out_proj_w'],
                               p['self_attn']['out_proj_b'],
                               x2d, p['norm1_w'], p['norm1_b'])

    # Cross-attention (q/kv projections pre-split at init; no runtime weight slices).
    q = linear(x2d, p['cross_attn']['q_w'], p['cross_attn']['q_b'])
    kv = linear(mem3.reshape(Nb * Lk, E),
                p['cross_attn']['kv_w'], p['cross_attn']['kv_b'])
    ca = _mha_call(q.reshape(Nb, S, E), kv.reshape(Nb, Lk, 2 * E),
                   n_heads, E, 0, 0, 1)
    x2d = linear_add_layernorm(ca.reshape(Nb * S, E),
                               p['cross_attn']['out_proj_w'],
                               p['cross_attn']['out_proj_b'],
                               x2d, p['norm2_w'], p['norm2_b'])

    x2d = ffn_layernorm(x2d, p['lin1_w'], p['lin1_b'], p['lin2_w'], p['lin2_b'],
                        p['norm3_w'], p['norm3_b'])
    return x2d.reshape(Nb, S, E)


def transformer_lm_forward(params, ids, *, n_heads):
    """ids: (S, N) int32 token ids. Returns logits (S, N, vocab) f32."""
    S, Nb = ids.shape
    E = params['embedding'].shape[1]

    # Embedding lookup (gather) — plain-JAX glue; transpose ids (tiny) to batch-major.
    x = jnp.take(params['embedding'], ids.T, axis=0)          # (Nb, S, E) bf16
    # TODO(synk): dropout layers omitted — eval-mode (identity) semantics.

    mem = x
    for p in params['enc']:
        mem = encoder_layer(mem, p, n_heads)
    mem = layernorm(mem.reshape(Nb * S, E),
                    params['enc_norm_w'], params['enc_norm_b']).reshape(Nb, S, E)

    out = x
    for p in params['dec']:
        out = decoder_layer(out, mem, p, n_heads)

    # Final decoder LayerNorm fused into the logits linear.
    logits2d = ln_linear(out.reshape(Nb * S, E),
                         params['dec_norm_w'], params['dec_norm_b'],
                         params['fc_w'], params['fc_b'])       # (Nb*S, V) f32
    return logits2d.reshape(Nb, S, -1).transpose(1, 0, 2)      # (S, Nb, V)


# ----------------------------- deterministic init -----------------------------

def init_params(key, vocab, d_model, n_heads, n_layers, d_ff):
    keys = iter(jax.random.split(key, 256))

    def nrm(shape, scale=0.02, dtype=jnp.bfloat16):
        return (scale * jax.random.normal(next(keys), shape, jnp.float32)).astype(dtype)

    def zeros(shape):
        return jnp.zeros(shape, jnp.float32)

    def ones(shape):
        return jnp.ones(shape, jnp.float32)

    def self_mha():
        # Weights pre-transposed (in, out), stored bf16; fused QKV projection.
        return dict(in_proj_w=nrm((d_model, 3 * d_model)),
                    in_proj_b=zeros((3 * d_model,)),
                    out_proj_w=nrm((d_model, d_model)),
                    out_proj_b=zeros((d_model,)))

    def cross_mha():
        # Pre-split Q vs. fused K/V projections (no runtime weight slicing).
        return dict(q_w=nrm((d_model, d_model)), q_b=zeros((d_model,)),
                    kv_w=nrm((d_model, 2 * d_model)), kv_b=zeros((2 * d_model,)),
                    out_proj_w=nrm((d_model, d_model)),
                    out_proj_b=zeros((d_model,)))

    def enc_layer():
        return dict(self_attn=self_mha(),
                    lin1_w=nrm((d_model, d_ff)), lin1_b=zeros((d_ff,)),
                    lin2_w=nrm((d_ff, d_model)), lin2_b=zeros((d_model,)),
                    norm1_w=ones((d_model,)), norm1_b=zeros((d_model,)),
                    norm2_w=ones((d_model,)), norm2_b=zeros((d_model,)))

    def dec_layer():
        d = enc_layer()
        d['cross_attn'] = cross_mha()
        d['norm3_w'] = ones((d_model,))
        d['norm3_b'] = zeros((d_model,))
        return d

    return dict(
        embedding=nrm((vocab, d_model), scale=1.0),
        enc=[enc_layer() for _ in range(n_layers)],
        dec=[dec_layer() for _ in range(n_layers)],
        enc_norm_w=ones((d_model,)), enc_norm_b=zeros((d_model,)),
        dec_norm_w=ones((d_model,)), dec_norm_b=zeros((d_model,)),
        fc_w=nrm((d_model, vocab)), fc_b=zeros((vocab,)),
    )


# ----------------------------- main -----------------------------

if __name__ == "__main__":
    # Small shapes consistent with the module (scaled-down Config); d_model kept a
    # multiple of 128 so all lane dims are aligned (per review guidance).
    vocab_size = 256
    d_model = 128      # Config.D_MODEL scaled down (multiple of 128)
    n_heads = 4        # Config.N_HEADS scaled down (d_model % n_heads == 0)
    n_layers = 2       # Config.N_LAYERS scaled down
    d_ff = 256         # nn.Transformer dim_feedforward, scaled down
    S, Nb = 8, 2       # (seq, batch)

    key = jax.random.PRNGKey(0)
    pkey, ikey = jax.random.split(key)
    params = init_params(pkey, vocab_size, d_model, n_heads, n_layers, d_ff)
    ids = jax.random.randint(ikey, (S, Nb), 0, vocab_size, dtype=jnp.int32)

    fwd = jax.jit(functools.partial(transformer_lm_forward, n_heads=n_heads))
    logits = fwd(params, ids)
    jax.block_until_ready(logits)

    assert logits.shape == (S, Nb, vocab_size), logits.shape
    assert logits.dtype == jnp.float32
    print("KERNEL_OK")
</pallas_src>

<mosaic_0001>
module attributes {stable_mosaic.version = 11 : i64} {
  func.func @_linear_kernel(%arg0: i32, %arg1: i32, %arg2: i32, %arg3: memref<16x128xbf16, #tpu.memory_space<vmem>>, %arg4: memref<128x128xbf16, #tpu.memory_space<vmem>>, %arg5: memref<1x128xf32, #tpu.memory_space<vmem>>, %arg6: memref<16x128xbf16, #tpu.memory_space<vmem>>, %arg7: memref<16x128xf32, #tpu.memory_space<vmem>>) attributes {dimension_semantics = [#tpu.dimension_semantics<parallel>, #tpu.dimension_semantics<parallel>, #tpu.dimension_semantics<arbitrary>], iteration_bounds = array<i64: 1, 3, 1>, scalar_prefetch = 0 : i64, scratch_operands = 1 : i64, tpu.core_type = #tpu.core_type<tc>, window_params = [{transform_indices = @transform_0, window_bounds = array<i64: 16, 128>}, {transform_indices = @transform_1, window_bounds = array<i64: 128, 128>}, {transform_indices = @transform_2, window_bounds = array<i64: 1, 128>}, {transform_indices = @transform_3, window_bounds = array<i64: 16, 128>}]} {
    %c0_i32 = arith.constant 0 : i32
    %0 = arith.cmpi eq, %arg2, %c0_i32 : i32
    %1 = arith.extui %0 : i1 to i32
    %c0_i32_0 = arith.constant 0 : i32
    %2 = arith.cmpi ne, %1, %c0_i32_0 : i32
    scf.if %2 {
      %cst_10 = arith.constant 0.000000e+00 : f32
      %12 = vector.broadcast %cst_10 : f32 to vector<16x128xf32>
      %c0_11 = arith.constant 0 : index
      %c0_12 = arith.constant 0 : index
      %13 = vector.load %arg7[%c0_11, %c0_12] : memref<16x128xf32, #tpu.memory_space<vmem>>, vector<16x128xf32>
      tpu.vector_store %arg7[%c0_11, %c0_12], %12 {strides = array<i32>} : memref<16x128xf32, #tpu.memory_space<vmem>>, vector<16x128xf32>,
    } else {
    }
    %c0 = arith.constant 0 : index
    %c0_1 = arith.constant 0 : index
    %3 = vector.load %arg7[%c0, %c0_1] : memref<16x128xf32, #tpu.memory_space<vmem>>, vector<16x128xf32>
    %c0_2 = arith.constant 0 : index
    %c0_3 = arith.constant 0 : index
    %4 = vector.load %arg3[%c0_2, %c0_3] : memref<16x128xbf16, #tpu.memory_space<vmem>>, vector<16x128xbf16>
    %c0_4 = arith.constant 0 : index
    %c0_5 = arith.constant 0 : index
    %5 = vector.load %arg4[%c0_4, %c0_5] : memref<128x128xbf16, #tpu.memory_space<vmem>>, vector<128x128xbf16>
    %cst = arith.constant dense<0.000000e+00> : vector<16x128xf32>
    %6 = tpu.matmul %4, %5, %cst {dimension_numbers = #tpu.dot_dimension_numbers<[1], [0], [0], [1], [0, 0, 1, 1], [], []>} : vector<16x128xbf16>, vector<128x128xbf16>, vector<16x128xf32> -> vector<16x128xf32>
    %7 = arith.addf %3, %6 : vector<16x128xf32>
    %c0_6 = arith.constant 0 : index
    %c0_7 = arith.constant 0 : index
    %8 = vector.load %arg7[%c0_6, %c0_7] : memref<16x128xf32, #tpu.memory_space<vmem>>, vector<16x128xf32>
    tpu.vector_store %arg7[%c0_6, %c0_7], %7 {strides = array<i32>} : memref<16x128xf32, #tpu.memory_space<vmem>>, vector<16x128xf32>,
    %c0_i32_8 = arith.constant 0 : i32
    %9 = arith.cmpi eq, %arg2, %c0_i32_8 : i32
    %10 = arith.extui %9 : i1 to i32
    %c0_i32_9 = arith.constant 0 : i32
    %11 = arith.cmpi ne, %10, %c0_i32_9 : i32
    scf.if %11 {
      %c0_10 = arith.constant 0 : index
      %c0_11 = arith.constant 0 : index
      %12 = vector.load %arg7[%c0_10, %c0_11] : memref<16x128xf32, #tpu.memory_space<vmem>>, vector<16x128xf32>
      %c0_12 = arith.constant 0 : index
      %c0_13 = arith.constant 0 : index
      %13 = vector.load %arg5[%c0_12, %c0_13] : memref<1x128xf32, #tpu.memory_space<vmem>>, vector<1x128xf32>
      %14 = vector.broadcast %13 : vector<1x128xf32> to vector<16x128xf32>
      %15 = arith.addf %12, %14 : vector<16x128xf32>
      %16 = arith.truncf %15 : vector<16x128xf32> to vector<16x128xbf16>
      %c0_14 = arith.constant 0 : index
      %c0_15 = arith.constant 0 : index
      %17 = vector.load %arg6[%c0_14, %c0_15] : memref<16x128xbf16, #tpu.memory_space<vmem>>, vector<16x128xbf16>
      tpu.vector_store %arg6[%c0_14, %c0_15], %16 {strides = array<i32>} : memref<16x128xbf16, #tpu.memory_space<vmem>>, vector<16x128xbf16>,
    } else {
    }
    return
  }
  func.func @transform_0(%arg0: i32, %arg1: i32, %arg2: i32) -> (i32, i32) {
    %c0_i32 = arith.constant 0 : i32
    return %arg0, %arg2 : i32, i32
  }
  func.func @transform_1(%arg0: i32, %arg1: i32, %arg2: i32) -> (i32, i32) {
    %c0_i32 = arith.constant 0 : i32
    return %arg2, %arg1 : i32, i32
  }
  func.func @transform_2(%arg0: i32, %arg1: i32, %arg2: i32) -> (i32, i32) {
    %c0_i32 = arith.constant 0 : i32
    %c0_i32_0 = arith.constant 0 : i32
    return %c0_i32, %arg1 : i32, i32
  }
  func.func @transform_3(%arg0: i32, %arg1: i32, %arg2: i32) -> (i32, i32) {
    %c0_i32 = arith.constant 0 : i32
    return %arg0, %arg1 : i32, i32
  }
}

module attributes {stable_mosaic.version = 11 : i64} {
  func.func @_linear_add_ln_kernel(%arg0: i32, %arg1: i32, %arg2: memref<16x128xbf16, #tpu.memory_space<vmem>>, %arg3: memref<128x128xbf16, #tpu.memory_space<vmem>>, %arg4: memref<1x128xf32, #tpu.memory_space<vmem>>, %arg5: memref<16x128xbf16, #tpu.memory_space<vmem>>, %arg6: memref<1x128xf32, #tpu.memory_space<vmem>>, %arg7: memref<1x128xf32, #tpu.memory_space<vmem>>, %arg8: memref<16x128xbf16, #tpu.memory_space<vmem>>, %arg9: memref<16x128xf32, #tpu.memory_space<vmem>>) attributes {dimension_semantics = [#tpu.dimension_semantics<parallel>, #tpu.dimension_semantics<arbitrary>], iteration_bounds = array<i64: 1, 1>, scalar_prefetch = 0 : i64, scratch_operands = 1 : i64, tpu.core_type = #tpu.core_type<tc>, window_params = [{transform_indices = @transform_0, window_bounds = array<i64: 16, 128>}, {transform_indices = @transform_1, window_bounds = array<i64: 128, 128>}, {pipeline_mode = #tpu.pipeline_mode<synchronous>, transform_indices = @transform_2, window_bounds = array<i64: 1, 128>}, {transform_indices = @transform_3, window_bounds = array<i64: 16, 128>}, {pipeline_mode = #tpu.pipeline_mode<synchronous>, transform_indices = @transform_4, window_bounds = array<i64: 1, 128>}, {pipeline_mode = #tpu.pipeline_mode<synchronous>, transform_indices = @transform_5, window_bounds = array<i64: 1, 128>}, {transform_indices = @transform_6, window_bounds = array<i64: 16, 128>}]} {
    %c0_i32 = arith.constant 0 : i32
    %0 = arith.cmpi eq, %arg1, %c0_i32 : i32
    %1 = arith.extui %0 : i1 to i32
    %c0_i32_0 = arith.constant 0 : i32
    %2 = arith.cmpi ne, %1, %c0_i32_0 : i32
    scf.if %2 {
      %cst_10 = arith.constant 0.000000e+00 : f32
      %12 = vector.broadcast %cst_10 : f32 to vector<16x128xf32>
      %c0_11 = arith.constant 0 : index
      %c0_12 = arith.constant 0 : index
      %13 = vector.load %arg9[%c0_11, %c0_12] : memref<16x128xf32, #tpu.memory_space<vmem>>, vector<16x128xf32>
      tpu.vector_store %arg9[%c0_11, %c0_12], %12 {strides = array<i32>} : memref<16x128xf32, #tpu.memory_space<vmem>>, vector<16x128xf32>,
    } else {
    }
    %c0 = arith.constant 0 : index
    %c0_1 = arith.constant 0 : index
    %3 = vector.load %arg9[%c0, %c0_1] : memref<16x128xf32, #tpu.memory_space<vmem>>, vector<16x128xf32>
    %c0_2 = arith.constant 0 : index
    %c0_3 = arith.constant 0 : index
    %4 = vector.load %arg2[%c0_2, %c0_3] : memref<16x128xbf16, #tpu.memory_space<vmem>>, vector<16x128xbf16>
    %c0_4 = arith.constant 0 : index
    %c0_5 = arith.constant 0 : index
    %5 = vector.load %arg3[%c0_4, %c0_5] : memref<128x128xbf16, #tpu.memory_space<vmem>>, vector<128x128xbf16>
    %cst = arith.constant dense<0.000000e+00> : vector<16x128xf32>
    %6 = tpu.matmul %4, %5, %cst {dimension_numbers = #tpu.dot_dimension_numbers<[1], [0], [0], [1], [0, 0, 1, 1], [], []>} : vector<16x128xbf16>, vector<128x128xbf16>, vector<16x128xf32> -> vector<16x128xf32>
    %7 = arith.addf %3, %6 : vector<16x128xf32>
    %c0_6 = arith.constant 0 : index
    %c0_7 = arith.constant 0 : index
    %8 = vector.load %arg9[%c0_6, %c0_7] : memref<16x128xf32, #tpu.memory_space<vmem>>, vector<16x128xf32>
    tpu.vector_store %arg9[%c0_6, %c0_7], %7 {strides = array<i32>} : memref<16x128xf32, #tpu.memory_space<vmem>>, vector<16x128xf32>,
    %c0_i32_8 = arith.constant 0 : i32
    %9 = arith.cmpi eq, %arg1, %c0_i32_8 : i32
    %10 = arith.extui %9 : i1 to i32
    %c0_i32_9 = arith.constant 0 : i32
    %11 = arith.cmpi ne, %10, %c0_i32_9 : i32
    scf.if %11 {
      %c0_10 = arith.constant 0 : index
      %c0_11 = arith.constant 0 : index
      %12 = vector.load %arg9[%c0_10, %c0_11] : memref<16x128xf32, #tpu.memory_space<vmem>>, vector<16x128xf32>
      %c0_12 = arith.constant 0 : index
      %c0_13 = arith.constant 0 : index
      %13 = vector.load %arg4[%c0_12, %c0_13] : memref<1x128xf32, #tpu.memory_space<vmem>>, vector<1x128xf32>
      %14 = vector.broadcast %13 : vector<1x128xf32> to vector<16x128xf32>
      %15 = arith.addf %12, %14 : vector<16x128xf32>
      %c0_14 = arith.constant 0 : index
      %c0_15 = arith.constant 0 : index
      %16 = vector.load %arg5[%c0_14, %c0_15] : memref<16x128xbf16, #tpu.memory_space<vmem>>, vector<16x128xbf16>
      %17 = arith.extf %16 : vector<16x128xbf16> to vector<16x128xf32>
      %18 = arith.addf %15, %17 : vector<16x128xf32>
      %cst_16 = arith.constant dense<0.000000e+00> : vector<16xf32>
      %19 = vector.multi_reduction <add>, %18, %cst_16 [1] : vector<16x128xf32> to vector<16xf32>
      %20 = vector.shape_cast %19 : vector<16xf32> to vector<16x1xf32>
      %cst_17 = arith.constant 1.280000e+02 : f32
      %21 = vector.broadcast %cst_17 : f32 to vector<16x1xf32>
      %22 = arith.divf %20, %21 : vector<16x1xf32>
      %23 = vector.broadcast %22 : vector<16x1xf32> to vector<16x128xf32>
      %24 = arith.subf %18, %23 : vector<16x128xf32>
      %25 = arith.mulf %24, %24 : vector<16x128xf32>
      %cst_18 = arith.constant dense<0.000000e+00> : vector<16xf32>
      %26 = vector.multi_reduction <add>, %25, %cst_18 [1] : vector<16x128xf32> to vector<16xf32>
      %27 = vector.shape_cast %26 : vector<16xf32> to vector<16x1xf32>
      %cst_19 = arith.constant 1.280000e+02 : f32
      %28 = vector.broadcast %cst_19 : f32 to vector<16x1xf32>
      %29 = arith.divf %27, %28 : vector<16x1xf32>
      %cst_20 = arith.constant 9.99999974E-6 : f32
      %30 = vector.broadcast %cst_20 : f32 to vector<16x1xf32>
      %31 = arith.addf %29, %30 : vector<16x1xf32>
      %32 = math.rsqrt %31 : vector<16x1xf32>
      %33 = vector.broadcast %32 : vector<16x1xf32> to vector<16x128xf32>
      %34 = arith.mulf %24, %33 : vector<16x128xf32>
      %c0_21 = arith.constant 0 : index
      %c0_22 = arith.constant 0 : index
      %35 = vector.load %arg6[%c0_21, %c0_22] : memref<1x128xf32, #tpu.memory_space<vmem>>, vector<1x128xf32>
      %36 = vector.broadcast %35 : vector<1x128xf32> to vector<16x128xf32>
      %37 = arith.mulf %34, %36 : vector<16x128xf32>
      %c0_23 = arith.constant 0 : index
      %c0_24 = arith.constant 0 : index
      %38 = vector.load %arg7[%c0_23, %c0_24] : memref<1x128xf32, #tpu.memory_space<vmem>>, vector<1x128xf32>
      %39 = vector.broadcast %38 : vector<1x128xf32> to vector<16x128xf32>
      %40 = arith.addf %37, %39 : vector<16x128xf32>
      %41 = arith.truncf %40 : vector<16x128xf32> to vector<16x128xbf16>
      %c0_25 = arith.constant 0 : index
      %c0_26 = arith.constant 0 : index
      %42 = vector.load %arg8[%c0_25, %c0_26] : memref<16x128xbf16, #tpu.memory_space<vmem>>, vector<16x128xbf16>
      tpu.vector_store %arg8[%c0_25, %c0_26], %41 {strides = array<i32>} : memref<16x128xbf16, #tpu.memory_space<vmem>>, vector<16x128xbf16>,
    } else {
    }
    return
  }
  func.func @transform_0(%arg0: i32, %arg1: i32) -> (i32, i32) {
    %c0_i32 = arith.constant 0 : i32
    return %arg0, %arg1 : i32, i32
  }
  func.func @transform_1(%arg0: i32, %arg1: i32) -> (i32, i32) {
    %c0_i32 = arith.constant 0 : i32
    %c0_i32_0 = arith.constant 0 : i32
    return %arg1, %c0_i32 : i32, i32
  }
  func.func @transform_2(%arg0: i32, %arg1: i32) -> (i32, i32) {
    %c0_i32 = arith.constant 0 : i32
    %c0_i32_0 = arith.constant 0 : i32
    %c0_i32_1 = arith.constant 0 : i32
    return %c0_i32, %c0_i32_0 : i32, i32
  }
  func.func @transform_3(%arg0: i32, %arg1: i32) -> (i32, i32) {
    %c0_i32 = arith.constant 0 : i32
    %c0_i32_0 = arith.constant 0 : i32
    return %arg0, %c0_i32 : i32, i32
  }
  func.func @transform_4(%arg0: i32, %arg1: i32) -> (i32, i32) {
    %c0_i32 = arith.constant 0 : i32
    %c0_i32_0 = arith.constant 0 : i32
    %c0_i32_1 = arith.constant 0 : i32
    return %c0_i32, %c0_i32_0 : i32, i32
  }
  func.func @transform_5(%arg0: i32, %arg1: i32) -> (i32, i32) {
    %c0_i32 = arith.constant 0 : i32
    %c0_i32_0 = arith.constant 0 : i32
    %c0_i32_1 = arith.constant 0 : i32
    return %c0_i32, %c0_i32_0 : i32, i32
  }
  func.func @transform_6(%arg0: i32, %arg1: i32) -> (i32, i32) {
    %c0_i32 = arith.constant 0 : i32
    %c0_i32_0 = arith.constant 0 : i32
    return %arg0, %c0_i32 : i32, i32
  }
}

module attributes {stable_mosaic.version = 11 : i64} {
  func.func @_mha_kernel(%arg0: i32, %arg1: i32, %arg2: memref<1x8x128xbf16, #tpu.memory_space<vmem>>, %arg3: memref<1x8x128xbf16, #tpu.memory_space<vmem>>, %arg4: memref<1x8x128xbf16, #tpu.memory_space<vmem>>, %arg5: memref<1x8x128xbf16, #tpu.memory_space<vmem>>) attributes {dimension_semantics = [#tpu.dimension_semantics<parallel>, #tpu.dimension_semantics<parallel>], iteration_bounds = array<i64: 2, 1>, scalar_prefetch = 0 : i64, scratch_operands = 0 : i64, tpu.core_type = #tpu.core_type<tc>, window_params = [{transform_indices = @transform_0, window_bounds = array<i64: 1, 8, 128>}, {transform_indices = @transform_1, window_bounds = array<i64: 1, 8, 128>}, {transform_indices = @transform_2, window_bounds = array<i64: 1, 8, 128>}, {transform_indices = @transform_3, window_bounds = array<i64: 1, 8, 128>}]} {
    %c0 = arith.constant 0 : index
    %c0_0 = arith.constant 0 : index
    %c0_1 = arith.constant 0 : index
    %0 = vector.load %arg2[%c0, %c0_0, %c0_1] : memref<1x8x128xbf16, #tpu.memory_space<vmem>>, vector<1x8x128xbf16>
    %1 = vector.shape_cast %0 : vector<1x8x128xbf16> to vector<8x128xbf16>
    %c0_2 = arith.constant 0 : index
    %c0_3 = arith.constant 0 : index
    %c0_4 = arith.constant 0 : index
    %2 = vector.load %arg3[%c0_2, %c0_3, %c0_4] : memref<1x8x128xbf16, #tpu.memory_space<vmem>>, vector<1x8x128xbf16>
    %3 = vector.shape_cast %2 : vector<1x8x128xbf16> to vector<8x128xbf16>
    %c0_5 = arith.constant 0 : index
    %c0_6 = arith.constant 0 : index
    %c0_7 = arith.constant 0 : index
    %4 = vector.load %arg4[%c0_5, %c0_6, %c0_7] : memref<1x8x128xbf16, #tpu.memory_space<vmem>>, vector<1x8x128xbf16>
    %5 = vector.shape_cast %4 : vector<1x8x128xbf16> to vector<8x128xbf16>
    %6 = vector.extract_strided_slice %1 {offsets = [0, 0], sizes = [8, 32], strides = [1, 1]} : vector<8x128xbf16> to vector<8x32xbf16>
    %7 = vector.extract_strided_slice %3 {offsets = [0, 0], sizes = [8, 32], strides = [1, 1]} : vector<8x128xbf16> to vector<8x32xbf16>
    %cst = arith.constant dense<0.000000e+00> : vector<8x8xf32>
    %8 = tpu.matmul %6, %7, %cst {dimension_numbers = #tpu.dot_dimension_numbers<[1], [1], [0], [0], [0, 0, 1, 0], [], []>} : vector<8x32xbf16>, vector<8x32xbf16>, vector<8x8xf32> -> vector<8x8xf32>
    %cst_8 = arith.constant 0.176776692 : f32
    %9 = vector.broadcast %cst_8 : f32 to vector<8x8xf32>
    %10 = arith.mulf %8, %9 : vector<8x8xf32>
    %cst_9 = arith.constant dense<0xFF800000> : vector<8xf32>
    %11 = vector.multi_reduction <maximumf>, %10, %cst_9 [1] : vector<8x8xf32> to vector<8xf32>
    %12 = vector.shape_cast %11 : vector<8xf32> to vector<8x1xf32>
    %13 = vector.broadcast %12 : vector<8x1xf32> to vector<8x8xf32>
    %14 = arith.subf %10, %13 : vector<8x8xf32>
    %15 = math.exp %14 : vector<8x8xf32>
    %cst_10 = arith.constant dense<0.000000e+00> : vector<8xf32>
    %16 = vector.multi_reduction <add>, %15, %cst_10 [1] : vector<8x8xf32> to vector<8xf32>
    %17 = vector.shape_cast %16 : vector<8xf32> to vector<8x1xf32>
    %18 = tpu.reciprocal %17 {approx = true} : vector<8x1xf32> -> vector<8x1xf32>
    %19 = vector.broadcast %18 : vector<8x1xf32> to vector<8x8xf32>
    %20 = arith.mulf %15, %19 : vector<8x8xf32>
    %21 = arith.truncf %20 : vector<8x8xf32> to vector<8x8xbf16>
    %22 = vector.extract_strided_slice %5 {offsets = [0, 0], sizes = [8, 32], strides = [1, 1]} : vector<8x128xbf16> to vector<8x32xbf16>
    %cst_11 = arith.constant dense<0.000000e+00> : vector<8x32xf32>
    %23 = tpu.matmul %21, %22, %cst_11 {dimension_numbers = #tpu.dot_dimension_numbers<[1], [0], [0], [1], [0, 0, 1, 1], [], []>} : vector<8x8xbf16>, vector<8x32xbf16>, vector<8x32xf32> -> vector<8x32xf32>
    %24 = vector.extract_strided_slice %1 {offsets = [0, 32], sizes = [8, 32], strides = [1, 1]} : vector<8x128xbf16> to vector<8x32xbf16>
    %25 = vector.extract_strided_slice %3 {offsets = [0, 32], sizes = [8, 32], strides = [1, 1]} : vector<8x128xbf16> to vector<8x32xbf16>
    %cst_12 = arith.constant dense<0.000000e+00> : vector<8x8xf32>
    %26 = tpu.matmul %24, %25, %cst_12 {dimension_numbers = #tpu.dot_dimension_numbers<[1], [1], [0], [0], [0, 0, 1, 0], [], []>} : vector<8x32xbf16>, vector<8x32xbf16>, vector<8x8xf32> -> vector<8x8xf32>
    %cst_13 = arith.constant 0.176776692 : f32
    %27 = vector.broadcast %cst_13 : f32 to vector<8x8xf32>
    %28 = arith.mulf %26, %27 : vector<8x8xf32>
    %cst_14 = arith.constant dense<0xFF800000> : vector<8xf32>
    %29 = vector.multi_reduction <maximumf>, %28, %cst_14 [1] : vector<8x8xf32> to vector<8xf32>
    %30 = vector.shape_cast %29 : vector<8xf32> to vector<8x1xf32>
    %31 = vector.broadcast %30 : vector<8x1xf32> to vector<8x8xf32>
    %32 = arith.subf %28, %31 : vector<8x8xf32>
    %33 = math.exp %32 : vector<8x8xf32>
    %cst_15 = arith.constant dense<0.000000e+00> : vector<8xf32>
    %34 = vector.multi_reduction <add>, %33, %cst_15 [1] : vector<8x8xf32> to vector<8xf32>
    %35 = vector.shape_cast %34 : vector<8xf32> to vector<8x1xf32>
    %36 = tpu.reciprocal %35 {approx = true} : vector<8x1xf32> -> vector<8x1xf32>
    %37 = vector.broadcast %36 : vector<8x1xf32> to vector<8x8xf32>
    %38 = arith.mulf %33, %37 : vector<8x8xf32>
    %39 = arith.truncf %38 : vector<8x8xf32> to vector<8x8xbf16>
    %40 = vector.extract_strided_slice %5 {offsets = [0, 32], sizes = [8, 32], strides = [1, 1]} : vector<8x128xbf16> to vector<8x32xbf16>
    %cst_16 = arith.constant dense<0.000000e+00> : vector<8x32xf32>
    %41 = tpu.matmul %39, %40, %cst_16 {dimension_numbers = #tpu.dot_dimension_numbers<[1], [0], [0], [1], [0, 0, 1, 1], [], []>} : vector<8x8xbf16>, vector<8x32xbf16>, vector<8x32xf32> -> vector<8x32xf32>
    %42 = vector.extract_strided_slice %1 {offsets = [0, 64], sizes = [8, 32], strides = [1, 1]} : vector<8x128xbf16> to vector<8x32xbf16>
    %43 = vector.extract_strided_slice %3 {offsets = [0, 64], sizes = [8, 32], strides = [1, 1]} : vector<8x128xbf16> to vector<8x32xbf16>
    %cst_17 = arith.constant dense<0.000000e+00> : vector<8x8xf32>
    %44 = tpu.matmul %42, %43, %cst_17 {dimension_numbers = #tpu.dot_dimension_numbers<[1], [1], [0], [0], [0, 0, 1, 0], [], []>} : vector<8x32xbf16>, vector<8x32xbf16>, vector<8x8xf32> -> vector<8x8xf32>
    %cst_18 = arith.constant 0.176776692 : f32
    %45 = vector.broadcast %cst_18 : f32 to vector<8x8xf32>
    %46 = arith.mulf %44, %45 : vector<8x8xf32>
    %cst_19 = arith.constant dense<0xFF800000> : vector<8xf32>
    %47 = vector.multi_reduction <maximumf>, %46, %cst_19 [1] : vector<8x8xf32> to vector<8xf32>
    %48 = vector.shape_cast %47 : vector<8xf32> to vector<8x1xf32>
    %49 = vector.broadcast %48 : vector<8x1xf32> to vector<8x8xf32>
    %50 = arith.subf %46, %49 : vector<8x8xf32>
    %51 = math.exp %50 : vector<8x8xf32>
    %cst_20 = arith.constant dense<0.000000e+00> : vector<8xf32>
    %52 = vector.multi_reduction <add>, %51, %cst_20 [1] : vector<8x8xf32> to vector<8xf32>
    %53 = vector.shape_cast %52 : vector<8xf32> to vector<8x1xf32>
    %54 = tpu.reciprocal %53 {approx = true} : vector<8x1xf32> -> vector<8x1xf32>
    %55 = vector.broadcast %54 : vector<8x1xf32> to vector<8x8xf32>
    %56 = arith.mulf %51, %55 : vector<8x8xf32>
    %57 = arith.truncf %56 : vector<8x8xf32> to vector<8x8xbf16>
    %58 = vector.extract_strided_slice %5 {offsets = [0, 64], sizes = [8, 32], strides = [1, 1]} : vector<8x128xbf16> to vector<8x32xbf16>
    %cst_21 = arith.constant dense<0.000000e+00> : vector<8x32xf32>
    %59 = tpu.matmul %57, %58, %cst_21 {dimension_numbers = #tpu.dot_dimension_numbers<[1], [0], [0], [1], [0, 0, 1, 1], [], []>} : vector<8x8xbf16>, vector<8x32xbf16>, vector<8x32xf32> -> vector<8x32xf32>
    %60 = vector.extract_strided_slice %1 {offsets = [0, 96], sizes = [8, 32], strides = [1, 1]} : vector<8x128xbf16> to vector<8x32xbf16>
    %61 = vector.extract_strided_slice %3 {offsets = [0, 96], sizes = [8, 32], strides = [1, 1]} : vector<8x128xbf16> to vector<8x32xbf16>
    %cst_22 = arith.constant dense<0.000000e+00> : vector<8x8xf32>
    %62 = tpu.matmul %60, %61, %cst_22 {dimension_numbers = #tpu.dot_dimension_numbers<[1], [1], [0], [0], [0, 0, 1, 0], [], []>} : vector<8x32xbf16>, vector<8x32xbf16>, vector<8x8xf32> -> vector<8x8xf32>
    %cst_23 = arith.constant 0.176776692 : f32
    %63 = vector.broadcast %cst_23 : f32 to vector<8x8xf32>
    %64 = arith.mulf %62, %63 : vector<8x8xf32>
    %cst_24 = arith.constant dense<0xFF800000> : vector<8xf32>
    %65 = vector.multi_reduction <maximumf>, %64, %cst_24 [1] : vector<8x8xf32> to vector<8xf32>
    %66 = vector.shape_cast %65 : vector<8xf32> to vector<8x1xf32>
    %67 = vector.broadcast %66 : vector<8x1xf32> to vector<8x8xf32>
    %68 = arith.subf %64, %67 : vector<8x8xf32>
    %69 = math.exp %68 : vector<8x8xf32>
    %cst_25 = arith.constant dense<0.000000e+00> : vector<8xf32>
    %70 = vector.multi_reduction <add>, %69, %cst_25 [1] : vector<8x8xf32> to vector<8xf32>
    %71 = vector.shape_cast %70 : vector<8xf32> to vector<8x1xf32>
    %72 = tpu.reciprocal %71 {approx = true} : vector<8x1xf32> -> vector<8x1xf32>
    %73 = vector.broadcast %72 : vector<8x1xf32> to vector<8x8xf32>
    %74 = arith.mulf %69, %73 : vector<8x8xf32>
    %75 = arith.truncf %74 : vector<8x8xf32> to vector<8x8xbf16>
    %76 = vector.extract_strided_slice %5 {offsets = [0, 96], sizes = [8, 32], strides = [1, 1]} : vector<8x128xbf16> to vector<8x32xbf16>
    %cst_26 = arith.constant dense<0.000000e+00> : vector<8x32xf32>
    %77 = tpu.matmul %75, %76, %cst_26 {dimension_numbers = #tpu.dot_dimension_numbers<[1], [0], [0], [1], [0, 0, 1, 1], [], []>} : vector<8x8xbf16>, vector<8x32xbf16>, vector<8x32xf32> -> vector<8x32xf32>
    %78 = tpu.concatenate %23, %41, %59, %77 in 1 : vector<8x32xf32>, vector<8x32xf32>, vector<8x32xf32>, vector<8x32xf32> -> vector<8x128xf32>
    %79 = arith.truncf %78 : vector<8x128xf32> to vector<8x128xbf16>
    %c0_27 = arith.constant 0 : index
    %c0_28 = arith.constant 0 : index
    %c0_29 = arith.constant 0 : index
    %80 = vector.load %arg5[%c0_27, %c0_28, %c0_29] : memref<1x8x128xbf16, #tpu.memory_space<vmem>>, vector<1x8x128xbf16>
    %81 = vector.shape_cast %80 : vector<1x8x128xbf16> to vector<8x128xbf16>
    %82 = vector.shape_cast %79 : vector<8x128xbf16> to vector<1x8x128xbf16>
    tpu.vector_store %arg5[%c0_27, %c0_28, %c0_29], %82 {strides = array<i32>} : memref<1x8x128xbf16, #tpu.memory_space<vmem>>, vector<1x8x128xbf16>,
    return
  }
  func.func @transform_0(%arg0: i32, %arg1: i32) -> (i32, i32, i32) {
    %c0_i32 = arith.constant 0 : i32
    %c0_i32_0 = arith.constant 0 : i32
    return %arg0, %arg1, %c0_i32 : i32, i32, i32
  }
  func.func @transform_1(%arg0: i32, %arg1: i32) -> (i32, i32, i32) {
    %c0_i32 = arith.constant 0 : i32
    %c1_i32 = arith.constant 1 : i32
    %c0_i32_0 = arith.constant 0 : i32
    return %arg0, %c0_i32, %c1_i32 : i32, i32, i32
  }
  func.func @transform_2(%arg0: i32, %arg1: i32) -> (i32, i32, i32) {
    %c0_i32 = arith.constant 0 : i32
    %c2_i32 = arith.constant 2 : i32
    %c0_i32_0 = arith.constant 0 : i32
    return %arg0, %c0_i32, %c2_i32 : i32, i32, i32
  }
  func.func @transform_3(%arg0: i32, %arg1: i32) -> (i32, i32, i32) {
    %c0_i32 = arith.constant 0 : i32
    %c0_i32_0 = arith.constant 0 : i32
    return %arg0, %arg1, %c0_i32 : i32, i32, i32
  }
}

module attributes {stable_mosaic.version = 11 : i64} {
  func.func @_ffn_ln_kernel(%arg0: i32, %arg1: i32, %arg2: memref<16x128xbf16, #tpu.memory_space<vmem>>, %arg3: memref<128x256xbf16, #tpu.memory_space<vmem>>, %arg4: memref<1x256xf32, #tpu.memory_space<vmem>>, %arg5: memref<256x128xbf16, #tpu.memory_space<vmem>>, %arg6: memref<1x128xf32, #tpu.memory_space<vmem>>, %arg7: memref<1x128xf32, #tpu.memory_space<vmem>>, %arg8: memref<1x128xf32, #tpu.memory_space<vmem>>, %arg9: memref<16x128xbf16, #tpu.memory_space<vmem>>, %arg10: memref<16x128xf32, #tpu.memory_space<vmem>>) attributes {dimension_semantics = [#tpu.dimension_semantics<parallel>, #tpu.dimension_semantics<arbitrary>], iteration_bounds = array<i64: 1, 1>, scalar_prefetch = 0 : i64, scratch_operands = 1 : i64, tpu.core_type = #tpu.core_type<tc>, window_params = [{transform_indices = @transform_0, window_bounds = array<i64: 16, 128>}, {transform_indices = @transform_1, window_bounds = array<i64: 128, 256>}, {transform_indices = @transform_2, window_bounds = array<i64: 1, 256>}, {transform_indices = @transform_3, window_bounds = array<i64: 256, 128>}, {pipeline_mode = #tpu.pipeline_mode<synchronous>, transform_indices = @transform_4, window_bounds = array<i64: 1, 128>}, {pipeline_mode = #tpu.pipeline_mode<synchronous>, transform_indices = @transform_5, window_bounds = array<i64: 1, 128>}, {pipeline_mode = #tpu.pipeline_mode<synchronous>, transform_indices = @transform_6, window_bounds = array<i64: 1, 128>}, {transform_indices = @transform_7, window_bounds = array<i64: 16, 128>}]} {
    %c0_i32 = arith.constant 0 : i32
    %0 = arith.cmpi eq, %arg1, %c0_i32 : i32
    %1 = arith.extui %0 : i1 to i32
    %c0_i32_0 = arith.constant 0 : i32
    %2 = arith.cmpi ne, %1, %c0_i32_0 : i32
    scf.if %2 {
      %cst_16 = arith.constant 0.000000e+00 : f32
      %20 = vector.broadcast %cst_16 : f32 to vector<16x128xf32>
      %c0_17 = arith.constant 0 : index
      %c0_18 = arith.constant 0 : index
      %21 = vector.load %arg10[%c0_17, %c0_18] : memref<16x128xf32, #tpu.memory_space<vmem>>, vector<16x128xf32>
      tpu.vector_store %arg10[%c0_17, %c0_18], %20 {strides = array<i32>} : memref<16x128xf32, #tpu.memory_space<vmem>>, vector<16x128xf32>,
    } else {
    }
    %c0 = arith.constant 0 : index
    %c0_1 = arith.constant 0 : index
    %3 = vector.load %arg2[%c0, %c0_1] : memref<16x128xbf16, #tpu.memory_space<vmem>>, vector<16x128xbf16>
    %c0_2 = arith.constant 0 : index
    %c0_3 = arith.constant 0 : index
    %4 = vector.load %arg3[%c0_2, %c0_3] : memref<128x256xbf16, #tpu.memory_space<vmem>>, vector<128x256xbf16>
    %cst = arith.constant dense<0.000000e+00> : vector<16x256xf32>
    %5 = tpu.matmul %3, %4, %cst {dimension_numbers = #tpu.dot_dimension_numbers<[1], [0], [0], [1], [0, 0, 1, 1], [], []>} : vector<16x128xbf16>, vector<128x256xbf16>, vector<16x256xf32> -> vector<16x256xf32>
    %c0_4 = arith.constant 0 : index
    %c0_5 = arith.constant 0 : index
    %6 = vector.load %arg4[%c0_4, %c0_5] : memref<1x256xf32, #tpu.memory_space<vmem>>, vector<1x256xf32>
    %7 = vector.broadcast %6 : vector<1x256xf32> to vector<16x256xf32>
    %8 = arith.addf %5, %7 : vector<16x256xf32>
    %cst_6 = arith.constant 0.000000e+00 : f32
    %9 = vector.broadcast %cst_6 : f32 to vector<16x256xf32>
    %10 = arith.maximumf %8, %9 : vector<16x256xf32>
    %11 = arith.truncf %10 : vector<16x256xf32> to vector<16x256xbf16>
    %c0_7 = arith.constant 0 : index
    %c0_8 = arith.constant 0 : index
    %12 = vector.load %arg10[%c0_7, %c0_8] : memref<16x128xf32, #tpu.memory_space<vmem>>, vector<16x128xf32>
    %c0_9 = arith.constant 0 : index
    %c0_10 = arith.constant 0 : index
    %13 = vector.load %arg5[%c0_9, %c0_10] : memref<256x128xbf16, #tpu.memory_space<vmem>>, vector<256x128xbf16>
    %cst_11 = arith.constant dense<0.000000e+00> : vector<16x128xf32>
    %14 = tpu.matmul %11, %13, %cst_11 {dimension_numbers = #tpu.dot_dimension_numbers<[1], [0], [0], [1], [0, 0, 1, 1], [], []>} : vector<16x256xbf16>, vector<256x128xbf16>, vector<16x128xf32> -> vector<16x128xf32>
    %15 = arith.addf %12, %14 : vector<16x128xf32>
    %c0_12 = arith.constant 0 : index
    %c0_13 = arith.constant 0 : index
    %16 = vector.load %arg10[%c0_12, %c0_13] : memref<16x128xf32, #tpu.memory_space<vmem>>, vector<16x128xf32>
    tpu.vector_store %arg10[%c0_12, %c0_13], %15 {strides = array<i32>} : memref<16x128xf32, #tpu.memory_space<vmem>>, vector<16x128xf32>,
    %c0_i32_14 = arith.constant 0 : i32
    %17 = arith.cmpi eq, %arg1, %c0_i32_14 : i32
    %18 = arith.extui %17 : i1 to i32
    %c0_i32_15 = arith.constant 0 : i32
    %19 = arith.cmpi ne, %18, %c0_i32_15 : i32
    scf.if %19 {
      %c0_16 = arith.constant 0 : index
      %c0_17 = arith.constant 0 : index
      %20 = vector.load %arg10[%c0_16, %c0_17] : memref<16x128xf32, #tpu.memory_space<vmem>>, vector<16x128xf32>
      %c0_18 = arith.constant 0 : index
      %c0_19 = arith.constant 0 : index
      %21 = vector.load %arg6[%c0_18, %c0_19] : memref<1x128xf32, #tpu.memory_space<vmem>>, vector<1x128xf32>
      %22 = vector.broadcast %21 : vector<1x128xf32> to vector<16x128xf32>
      %23 = arith.addf %20, %22 : vector<16x128xf32>
      %24 = arith.extf %3 : vector<16x128xbf16> to vector<16x128xf32>
      %25 = arith.addf %23, %24 : vector<16x128xf32>
      %cst_20 = arith.constant dense<0.000000e+00> : vector<16xf32>
      %26 = vector.multi_reduction <add>, %25, %cst_20 [1] : vector<16x128xf32> to vector<16xf32>
      %27 = vector.shape_cast %26 : vector<16xf32> to vector<16x1xf32>
      %cst_21 = arith.constant 1.280000e+02 : f32
      %28 = vector.broadcast %cst_21 : f32 to vector<16x1xf32>
      %29 = arith.divf %27, %28 : vector<16x1xf32>
      %30 = vector.broadcast %29 : vector<16x1xf32> to vector<16x128xf32>
      %31 = arith.subf %25, %30 : vector<16x128xf32>
      %32 = arith.mulf %31, %31 : vector<16x128xf32>
      %cst_22 = arith.constant dense<0.000000e+00> : vector<16xf32>
      %33 = vector.multi_reduction <add>, %32, %cst_22 [1] : vector<16x128xf32> to vector<16xf32>
      %34 = vector.shape_cast %33 : vector<16xf32> to vector<16x1xf32>
      %cst_23 = arith.constant 1.280000e+02 : f32
      %35 = vector.broadcast %cst_23 : f32 to vector<16x1xf32>
      %36 = arith.divf %34, %35 : vector<16x1xf32>
      %cst_24 = arith.constant 9.99999974E-6 : f32
      %37 = vector.broadcast %cst_24 : f32 to vector<16x1xf32>
      %38 = arith.addf %36, %37 : vector<16x1xf32>
      %39 = math.rsqrt %38 : vector<16x1xf32>
      %40 = vector.broadcast %39 : vector<16x1xf32> to vector<16x128xf32>
      %41 = arith.mulf %31, %40 : vector<16x128xf32>
      %c0_25 = arith.constant 0 : index
      %c0_26 = arith.constant 0 : index
      %42 = vector.load %arg7[%c0_25, %c0_26] : memref<1x128xf32, #tpu.memory_space<vmem>>, vector<1x128xf32>
      %43 = vector.broadcast %42 : vector<1x128xf32> to vector<16x128xf32>
      %44 = arith.mulf %41, %43 : vector<16x128xf32>
      %c0_27 = arith.constant 0 : index
      %c0_28 = arith.constant 0 : index
      %45 = vector.load %arg8[%c0_27, %c0_28] : memref<1x128xf32, #tpu.memory_space<vmem>>, vector<1x128xf32>
      %46 = vector.broadcast %45 : vector<1x128xf32> to vector<16x128xf32>
      %47 = arith.addf %44, %46 : vector<16x128xf32>
      %48 = arith.truncf %47 : vector<16x128xf32> to vector<16x128xbf16>
      %c0_29 = arith.constant 0 : index
      %c0_30 = arith.constant 0 : index
      %49 = vector.load %arg9[%c0_29, %c0_30] : memref<16x128xbf16, #tpu.memory_space<vmem>>, vector<16x128xbf16>
      tpu.vector_store %arg9[%c0_29, %c0_30], %48 {strides = array<i32>} : memref<16x128xbf16, #tpu.memory_space<vmem>>, vector<16x128xbf16>,
    } else {
    }
    return
  }
  func.func @transform_0(%arg0: i32, %arg1: i32) -> (i32, i32) {
    %c0_i32 = arith.constant 0 : i32
    %c0_i32_0 = arith.constant 0 : i32
    return %arg0, %c0_i32 : i32, i32
  }
  func.func @transform_1(%arg0: i32, %arg1: i32) -> (i32, i32) {
    %c0_i32 = arith.constant 0 : i32
    %c0_i32_0 = arith.constant 0 : i32
    return %c0_i32, %arg1 : i32, i32
  }
  func.func @transform_2(%arg0: i32, %arg1: i32) -> (i32, i32) {
    %c0_i32 = arith.constant 0 : i32
    %c0_i32_0 = arith.constant 0 : i32
    return %c0_i32, %arg1 : i32, i32
  }
  func.func @transform_3(%arg0: i32, %arg1: i32) -> (i32, i32) {
    %c0_i32 = arith.constant 0 : i32
    %c0_i32_0 = arith.constant 0 : i32
    return %arg1, %c0_i32 : i32, i32
  }
  func.func @transform_4(%arg0: i32, %arg1: i32) -> (i32, i32) {
    %c0_i32 = arith.constant 0 : i32
    %c0_i32_0 = arith.constant 0 : i32
    %c0_i32_1 = arith.constant 0 : i32
    return %c0_i32, %c0_i32_0 : i32, i32
  }
  func.func @transform_5(%arg0: i32, %arg1: i32) -> (i32, i32) {
    %c0_i32 = arith.constant 0 : i32
    %c0_i32_0 = arith.constant 0 : i32
    %c0_i32_1 = arith.constant 0 : i32
    return %c0_i32, %c0_i32_0 : i32, i32
  }
  func.func @transform_6(%arg0: i32, %arg1: i32) -> (i32, i32) {
    %c0_i32 = arith.constant 0 : i32
    %c0_i32_0 = arith.constant 0 : i32
    %c0_i32_1 = arith.constant 0 : i32
    return %c0_i32, %c0_i32_0 : i32, i32
  }
  func.func @transform_7(%arg0: i32, %arg1: i32) -> (i32, i32) {
    %c0_i32 = arith.constant 0 : i32
    %c0_i32_0 = arith.constant 0 : i32
    return %arg0, %c0_i32 : i32, i32
  }
}

module attributes {stable_mosaic.version = 11 : i64} {
  func.func @_layernorm_kernel(%arg0: i32, %arg1: memref<16x128xbf16, #tpu.memory_space<vmem>>, %arg2: memref<1x128xf32, #tpu.memory_space<vmem>>, %arg3: memref<1x128xf32, #tpu.memory_space<vmem>>, %arg4: memref<16x128xbf16, #tpu.memory_space<vmem>>) attributes {dimension_semantics = [#tpu.dimension_semantics<parallel>], iteration_bounds = array<i64: 1>, scalar_prefetch = 0 : i64, scratch_operands = 0 : i64, tpu.core_type = #tpu.core_type<tc>, window_params = [{transform_indices = @transform_0, window_bounds = array<i64: 16, 128>}, {pipeline_mode = #tpu.pipeline_mode<synchronous>, transform_indices = @transform_1, window_bounds = array<i64: 1, 128>}, {pipeline_mode = #tpu.pipeline_mode<synchronous>, transform_indices = @transform_2, window_bounds = array<i64: 1, 128>}, {transform_indices = @transform_3, window_bounds = array<i64: 16, 128>}]} {
    %c0 = arith.constant 0 : index
    %c0_0 = arith.constant 0 : index
    %0 = vector.load %arg1[%c0, %c0_0] : memref<16x128xbf16, #tpu.memory_space<vmem>>, vector<16x128xbf16>
    %1 = arith.extf %0 : vector<16x128xbf16> to vector<16x128xf32>
    %cst = arith.constant dense<0.000000e+00> : vector<16xf32>
    %2 = vector.multi_reduction <add>, %1, %cst [1] : vector<16x128xf32> to vector<16xf32>
    %3 = vector.shape_cast %2 : vector<16xf32> to vector<16x1xf32>
    %cst_1 = arith.constant 1.280000e+02 : f32
    %4 = vector.broadcast %cst_1 : f32 to vector<16x1xf32>
    %5 = arith.divf %3, %4 : vector<16x1xf32>
    %6 = vector.broadcast %5 : vector<16x1xf32> to vector<16x128xf32>
    %7 = arith.subf %1, %6 : vector<16x128xf32>
    %8 = arith.mulf %7, %7 : vector<16x128xf32>
    %cst_2 = arith.constant dense<0.000000e+00> : vector<16xf32>
    %9 = vector.multi_reduction <add>, %8, %cst_2 [1] : vector<16x128xf32> to vector<16xf32>
    %10 = vector.shape_cast %9 : vector<16xf32> to vector<16x1xf32>
    %cst_3 = arith.constant 1.280000e+02 : f32
    %11 = vector.broadcast %cst_3 : f32 to vector<16x1xf32>
    %12 = arith.divf %10, %11 : vector<16x1xf32>
    %cst_4 = arith.constant 9.99999974E-6 : f32
    %13 = vector.broadcast %cst_4 : f32 to vector<16x1xf32>
    %14 = arith.addf %12, %13 : vector<16x1xf32>
    %15 = math.rsqrt %14 : vector<16x1xf32>
    %16 = vector.broadcast %15 : vector<16x1xf32> to vector<16x128xf32>
    %17 = arith.mulf %7, %16 : vector<16x128xf32>
    %c0_5 = arith.constant 0 : index
    %c0_6 = arith.constant 0 : index
    %18 = vector.load %arg2[%c0_5, %c0_6] : memref<1x128xf32, #tpu.memory_space<vmem>>, vector<1x128xf32>
    %19 = vector.broadcast %18 : vector<1x128xf32> to vector<16x128xf32>
    %20 = arith.mulf %17, %19 : vector<16x128xf32>
    %c0_7 = arith.constant 0 : index
    %c0_8 = arith.constant 0 : index
    %21 = vector.load %arg3[%c0_7, %c0_8] : memref<1x128xf32, #tpu.memory_space<vmem>>, vector<1x128xf32>
    %22 = vector.broadcast %21 : vector<1x128xf32> to vector<16x128xf32>
    %23 = arith.addf %20, %22 : vector<16x128xf32>
    %24 = arith.truncf %23 : vector<16x128xf32> to vector<16x128xbf16>
    %c0_9 = arith.constant 0 : index
    %c0_10 = arith.constant 0 : index
    %25 = vector.load %arg4[%c0_9, %c0_10] : memref<16x128xbf16, #tpu.memory_space<vmem>>, vector<16x128xbf16>
    tpu.vector_store %arg4[%c0_9, %c0_10], %24 {strides = array<i32>} : memref<16x128xbf16, #tpu.memory_space<vmem>>, vector<16x128xbf16>,
    return
  }
  func.func @transform_0(%arg0: i32) -> (i32, i32) {
    %c0_i32 = arith.constant 0 : i32
    %c0_i32_0 = arith.constant 0 : i32
    return %arg0, %c0_i32 : i32, i32
  }
  func.func @transform_1(%arg0: i32) -> (i32, i32) {
    %c0_i32 = arith.constant 0 : i32
    %c0_i32_0 = arith.constant 0 : i32
    %c0_i32_1 = arith.constant 0 : i32
    return %c0_i32, %c0_i32_0 : i32, i32
  }
  func.func @transform_2(%arg0: i32) -> (i32, i32) {
    %c0_i32 = arith.constant 0 : i32
    %c0_i32_0 = arith.constant 0 : i32
    %c0_i32_1 = arith.constant 0 : i32
    return %c0_i32, %c0_i32_0 : i32, i32
  }
  func.func @transform_3(%arg0: i32) -> (i32, i32) {
    %c0_i32 = arith.constant 0 : i32
    %c0_i32_0 = arith.constant 0 : i32
    return %arg0, %c0_i32 : i32, i32
  }
}

module attributes {stable_mosaic.version = 11 : i64} {
  func.func @_linear_kernel(%arg0: i32, %arg1: i32, %arg2: i32, %arg3: memref<16x128xbf16, #tpu.memory_space<vmem>>, %arg4: memref<128x256xbf16, #tpu.memory_space<vmem>>, %arg5: memref<1x256xf32, #tpu.memory_space<vmem>>, %arg6: memref<16x256xbf16, #tpu.memory_space<vmem>>, %arg7: memref<16x256xf32, #tpu.memory_space<vmem>>) attributes {dimension_semantics = [#tpu.dimension_semantics<parallel>, #tpu.dimension_semantics<parallel>, #tpu.dimension_semantics<arbitrary>], iteration_bounds = array<i64: 1, 1, 1>, scalar_prefetch = 0 : i64, scratch_operands = 1 : i64, tpu.core_type = #tpu.core_type<tc>, window_params = [{transform_indices = @transform_0, window_bounds = array<i64: 16, 128>}, {transform_indices = @transform_1, window_bounds = array<i64: 128, 256>}, {transform_indices = @transform_2, window_bounds = array<i64: 1, 256>}, {transform_indices = @transform_3, window_bounds = array<i64: 16, 256>}]} {
    %c0_i32 = arith.constant 0 : i32
    %0 = arith.cmpi eq, %arg2, %c0_i32 : i32
    %1 = arith.extui %0 : i1 to i32
    %c0_i32_0 = arith.constant 0 : i32
    %2 = arith.cmpi ne, %1, %c0_i32_0 : i32
    scf.if %2 {
      %cst_10 = arith.constant 0.000000e+00 : f32
      %12 = vector.broadcast %cst_10 : f32 to vector<16x256xf32>
      %c0_11 = arith.constant 0 : index
      %c0_12 = arith.constant 0 : index
      %13 = vector.load %arg7[%c0_11, %c0_12] : memref<16x256xf32, #tpu.memory_space<vmem>>, vector<16x256xf32>
      tpu.vector_store %arg7[%c0_11, %c0_12], %12 {strides = array<i32>} : memref<16x256xf32, #tpu.memory_space<vmem>>, vector<16x256xf32>,
    } else {
    }
    %c0 = arith.constant 0 : index
    %c0_1 = arith.constant 0 : index
    %3 = vector.load %arg7[%c0, %c0_1] : memref<16x256xf32, #tpu.memory_space<vmem>>, vector<16x256xf32>
    %c0_2 = arith.constant 0 : index
    %c0_3 = arith.constant 0 : index
    %4 = vector.load %arg3[%c0_2, %c0_3] : memref<16x128xbf16, #tpu.memory_space<vmem>>, vector<16x128xbf16>
    %c0_4 = arith.constant 0 : index
    %c0_5 = arith.constant 0 : index
    %5 = vector.load %arg4[%c0_4, %c0_5] : memref<128x256xbf16, #tpu.memory_space<vmem>>, vector<128x256xbf16>
    %cst = arith.constant dense<0.000000e+00> : vector<16x256xf32>
    %6 = tpu.matmul %4, %5, %cst {dimension_numbers = #tpu.dot_dimension_numbers<[1], [0], [0], [1], [0, 0, 1, 1], [], []>} : vector<16x128xbf16>, vector<128x256xbf16>, vector<16x256xf32> -> vector<16x256xf32>
    %7 = arith.addf %3, %6 : vector<16x256xf32>
    %c0_6 = arith.constant 0 : index
    %c0_7 = arith.constant 0 : index
    %8 = vector.load %arg7[%c0_6, %c0_7] : memref<16x256xf32, #tpu.memory_space<vmem>>, vector<16x256xf32>
    tpu.vector_store %arg7[%c0_6, %c0_7], %7 {strides = array<i32>} : memref<16x256xf32, #tpu.memory_space<vmem>>, vector<16x256xf32>,
    %c0_i32_8 = arith.constant 0 : i32
    %9 = arith.cmpi eq, %arg2, %c0_i32_8 : i32
    %10 = arith.extui %9 : i1 to i32
    %c0_i32_9 = arith.constant 0 : i32
    %11 = arith.cmpi ne, %10, %c0_i32_9 : i32
    scf.if %11 {
      %c0_10 = arith.constant 0 : index
      %c0_11 = arith.constant 0 : index
      %12 = vector.load %arg7[%c0_10, %c0_11] : memref<16x256xf32, #tpu.memory_space<vmem>>, vector<16x256xf32>
      %c0_12 = arith.constant 0 : index
      %c0_13 = arith.constant 0 : index
      %13 = vector.load %arg5[%c0_12, %c0_13] : memref<1x256xf32, #tpu.memory_space<vmem>>, vector<1x256xf32>
      %14 = vector.broadcast %13 : vector<1x256xf32> to vector<16x256xf32>
      %15 = arith.addf %12, %14 : vector<16x256xf32>
      %16 = arith.truncf %15 : vector<16x256xf32> to vector<16x256xbf16>
      %c0_14 = arith.constant 0 : index
      %c0_15 = arith.constant 0 : index
      %17 = vector.load %arg6[%c0_14, %c0_15] : memref<16x256xbf16, #tpu.memory_space<vmem>>, vector<16x256xbf16>
      tpu.vector_store %arg6[%c0_14, %c0_15], %16 {strides = array<i32>} : memref<16x256xbf16, #tpu.memory_space<vmem>>, vector<16x256xbf16>,
    } else {
    }
    return
  }
  func.func @transform_0(%arg0: i32, %arg1: i32, %arg2: i32) -> (i32, i32) {
    %c0_i32 = arith.constant 0 : i32
    return %arg0, %arg2 : i32, i32
  }
  func.func @transform_1(%arg0: i32, %arg1: i32, %arg2: i32) -> (i32, i32) {
    %c0_i32 = arith.constant 0 : i32
    return %arg2, %arg1 : i32, i32
  }
  func.func @transform_2(%arg0: i32, %arg1: i32, %arg2: i32) -> (i32, i32) {
    %c0_i32 = arith.constant 0 : i32
    %c0_i32_0 = arith.constant 0 : i32
    return %c0_i32, %arg1 : i32, i32
  }
  func.func @transform_3(%arg0: i32, %arg1: i32, %arg2: i32) -> (i32, i32) {
    %c0_i32 = arith.constant 0 : i32
    return %arg0, %arg1 : i32, i32
  }
}

module attributes {stable_mosaic.version = 11 : i64} {
  func.func @_linear_kernel(%arg0: i32, %arg1: i32, %arg2: i32, %arg3: memref<16x128xbf16, #tpu.memory_space<vmem>>, %arg4: memref<128x128xbf16, #tpu.memory_space<vmem>>, %arg5: memref<1x128xf32, #tpu.memory_space<vmem>>, %arg6: memref<16x128xbf16, #tpu.memory_space<vmem>>, %arg7: memref<16x128xf32, #tpu.memory_space<vmem>>) attributes {dimension_semantics = [#tpu.dimension_semantics<parallel>, #tpu.dimension_semantics<parallel>, #tpu.dimension_semantics<arbitrary>], iteration_bounds = array<i64: 1, 1, 1>, scalar_prefetch = 0 : i64, scratch_operands = 1 : i64, tpu.core_type = #tpu.core_type<tc>, window_params = [{transform_indices = @transform_0, window_bounds = array<i64: 16, 128>}, {transform_indices = @transform_1, window_bounds = array<i64: 128, 128>}, {transform_indices = @transform_2, window_bounds = array<i64: 1, 128>}, {transform_indices = @transform_3, window_bounds = array<i64: 16, 128>}]} {
    %c0_i32 = arith.constant 0 : i32
    %0 = arith.cmpi eq, %arg2, %c0_i32 : i32
    %1 = arith.extui %0 : i1 to i32
    %c0_i32_0 = arith.constant 0 : i32
    %2 = arith.cmpi ne, %1, %c0_i32_0 : i32
    scf.if %2 {
      %cst_10 = arith.constant 0.000000e+00 : f32
      %12 = vector.broadcast %cst_10 : f32 to vector<16x128xf32>
      %c0_11 = arith.constant 0 : index
      %c0_12 = arith.constant 0 : index
      %13 = vector.load %arg7[%c0_11, %c0_12] : memref<16x128xf32, #tpu.memory_space<vmem>>, vector<16x128xf32>
      tpu.vector_store %arg7[%c0_11, %c0_12], %12 {strides = array<i32>} : memref<16x128xf32, #tpu.memory_space<vmem>>, vector<16x128xf32>,
    } else {
    }
    %c0 = arith.constant 0 : index
    %c0_1 = arith.constant 0 : index
    %3 = vector.load %arg7[%c0, %c0_1] : memref<16x128xf32, #tpu.memory_space<vmem>>, vector<16x128xf32>
    %c0_2 = arith.constant 0 : index
    %c0_3 = arith.constant 0 : index
    %4 = vector.load %arg3[%c0_2, %c0_3] : memref<16x128xbf16, #tpu.memory_space<vmem>>, vector<16x128xbf16>
    %c0_4 = arith.constant 0 : index
    %c0_5 = arith.constant 0 : index
    %5 = vector.load %arg4[%c0_4, %c0_5] : memref<128x128xbf16, #tpu.memory_space<vmem>>, vector<128x128xbf16>
    %cst = arith.constant dense<0.000000e+00> : vector<16x128xf32>
    %6 = tpu.matmul %4, %5, %cst {dimension_numbers = #tpu.dot_dimension_numbers<[1], [0], [0], [1], [0, 0, 1, 1], [], []>} : vector<16x128xbf16>, vector<128x128xbf16>, vector<16x128xf32> -> vector<16x128xf32>
    %7 = arith.addf %3, %6 : vector<16x128xf32>
    %c0_6 = arith.constant 0 : index
    %c0_7 = arith.constant 0 : index
    %8 = vector.load %arg7[%c0_6, %c0_7] : memref<16x128xf32, #tpu.memory_space<vmem>>, vector<16x128xf32>
    tpu.vector_store %arg7[%c0_6, %c0_7], %7 {strides = array<i32>} : memref<16x128xf32, #tpu.memory_space<vmem>>, vector<16x128xf32>,
    %c0_i32_8 = arith.constant 0 : i32
    %9 = arith.cmpi eq, %arg2, %c0_i32_8 : i32
    %10 = arith.extui %9 : i1 to i32
    %c0_i32_9 = arith.constant 0 : i32
    %11 = arith.cmpi ne, %10, %c0_i32_9 : i32
    scf.if %11 {
      %c0_10 = arith.constant 0 : index
      %c0_11 = arith.constant 0 : index
      %12 = vector.load %arg7[%c0_10, %c0_11] : memref<16x128xf32, #tpu.memory_space<vmem>>, vector<16x128xf32>
      %c0_12 = arith.constant 0 : index
      %c0_13 = arith.constant 0 : index
      %13 = vector.load %arg5[%c0_12, %c0_13] : memref<1x128xf32, #tpu.memory_space<vmem>>, vector<1x128xf32>
      %14 = vector.broadcast %13 : vector<1x128xf32> to vector<16x128xf32>
      %15 = arith.addf %12, %14 : vector<16x128xf32>
      %16 = arith.truncf %15 : vector<16x128xf32> to vector<16x128xbf16>
      %c0_14 = arith.constant 0 : index
      %c0_15 = arith.constant 0 : index
      %17 = vector.load %arg6[%c0_14, %c0_15] : memref<16x128xbf16, #tpu.memory_space<vmem>>, vector<16x128xbf16>
      tpu.vector_store %arg6[%c0_14, %c0_15], %16 {strides = array<i32>} : memref<16x128xbf16, #tpu.memory_space<vmem>>, vector<16x128xbf16>,
    } else {
    }
    return
  }
  func.func @transform_0(%arg0: i32, %arg1: i32, %arg2: i32) -> (i32, i32) {
    %c0_i32 = arith.constant 0 : i32
    return %arg0, %arg2 : i32, i32
  }
  func.func @transform_1(%arg0: i32, %arg1: i32, %arg2: i32) -> (i32, i32) {
    %c0_i32 = arith.constant 0 : i32
    return %arg2, %arg1 : i32, i32
  }
  func.func @transform_2(%arg0: i32, %arg1: i32, %arg2: i32) -> (i32, i32) {
    %c0_i32 = arith.constant 0 : i32
    %c0_i32_0 = arith.constant 0 : i32
    return %c0_i32, %arg1 : i32, i32
  }
  func.func @transform_3(%arg0: i32, %arg1: i32, %arg2: i32) -> (i32, i32) {
    %c0_i32 = arith.constant 0 : i32
    return %arg0, %arg1 : i32, i32
  }
}

module attributes {stable_mosaic.version = 11 : i64} {
  func.func @_mha_kernel(%arg0: i32, %arg1: i32, %arg2: memref<1x8x128xbf16, #tpu.memory_space<vmem>>, %arg3: memref<1x8x128xbf16, #tpu.memory_space<vmem>>, %arg4: memref<1x8x128xbf16, #tpu.memory_space<vmem>>, %arg5: memref<1x8x128xbf16, #tpu.memory_space<vmem>>) attributes {dimension_semantics = [#tpu.dimension_semantics<parallel>, #tpu.dimension_semantics<parallel>], iteration_bounds = array<i64: 2, 1>, scalar_prefetch = 0 : i64, scratch_operands = 0 : i64, tpu.core_type = #tpu.core_type<tc>, window_params = [{transform_indices = @transform_0, window_bounds = array<i64: 1, 8, 128>}, {transform_indices = @transform_1, window_bounds = array<i64: 1, 8, 128>}, {transform_indices = @transform_2, window_bounds = array<i64: 1, 8, 128>}, {transform_indices = @transform_3, window_bounds = array<i64: 1, 8, 128>}]} {
    %c0 = arith.constant 0 : index
    %c0_0 = arith.constant 0 : index
    %c0_1 = arith.constant 0 : index
    %0 = vector.load %arg2[%c0, %c0_0, %c0_1] : memref<1x8x128xbf16, #tpu.memory_space<vmem>>, vector<1x8x128xbf16>
    %1 = vector.shape_cast %0 : vector<1x8x128xbf16> to vector<8x128xbf16>
    %c0_2 = arith.constant 0 : index
    %c0_3 = arith.constant 0 : index
    %c0_4 = arith.constant 0 : index
    %2 = vector.load %arg3[%c0_2, %c0_3, %c0_4] : memref<1x8x128xbf16, #tpu.memory_space<vmem>>, vector<1x8x128xbf16>
    %3 = vector.shape_cast %2 : vector<1x8x128xbf16> to vector<8x128xbf16>
    %c0_5 = arith.constant 0 : index
    %c0_6 = arith.constant 0 : index
    %c0_7 = arith.constant 0 : index
    %4 = vector.load %arg4[%c0_5, %c0_6, %c0_7] : memref<1x8x128xbf16, #tpu.memory_space<vmem>>, vector<1x8x128xbf16>
    %5 = vector.shape_cast %4 : vector<1x8x128xbf16> to vector<8x128xbf16>
    %6 = vector.extract_strided_slice %1 {offsets = [0, 0], sizes = [8, 32], strides = [1, 1]} : vector<8x128xbf16> to vector<8x32xbf16>
    %7 = vector.extract_strided_slice %3 {offsets = [0, 0], sizes = [8, 32], strides = [1, 1]} : vector<8x128xbf16> to vector<8x32xbf16>
    %cst = arith.constant dense<0.000000e+00> : vector<8x8xf32>
    %8 = tpu.matmul %6, %7, %cst {dimension_numbers = #tpu.dot_dimension_numbers<[1], [1], [0], [0], [0, 0, 1, 0], [], []>} : vector<8x32xbf16>, vector<8x32xbf16>, vector<8x8xf32> -> vector<8x8xf32>
    %cst_8 = arith.constant 0.176776692 : f32
    %9 = vector.broadcast %cst_8 : f32 to vector<8x8xf32>
    %10 = arith.mulf %8, %9 : vector<8x8xf32>
    %cst_9 = arith.constant dense<0xFF800000> : vector<8xf32>
    %11 = vector.multi_reduction <maximumf>, %10, %cst_9 [1] : vector<8x8xf32> to vector<8xf32>
    %12 = vector.shape_cast %11 : vector<8xf32> to vector<8x1xf32>
    %13 = vector.broadcast %12 : vector<8x1xf32> to vector<8x8xf32>
    %14 = arith.subf %10, %13 : vector<8x8xf32>
    %15 = math.exp %14 : vector<8x8xf32>
    %cst_10 = arith.constant dense<0.000000e+00> : vector<8xf32>
    %16 = vector.multi_reduction <add>, %15, %cst_10 [1] : vector<8x8xf32> to vector<8xf32>
    %17 = vector.shape_cast %16 : vector<8xf32> to vector<8x1xf32>
    %18 = tpu.reciprocal %17 {approx = true} : vector<8x1xf32> -> vector<8x1xf32>
    %19 = vector.broadcast %18 : vector<8x1xf32> to vector<8x8xf32>
    %20 = arith.mulf %15, %19 : vector<8x8xf32>
    %21 = arith.truncf %20 : vector<8x8xf32> to vector<8x8xbf16>
    %22 = vector.extract_strided_slice %5 {offsets = [0, 0], sizes = [8, 32], strides = [1, 1]} : vector<8x128xbf16> to vector<8x32xbf16>
    %cst_11 = arith.constant dense<0.000000e+00> : vector<8x32xf32>
    %23 = tpu.matmul %21, %22, %cst_11 {dimension_numbers = #tpu.dot_dimension_numbers<[1], [0], [0], [1], [0, 0, 1, 1], [], []>} : vector<8x8xbf16>, vector<8x32xbf16>, vector<8x32xf32> -> vector<8x32xf32>
    %24 = vector.extract_strided_slice %1 {offsets = [0, 32], sizes = [8, 32], strides = [1, 1]} : vector<8x128xbf16> to vector<8x32xbf16>
    %25 = vector.extract_strided_slice %3 {offsets = [0, 32], sizes = [8, 32], strides = [1, 1]} : vector<8x128xbf16> to vector<8x32xbf16>
    %cst_12 = arith.constant dense<0.000000e+00> : vector<8x8xf32>
    %26 = tpu.matmul %24, %25, %cst_12 {dimension_numbers = #tpu.dot_dimension_numbers<[1], [1], [0], [0], [0, 0, 1, 0], [], []>} : vector<8x32xbf16>, vector<8x32xbf16>, vector<8x8xf32> -> vector<8x8xf32>
    %cst_13 = arith.constant 0.176776692 : f32
    %27 = vector.broadcast %cst_13 : f32 to vector<8x8xf32>
    %28 = arith.mulf %26, %27 : vector<8x8xf32>
    %cst_14 = arith.constant dense<0xFF800000> : vector<8xf32>
    %29 = vector.multi_reduction <maximumf>, %28, %cst_14 [1] : vector<8x8xf32> to vector<8xf32>
    %30 = vector.shape_cast %29 : vector<8xf32> to vector<8x1xf32>
    %31 = vector.broadcast %30 : vector<8x1xf32> to vector<8x8xf32>
    %32 = arith.subf %28, %31 : vector<8x8xf32>
    %33 = math.exp %32 : vector<8x8xf32>
    %cst_15 = arith.constant dense<0.000000e+00> : vector<8xf32>
    %34 = vector.multi_reduction <add>, %33, %cst_15 [1] : vector<8x8xf32> to vector<8xf32>
    %35 = vector.shape_cast %34 : vector<8xf32> to vector<8x1xf32>
    %36 = tpu.reciprocal %35 {approx = true} : vector<8x1xf32> -> vector<8x1xf32>
    %37 = vector.broadcast %36 : vector<8x1xf32> to vector<8x8xf32>
    %38 = arith.mulf %33, %37 : vector<8x8xf32>
    %39 = arith.truncf %38 : vector<8x8xf32> to vector<8x8xbf16>
    %40 = vector.extract_strided_slice %5 {offsets = [0, 32], sizes = [8, 32], strides = [1, 1]} : vector<8x128xbf16> to vector<8x32xbf16>
    %cst_16 = arith.constant dense<0.000000e+00> : vector<8x32xf32>
    %41 = tpu.matmul %39, %40, %cst_16 {dimension_numbers = #tpu.dot_dimension_numbers<[1], [0], [0], [1], [0, 0, 1, 1], [], []>} : vector<8x8xbf16>, vector<8x32xbf16>, vector<8x32xf32> -> vector<8x32xf32>
    %42 = vector.extract_strided_slice %1 {offsets = [0, 64], sizes = [8, 32], strides = [1, 1]} : vector<8x128xbf16> to vector<8x32xbf16>
    %43 = vector.extract_strided_slice %3 {offsets = [0, 64], sizes = [8, 32], strides = [1, 1]} : vector<8x128xbf16> to vector<8x32xbf16>
    %cst_17 = arith.constant dense<0.000000e+00> : vector<8x8xf32>
    %44 = tpu.matmul %42, %43, %cst_17 {dimension_numbers = #tpu.dot_dimension_numbers<[1], [1], [0], [0], [0, 0, 1, 0], [], []>} : vector<8x32xbf16>, vector<8x32xbf16>, vector<8x8xf32> -> vector<8x8xf32>
    %cst_18 = arith.constant 0.176776692 : f32
    %45 = vector.broadcast %cst_18 : f32 to vector<8x8xf32>
    %46 = arith.mulf %44, %45 : vector<8x8xf32>
    %cst_19 = arith.constant dense<0xFF800000> : vector<8xf32>
    %47 = vector.multi_reduction <maximumf>, %46, %cst_19 [1] : vector<8x8xf32> to vector<8xf32>
    %48 = vector.shape_cast %47 : vector<8xf32> to vector<8x1xf32>
    %49 = vector.broadcast %48 : vector<8x1xf32> to vector<8x8xf32>
    %50 = arith.subf %46, %49 : vector<8x8xf32>
    %51 = math.exp %50 : vector<8x8xf32>
    %cst_20 = arith.constant dense<0.000000e+00> : vector<8xf32>
    %52 = vector.multi_reduction <add>, %51, %cst_20 [1] : vector<8x8xf32> to vector<8xf32>
    %53 = vector.shape_cast %52 : vector<8xf32> to vector<8x1xf32>
    %54 = tpu.reciprocal %53 {approx = true} : vector<8x1xf32> -> vector<8x1xf32>
    %55 = vector.broadcast %54 : vector<8x1xf32> to vector<8x8xf32>
    %56 = arith.mulf %51, %55 : vector<8x8xf32>
    %57 = arith.truncf %56 : vector<8x8xf32> to vector<8x8xbf16>
    %58 = vector.extract_strided_slice %5 {offsets = [0, 64], sizes = [8, 32], strides = [1, 1]} : vector<8x128xbf16> to vector<8x32xbf16>
    %cst_21 = arith.constant dense<0.000000e+00> : vector<8x32xf32>
    %59 = tpu.matmul %57, %58, %cst_21 {dimension_numbers = #tpu.dot_dimension_numbers<[1], [0], [0], [1], [0, 0, 1, 1], [], []>} : vector<8x8xbf16>, vector<8x32xbf16>, vector<8x32xf32> -> vector<8x32xf32>
    %60 = vector.extract_strided_slice %1 {offsets = [0, 96], sizes = [8, 32], strides = [1, 1]} : vector<8x128xbf16> to vector<8x32xbf16>
    %61 = vector.extract_strided_slice %3 {offsets = [0, 96], sizes = [8, 32], strides = [1, 1]} : vector<8x128xbf16> to vector<8x32xbf16>
    %cst_22 = arith.constant dense<0.000000e+00> : vector<8x8xf32>
    %62 = tpu.matmul %60, %61, %cst_22 {dimension_numbers = #tpu.dot_dimension_numbers<[1], [1], [0], [0], [0, 0, 1, 0], [], []>} : vector<8x32xbf16>, vector<8x32xbf16>, vector<8x8xf32> -> vector<8x8xf32>
    %cst_23 = arith.constant 0.176776692 : f32
    %63 = vector.broadcast %cst_23 : f32 to vector<8x8xf32>
    %64 = arith.mulf %62, %63 : vector<8x8xf32>
    %cst_24 = arith.constant dense<0xFF800000> : vector<8xf32>
    %65 = vector.multi_reduction <maximumf>, %64, %cst_24 [1] : vector<8x8xf32> to vector<8xf32>
    %66 = vector.shape_cast %65 : vector<8xf32> to vector<8x1xf32>
    %67 = vector.broadcast %66 : vector<8x1xf32> to vector<8x8xf32>
    %68 = arith.subf %64, %67 : vector<8x8xf32>
    %69 = math.exp %68 : vector<8x8xf32>
    %cst_25 = arith.constant dense<0.000000e+00> : vector<8xf32>
    %70 = vector.multi_reduction <add>, %69, %cst_25 [1] : vector<8x8xf32> to vector<8xf32>
    %71 = vector.shape_cast %70 : vector<8xf32> to vector<8x1xf32>
    %72 = tpu.reciprocal %71 {approx = true} : vector<8x1xf32> -> vector<8x1xf32>
    %73 = vector.broadcast %72 : vector<8x1xf32> to vector<8x8xf32>
    %74 = arith.mulf %69, %73 : vector<8x8xf32>
    %75 = arith.truncf %74 : vector<8x8xf32> to vector<8x8xbf16>
    %76 = vector.extract_strided_slice %5 {offsets = [0, 96], sizes = [8, 32], strides = [1, 1]} : vector<8x128xbf16> to vector<8x32xbf16>
    %cst_26 = arith.constant dense<0.000000e+00> : vector<8x32xf32>
    %77 = tpu.matmul %75, %76, %cst_26 {dimension_numbers = #tpu.dot_dimension_numbers<[1], [0], [0], [1], [0, 0, 1, 1], [], []>} : vector<8x8xbf16>, vector<8x32xbf16>, vector<8x32xf32> -> vector<8x32xf32>
    %78 = tpu.concatenate %23, %41, %59, %77 in 1 : vector<8x32xf32>, vector<8x32xf32>, vector<8x32xf32>, vector<8x32xf32> -> vector<8x128xf32>
    %79 = arith.truncf %78 : vector<8x128xf32> to vector<8x128xbf16>
    %c0_27 = arith.constant 0 : index
    %c0_28 = arith.constant 0 : index
    %c0_29 = arith.constant 0 : index
    %80 = vector.load %arg5[%c0_27, %c0_28, %c0_29] : memref<1x8x128xbf16, #tpu.memory_space<vmem>>, vector<1x8x128xbf16>
    %81 = vector.shape_cast %80 : vector<1x8x128xbf16> to vector<8x128xbf16>
    %82 = vector.shape_cast %79 : vector<8x128xbf16> to vector<1x8x128xbf16>
    tpu.vector_store %arg5[%c0_27, %c0_28, %c0_29], %82 {strides = array<i32>} : memref<1x8x128xbf16, #tpu.memory_space<vmem>>, vector<1x8x128xbf16>,
    return
  }
  func.func @transform_0(%arg0: i32, %arg1: i32) -> (i32, i32, i32) {
    %c0_i32 = arith.constant 0 : i32
    %c0_i32_0 = arith.constant 0 : i32
    return %arg0, %arg1, %c0_i32 : i32, i32, i32
  }
  func.func @transform_1(%arg0: i32, %arg1: i32) -> (i32, i32, i32) {
    %c0_i32 = arith.constant 0 : i32
    %c0_i32_0 = arith.constant 0 : i32
    %c0_i32_1 = arith.constant 0 : i32
    return %arg0, %c0_i32, %c0_i32_0 : i32, i32, i32
  }
  func.func @transform_2(%arg0: i32, %arg1: i32) -> (i32, i32, i32) {
    %c0_i32 = arith.constant 0 : i32
    %c1_i32 = arith.constant 1 : i32
    %c0_i32_0 = arith.constant 0 : i32
    return %arg0, %c0_i32, %c1_i32 : i32, i32, i32
  }
  func.func @transform_3(%arg0: i32, %arg1: i32) -> (i32, i32, i32) {
    %c0_i32 = arith.constant 0 : i32
    %c0_i32_0 = arith.constant 0 : i32
    return %arg0, %arg1, %c0_i32 : i32, i32, i32
  }
}

module attributes {stable_mosaic.version = 11 : i64} {
  func.func @_ln_linear_kernel(%arg0: i32, %arg1: i32, %arg2: memref<16x128xbf16, #tpu.memory_space<vmem>>, %arg3: memref<1x128xf32, #tpu.memory_space<vmem>>, %arg4: memref<1x128xf32, #tpu.memory_space<vmem>>, %arg5: memref<128x256xbf16, #tpu.memory_space<vmem>>, %arg6: memref<1x256xf32, #tpu.memory_space<vmem>>, %arg7: memref<16x256xf32, #tpu.memory_space<vmem>>) attributes {dimension_semantics = [#tpu.dimension_semantics<parallel>, #tpu.dimension_semantics<parallel>], iteration_bounds = array<i64: 1, 1>, scalar_prefetch = 0 : i64, scratch_operands = 0 : i64, tpu.core_type = #tpu.core_type<tc>, window_params = [{transform_indices = @transform_0, window_bounds = array<i64: 16, 128>}, {pipeline_mode = #tpu.pipeline_mode<synchronous>, transform_indices = @transform_1, window_bounds = array<i64: 1, 128>}, {pipeline_mode = #tpu.pipeline_mode<synchronous>, transform_indices = @transform_2, window_bounds = array<i64: 1, 128>}, {transform_indices = @transform_3, window_bounds = array<i64: 128, 256>}, {transform_indices = @transform_4, window_bounds = array<i64: 1, 256>}, {transform_indices = @transform_5, window_bounds = array<i64: 16, 256>}]} {
    %c0 = arith.constant 0 : index
    %c0_0 = arith.constant 0 : index
    %0 = vector.load %arg2[%c0, %c0_0] : memref<16x128xbf16, #tpu.memory_space<vmem>>, vector<16x128xbf16>
    %1 = arith.extf %0 : vector<16x128xbf16> to vector<16x128xf32>
    %cst = arith.constant dense<0.000000e+00> : vector<16xf32>
    %2 = vector.multi_reduction <add>, %1, %cst [1] : vector<16x128xf32> to vector<16xf32>
    %3 = vector.shape_cast %2 : vector<16xf32> to vector<16x1xf32>
    %cst_1 = arith.constant 1.280000e+02 : f32
    %4 = vector.broadcast %cst_1 : f32 to vector<16x1xf32>
    %5 = arith.divf %3, %4 : vector<16x1xf32>
    %6 = vector.broadcast %5 : vector<16x1xf32> to vector<16x128xf32>
    %7 = arith.subf %1, %6 : vector<16x128xf32>
    %8 = arith.mulf %7, %7 : vector<16x128xf32>
    %cst_2 = arith.constant dense<0.000000e+00> : vector<16xf32>
    %9 = vector.multi_reduction <add>, %8, %cst_2 [1] : vector<16x128xf32> to vector<16xf32>
    %10 = vector.shape_cast %9 : vector<16xf32> to vector<16x1xf32>
    %cst_3 = arith.constant 1.280000e+02 : f32
    %11 = vector.broadcast %cst_3 : f32 to vector<16x1xf32>
    %12 = arith.divf %10, %11 : vector<16x1xf32>
    %cst_4 = arith.constant 9.99999974E-6 : f32
    %13 = vector.broadcast %cst_4 : f32 to vector<16x1xf32>
    %14 = arith.addf %12, %13 : vector<16x1xf32>
    %15 = math.rsqrt %14 : vector<16x1xf32>
    %16 = vector.broadcast %15 : vector<16x1xf32> to vector<16x128xf32>
    %17 = arith.mulf %7, %16 : vector<16x128xf32>
    %c0_5 = arith.constant 0 : index
    %c0_6 = arith.constant 0 : index
    %18 = vector.load %arg3[%c0_5, %c0_6] : memref<1x128xf32, #tpu.memory_space<vmem>>, vector<1x128xf32>
    %19 = vector.broadcast %18 : vector<1x128xf32> to vector<16x128xf32>
    %20 = arith.mulf %17, %19 : vector<16x128xf32>
    %c0_7 = arith.constant 0 : index
    %c0_8 = arith.constant 0 : index
    %21 = vector.load %arg4[%c0_7, %c0_8] : memref<1x128xf32, #tpu.memory_space<vmem>>, vector<1x128xf32>
    %22 = vector.broadcast %21 : vector<1x128xf32> to vector<16x128xf32>
    %23 = arith.addf %20, %22 : vector<16x128xf32>
    %24 = arith.truncf %23 : vector<16x128xf32> to vector<16x128xbf16>
    %c0_9 = arith.constant 0 : index
    %c0_10 = arith.constant 0 : index
    %25 = vector.load %arg5[%c0_9, %c0_10] : memref<128x256xbf16, #tpu.memory_space<vmem>>, vector<128x256xbf16>
    %cst_11 = arith.constant dense<0.000000e+00> : vector<16x256xf32>
    %26 = tpu.matmul %24, %25, %cst_11 {dimension_numbers = #tpu.dot_dimension_numbers<[1], [0], [0], [1], [0, 0, 1, 1], [], []>} : vector<16x128xbf16>, vector<128x256xbf16>, vector<16x256xf32> -> vector<16x256xf32>
    %c0_12 = arith.constant 0 : index
    %c0_13 = arith.constant 0 : index
    %27 = vector.load %arg6[%c0_12, %c0_13] : memref<1x256xf32, #tpu.memory_space<vmem>>, vector<1x256xf32>
    %28 = vector.broadcast %27 : vector<1x256xf32> to vector<16x256xf32>
    %29 = arith.addf %26, %28 : vector<16x256xf32>
    %c0_14 = arith.constant 0 : index
    %c0_15 = arith.constant 0 : index
    %30 = vector.load %arg7[%c0_14, %c0_15] : memref<16x256xf32, #tpu.memory_space<vmem>>, vector<16x256xf32>
    tpu.vector_store %arg7[%c0_14, %c0_15], %29 {strides = array<i32>} : memref<16x256xf32, #tpu.memory_space<vmem>>, vector<16x256xf32>,
    return
  }
  func.func @transform_0(%arg0: i32, %arg1: i32) -> (i32, i32) {
    %c0_i32 = arith.constant 0 : i32
    %c0_i32_0 = arith.constant 0 : i32
    return %arg0, %c0_i32 : i32, i32
  }
  func.func @transform_1(%arg0: i32, %arg1: i32) -> (i32, i32) {
    %c0_i32 = arith.constant 0 : i32
    %c0_i32_0 = arith.constant 0 : i32
    %c0_i32_1 = arith.constant 0 : i32
    return %c0_i32, %c0_i32_0 : i32, i32
  }
  func.func @transform_2(%arg0: i32, %arg1: i32) -> (i32, i32) {
    %c0_i32 = arith.constant 0 : i32
    %c0_i32_0 = arith.constant 0 : i32
    %c0_i32_1 = arith.constant 0 : i32
    return %c0_i32, %c0_i32_0 : i32, i32
  }
  func.func @transform_3(%arg0: i32, %arg1: i32) -> (i32, i32) {
    %c0_i32 = arith.constant 0 : i32
    %c0_i32_0 = arith.constant 0 : i32
    return %c0_i32, %arg1 : i32, i32
  }
  func.func @transform_4(%arg0: i32, %arg1: i32) -> (i32, i32) {
    %c0_i32 = arith.constant 0 : i32
    %c0_i32_0 = arith.constant 0 : i32
    return %c0_i32, %arg1 : i32, i32
  }
  func.func @transform_5(%arg0: i32, %arg1: i32) -> (i32, i32) {
    %c0_i32 = arith.constant 0 : i32
    return %arg0, %arg1 : i32, i32
  }
}

</mosaic_0001>

<llo_original>
// kernel: transformer_lm_forward.26
$region0: #{transformer_lm_forward.26}
  #allocation0 [shape = 'u32[]', space=smem, size = 0x4, offset = 0x4, fixed_abs, tag = 'smem constant byte address 0x4 - core index']
  #allocation1 [shape = 'u32[144,128]{1,0:T(1,128)}', space=vmem, size = 0x12000, scoped, tag = 'internal scratch']
  #allocation2 [shape = 'f32[16,128]{1,0:T(8,128)}', space=vmem, size = 0x2000, scoped, tag = 'scratch operand']
  %s0 = inlined_call_operand.vmem [shape: bf16[16,128], index: 0, kind: input, shape index: {}]
  %s1 = inlined_call_operand.vmem [shape: bf16[128,384], index: 1, kind: input, shape index: {}]
  %s2 = inlined_call_operand.vmem [shape: f32[1,384], index: 2, kind: input, shape index: {}]
  %s3 = inlined_call_operand.vmem [shape: bf16[16,384], index: 3, kind: output, shape index: {}]
  %s4 = sld [smem:[#allocation0]]
  $region131: #{transformer_lm_forward.26} parent=0
    _
  %s6 = ssub.s32 1, %s4
  %s7 = scalar_select 0, %s6, %s4
  $region1: #{transformer_lm_forward.26} parent=0
    #allocation3 [shape = 'u8[65536]{0}', space=vmem, size = 0x10000, scoped, tag = 'input window, operand 1']
    #allocation4 [shape = 'u8[8192]{0}', space=vmem, size = 0x2000, scoped, tag = 'output window, operand 0']
    loop: start=0, step=1, limit=5
    $region2: #{transformer_lm_forward.26} parent=1 // loop_pre_header
      _
    $region3: #{transformer_lm_forward.26} parent=1 // loop_header
      %s9 = sphi 0, %s13
      %p10 = scmp.ge.s32.totalorder %s9, 5
      %s16 = sphi 0, %s35
      %s17 = sphi 0, %s31
      %s18 = sphi 0, %s27
      %s19 = sphi 0, %s16
      %s20 = sphi 0, %s17
      %s21 = sphi 0, %s18
      %s22 = sphi 0, %s19
      %s23 = sphi 0, %s20
      %s24 = sphi 0, %s21
      %s40 = sphi 0, %s42
      %s43 = sphi 0, %s40
      %s44 = sphi 0, %s43
      %s60 = sphi 0, %s44
      %s68 = sphi 0, %s70
      %s71 = sphi 0, %s68
      %s72 = sphi 0, %s71
      %s88 = sphi 0, %s72
      %s94 = sphi 0, %s96
      %s97 = sphi 0, %s94
      %s98 = sphi 0, %s97
      %s114 = sphi 0, %s98
      %s122 = sphi 0, %s124
      %s125 = sphi 0, %s122
      %s126 = sphi 0, %s125
      %s142 = sphi 0, %s126
    $region4: #{transformer_lm_forward.26} parent=1 // loop_header_branch
      %12 = sbr.rel (%p10) target = $region8
    $region5: #{transformer_lm_forward.26} parent=1 // loop_body
      %s14 = ssub.s32 %s9, 1
      %s15 = ssub.s32 %s9, 2
      %s25 = sadd.s32 1, %s18
      %p26 = scmp.ge.s32.totalorder %s25, 1
      %s27 = scalar_select %p26, 0, %s25
      %s28 = sadd.s32 1, %s17
      %s29 = scalar_select %p26, %s28, %s17
      %p30 = scmp.ge.s32.totalorder %s29, 3
      %s31 = scalar_select %p30, 0, %s29
      %s32 = sadd.s32 1, %s16
      %s33 = scalar_select %p30, %s32, %s16
      %p34 = scmp.ge.s32.totalorder %s33, 1
      %s35 = scalar_select %p34, 0, %s33
      %s36 = ssub.s32 %s16, %s35
      %s37 = ssub.s32 %s18, %s27
      %s38 = sor.u32 %s36, %s37
      %p39 = scmp.eq.s32.totalorder %s38, 0
      %s41 = sadd.s32 %s40, 1
      %s42 = scalar_select %p39, %s40, %s41
      %p45 = pneg %p39
      %p46 = scmp.eq.s32.totalorder %s9, 2
      %p47 = por %p45, %p46
      %p48 = scmp.ne.s32.totalorder %s40, %s43
      %p49 = scmp.eq.s32.totalorder %s9, 0
      %p50 = por %p48, %p49
      %p51 = scmp.ne.s32.totalorder %s40, %s43
      %p52 = scmp.eq.s32.totalorder %s14, 2
      %p53 = por %p51, %p52
      %p54 = scmp.ne.s32.totalorder %s43, %s44
      %p55 = scmp.eq.s32.totalorder %s14, 0
      %p56 = por %p54, %p55
      %p57 = scmp.ne.s32.totalorder %s43, %s44
      %p58 = scmp.eq.s32.totalorder %s15, 2
      %p59 = por %p57, %p58
      %p61 = scmp.ne.s32.totalorder %s44, %s60
      %p62 = scmp.eq.s32.totalorder %s15, 0
      %p63 = por %p61, %p62
      %s64 = ssub.s32 %s18, %s27
      %s65 = ssub.s32 %s17, %s31
      %s66 = sor.u32 %s64, %s65
      %p67 = scmp.eq.s32.totalorder %s66, 0
      %s69 = sadd.s32 %s68, 1
      %s70 = scalar_select %p67, %s68, %s69
      %p73 = pneg %p67
      %p74 = scmp.eq.s32.totalorder %s9, 2
      %p75 = por %p73, %p74
      %p76 = scmp.ne.s32.totalorder %s68, %s71
      %p77 = scmp.eq.s32.totalorder %s9, 0
      %p78 = por %p76, %p77
      %p79 = scmp.ne.s32.totalorder %s68, %s71
      %p80 = scmp.eq.s32.totalorder %s14, 2
      %p81 = por %p79, %p80
      %p82 = scmp.ne.s32.totalorder %s71, %s72
      %p83 = scmp.eq.s32.totalorder %s14, 0
      %p84 = por %p82, %p83
      %p85 = scmp.ne.s32.totalorder %s71, %s72
      %p86 = scmp.eq.s32.totalorder %s15, 2
      %p87 = por %p85, %p86
      %p89 = scmp.ne.s32.totalorder %s72, %s88
      %p90 = scmp.eq.s32.totalorder %s15, 0
      %p91 = por %p89, %p90
      %s92 = ssub.s32 %s17, %s31
      %p93 = scmp.eq.s32.totalorder %s92, 0
      %s95 = sadd.s32 %s94, 1
      %s96 = scalar_select %p93, %s94, %s95
      %p99 = pneg %p93
      %p100 = scmp.eq.s32.totalorder %s9, 2
      %p101 = por %p99, %p100
      %p102 = scmp.ne.s32.totalorder %s94, %s97
      %p103 = scmp.eq.s32.totalorder %s9, 0
      %p104 = por %p102, %p103
      %p105 = scmp.ne.s32.totalorder %s94, %s97
      %p106 = scmp.eq.s32.totalorder %s14, 2
      %p107 = por %p105, %p106
      %p108 = scmp.ne.s32.totalorder %s97, %s98
      %p109 = scmp.eq.s32.totalorder %s14, 0
      %p110 = por %p108, %p109
      %p111 = scmp.ne.s32.totalorder %s97, %s98
      %p112 = scmp.eq.s32.totalorder %s15, 2
      %p113 = por %p111, %p112
      %p115 = scmp.ne.s32.totalorder %s98, %s114
      %p116 = scmp.eq.s32.totalorder %s15, 0
      %p117 = por %p115, %p116
      %s118 = ssub.s32 %s16, %s35
      %s119 = ssub.s32 %s17, %s31
      %s120 = sor.u32 %s118, %s119
      %p121 = scmp.eq.s32.totalorder %s120, 0
      %s123 = sadd.s32 %s122, 1
      %s124 = scalar_select %p121, %s122, %s123
      %p127 = pneg %p121
      %p128 = scmp.eq.s32.totalorder %s9, 2
      %p129 = por %p127, %p128
      %p130 = scmp.ne.s32.totalorder %s122, %s125
      %p131 = scmp.eq.s32.totalorder %s9, 0
      %p132 = por %p130, %p131
      %p133 = scmp.ne.s32.totalorder %s122, %s125
      %p134 = scmp.eq.s32.totalorder %s14, 2
      %p135 = por %p133, %p134
      %p136 = scmp.ne.s32.totalorder %s125, %s126
      %p137 = scmp.eq.s32.totalorder %s14, 0
      %p138 = por %p136, %p137
      %p139 = scmp.ne.s32.totalorder %s125, %s126
      %p140 = scmp.eq.s32.totalorder %s15, 2
      %p141 = por %p139, %p140
      %p143 = scmp.ne.s32.totalorder %s126, %s142
      %p144 = scmp.eq.s32.totalorder %s15, 0
      %p145 = por %p143, %p144
      %p146 = scmp.le.s32.totalorder 1, %s9
      %p147 = scmp.lt.s32.totalorder %s9, 4
      %p148 = pnand %p146, %p147
      %p149 = pneg %p148
      // Predicated region
      $region9: #{transformer_lm_forward.26} parent=5 // pred_check
        _
      $region10: #{transformer_lm_forward.26} parent=5 // pred_check_branch
        %151 = sbr.rel (%p148) target = $region12
      $region11: #{transformer_lm_forward.26} parent=5 // pred_region
        %s152 = ssub.s32 %s9, 1
        // Predicated region
        $region13: #{transformer_lm_forward.26} parent=11 // pred_check
          %p153 = pneg %p56
        $region14: #{transformer_lm_forward.26} parent=11 // pred_check_branch
          %155 = sbr.rel (%p153) target = $region16
        $region15: #{transformer_lm_forward.26} parent=11 // pred_region
          %s156 = smul.u32 2, %s19
          %p157 = scmp.lt.s32.totalorder %s156, 1
          %s158 = scalar_select %p157, %s156, 1
          %p159 = scmp.lt.s32.totalorder %s21, 0
          %s160 = scalar_select %p159, %s21, 0
          %s161 = sadd.s32 %s160, %s158
          %s162 = smul.addr %s161, 4
          %s163 = scalar_lea.vmem %s0, %s162
          %s164 = smul.u32 2, %s19
        $region16: #{transformer_lm_forward.26} parent=11 // pred_fallthru
          _
      $region12: #{transformer_lm_forward.26} parent=5 // pred_fallthru
        _
      %p165 = scmp.lt.s32.totalorder %s9, 3
      // Predicated region
      $region17: #{transformer_lm_forward.26} parent=5 // pred_check
        %p166 = pneg %p165
      $region18: #{transformer_lm_forward.26} parent=5 // pred_check_branch
        %168 = sbr.rel (%p166) target = $region20
      $region19: #{transformer_lm_forward.26} parent=5 // pred_region
        // Predicated region
        $region21: #{transformer_lm_forward.26} parent=19 // pred_check
          %p169 = pneg %p78
        $region22: #{transformer_lm_forward.26} parent=19 // pred_check_branch
          %171 = sbr.rel (%p169) target = $region24
        $region23: #{transformer_lm_forward.26} parent=19 // pred_region
          %s172 = sand.u32 %s68, 1
          %s173 = sand.u32 %s68, 1
          %s174 = smul.addr %s173, 64
          %s175 = scalar_lea.vmem [#allocation3], %s174
          %s176 = smul.u32 16, %s18
          %s177 = smul.addr %s176, 3
          %s178 = sadd.s32 %s17, %s177
          %s179 = smul.addr %s178, 4
          %s180 = scalar_lea.vmem %s1, %s179
          // Predicated region
          $region25: #{transformer_lm_forward.26} parent=23 // pred_check
            _
          $region26: #{transformer_lm_forward.26} parent=23 // pred_check_branch
            %182 = sbr.rel (0) target = $region28
          $region27: #{transformer_lm_forward.26} parent=23 // pred_region
            // Predicated region
            $region29: #{transformer_lm_forward.26} parent=27 // pred_check
              _
            $region30: #{transformer_lm_forward.26} parent=27 // pred_check_branch
              %184 = sbr.rel target = $region32
            $region31: #{transformer_lm_forward.26} parent=27 // pred_region
              // Predicated region
              $region44: #{transformer_lm_forward.26} parent=31 // pred_check
                _
              $region45: #{transformer_lm_forward.26} parent=31 // pred_check_branch
                %230 = sbr.rel (0) target = $region47
              $region46: #{transformer_lm_forward.26} parent=31 // pred_region
                loop: start=0, step=1, limit=1
                $region48: #{transformer_lm_forward.26} parent=46 // loop_pre_header
                  _
                $region49: #{transformer_lm_forward.26} parent=46 // loop_header
                  %s232 = sphi 0, %s236
                  %p233 = scmp.ge.s32.totalorder %s232, 1
                  %s237 = sphi %s180, %s180
                  %s238 = sphi %s175, %s175
                $region50: #{transformer_lm_forward.26} parent=46 // loop_header_branch
                  %235 = sbr.rel (%p233) target = $region54
                $region51: #{transformer_lm_forward.26} parent=46 // loop_body
                  _
                $region52: #{transformer_lm_forward.26} parent=46 // loop_footer
                  %s236 = sadd.s32 1, %s232
                $region53: #{transformer_lm_forward.26} parent=46 // loop_footer_branch
                  %231 = sbr.rel target = $region49
                $region54: #{transformer_lm_forward.26} parent=46 // loop_exit
                  _
                %s240 = ssub.s32 16, 1
                loop: start=0, step=1, limit=1
                $region55: #{transformer_lm_forward.26} parent=46 // loop_pre_header
                  _
                $region56: #{transformer_lm_forward.26} parent=46 // loop_header
                  %s242 = sphi 0, %s246
                  %p243 = scmp.ge.s32.totalorder %s242, 1
                  %s247 = sphi %s180, %s180
                  %s248 = sphi %s175, %s175
                $region57: #{transformer_lm_forward.26} parent=46 // loop_header_branch
                  %245 = sbr.rel (%p243) target = $region61
                $region58: #{transformer_lm_forward.26} parent=46 // loop_body
                  %v249 = vld [vmem:[%s247] sm:%s240]
                  %250 = vst [vmem:[%s248] sm:%s240] %v249
                  %v251 = vld [vmem:[%s247 + $0xc] sm:%s240]
                  %252 = vst [vmem:[%s248 + $0x4] sm:%s240] %v251
                  %v253 = vld [vmem:[%s247 + $0x18] sm:%s240]
                  %254 = vst [vmem:[%s248 + $0x8] sm:%s240] %v253
                  %v255 = vld [vmem:[%s247 + $0x24] sm:%s240]
                  %256 = vst [vmem:[%s248 + $0xc] sm:%s240] %v255
                  %v257 = vld [vmem:[%s247 + $0x30] sm:%s240]
                  %258 = vst [vmem:[%s248 + $0x10] sm:%s240] %v257
                  %v259 = vld [vmem:[%s247 + $0x3c] sm:%s240]
                  %260 = vst [vmem:[%s248 + $0x14] sm:%s240] %v259
                  %v261 = vld [vmem:[%s247 + $0x48] sm:%s240]
                  %262 = vst [vmem:[%s248 + $0x18] sm:%s240] %v261
                  %v263 = vld [vmem:[%s247 + $0x54] sm:%s240]
                  %264 = vst [vmem:[%s248 + $0x1c] sm:%s240] %v263
                  %v265 = vld [vmem:[%s247 + $0x60] sm:%s240]
                  %266 = vst [vmem:[%s248 + $0x20] sm:%s240] %v265
                  %v267 = vld [vmem:[%s247 + $0x6c] sm:%s240]
                  %268 = vst [vmem:[%s248 + $0x24] sm:%s240] %v267
                  %v269 = vld [vmem:[%s247 + $0x78] sm:%s240]
                  %270 = vst [vmem:[%s248 + $0x28] sm:%s240] %v269
                  %v271 = vld [vmem:[%s247 + $0x84] sm:%s240]
                  %272 = vst [vmem:[%s248 + $0x2c] sm:%s240] %v271
                  %v273 = vld [vmem:[%s247 + $0x90] sm:%s240]
                  %274 = vst [vmem:[%s248 + $0x30] sm:%s240] %v273
                  %v275 = vld [vmem:[%s247 + $0x9c] sm:%s240]
                  %276 = vst [vmem:[%s248 + $0x34] sm:%s240] %v275
                  %v277 = vld [vmem:[%s247 + $0xa8] sm:%s240]
                  %278 = vst [vmem:[%s248 + $0x38] sm:%s240] %v277
                  %v279 = vld [vmem:[%s247 + $0xb4] sm:%s240]
                  %280 = vst [vmem:[%s248 + $0x3c] sm:%s240] %v279
                $region59: #{transformer_lm_forward.26} parent=46 // loop_footer
                  %s246 = sadd.s32 1, %s242
                $region60: #{transformer_lm_forward.26} parent=46 // loop_footer_branch
                  %241 = sbr.rel target = $region56
                $region61: #{transformer_lm_forward.26} parent=46 // loop_exit
                  _
              $region47: #{transformer_lm_forward.26} parent=31 // pred_fallthru
                _
            $region32: #{transformer_lm_forward.26} parent=27 // pred_fallthru
              _
            // Predicated region
            $region33: #{transformer_lm_forward.26} parent=27 // pred_check
              _
            $region34: #{transformer_lm_forward.26} parent=27 // pred_check_branch
              %186 = sbr.rel (0) target = $region36
            $region35: #{transformer_lm_forward.26} parent=27 // pred_region
              %s188 = ssub.s32 16, 1
              loop: start=0, step=1, limit=1
              $region37: #{transformer_lm_forward.26} parent=35 // loop_pre_header
                _
              $region38: #{transformer_lm_forward.26} parent=35 // loop_header
                %s190 = sphi 0, %s194
                %p191 = scmp.ge.s32.totalorder %s190, 1
                %s195 = sphi %s180, %s180
                %s196 = sphi %s175, %s175
              $region39: #{transformer_lm_forward.26} parent=35 // loop_header_branch
                %193 = sbr.rel (%p191) target = $region43
              $region40: #{transformer_lm_forward.26} parent=35 // loop_body
                %v197 = vld [vmem:[%s195] sm:%s188]
                %198 = vst [vmem:[%s196] sm:%s188] %v197
                %v199 = vld [vmem:[%s195 + $0xc] sm:%s188]
                %200 = vst [vmem:[%s196 + $0x4] sm:%s188] %v199
                %v201 = vld [vmem:[%s195 + $0x18] sm:%s188]
                %202 = vst [vmem:[%s196 + $0x8] sm:%s188] %v201
                %v203 = vld [vmem:[%s195 + $0x24] sm:%s188]
                %204 = vst [vmem:[%s196 + $0xc] sm:%s188] %v203
                %v205 = vld [vmem:[%s195 + $0x30] sm:%s188]
                %206 = vst [vmem:[%s196 + $0x10] sm:%s188] %v205
                %v207 = vld [vmem:[%s195 + $0x3c] sm:%s188]
                %208 = vst [vmem:[%s196 + $0x14] sm:%s188] %v207
                %v209 = vld [vmem:[%s195 + $0x48] sm:%s188]
                %210 = vst [vmem:[%s196 + $0x18] sm:%s188] %v209
                %v211 = vld [vmem:[%s195 + $0x54] sm:%s188]
                %212 = vst [vmem:[%s196 + $0x1c] sm:%s188] %v211
                %v213 = vld [vmem:[%s195 + $0x60] sm:%s188]
                %214 = vst [vmem:[%s196 + $0x20] sm:%s188] %v213
                %v215 = vld [vmem:[%s195 + $0x6c] sm:%s188]
                %216 = vst [vmem:[%s196 + $0x24] sm:%s188] %v215
                %v217 = vld [vmem:[%s195 + $0x78] sm:%s188]
                %218 = vst [vmem:[%s196 + $0x28] sm:%s188] %v217
                %v219 = vld [vmem:[%s195 + $0x84] sm:%s188]
                %220 = vst [vmem:[%s196 + $0x2c] sm:%s188] %v219
                %v221 = vld [vmem:[%s195 + $0x90] sm:%s188]
                %222 = vst [vmem:[%s196 + $0x30] sm:%s188] %v221
                %v223 = vld [vmem:[%s195 + $0x9c] sm:%s188]
                %224 = vst [vmem:[%s196 + $0x34] sm:%s188] %v223
                %v225 = vld [vmem:[%s195 + $0xa8] sm:%s188]
                %226 = vst [vmem:[%s196 + $0x38] sm:%s188] %v225
                %v227 = vld [vmem:[%s195 + $0xb4] sm:%s188]
                %228 = vst [vmem:[%s196 + $0x3c] sm:%s188] %v227
              $region41: #{transformer_lm_forward.26} parent=35 // loop_footer
                %s194 = sadd.s32 1, %s190
              $region42: #{transformer_lm_forward.26} parent=35 // loop_footer_branch
                %189 = sbr.rel target = $region38
              $region43: #{transformer_lm_forward.26} parent=35 // loop_exit
                _
            $region36: #{transformer_lm_forward.26} parent=27 // pred_fallthru
              _
          $region28: #{transformer_lm_forward.26} parent=23 // pred_fallthru
            _
          %281 = vnop
        $region24: #{transformer_lm_forward.26} parent=19 // pred_fallthru
          _
        // Predicated region
        $region62: #{transformer_lm_forward.26} parent=19 // pred_check
          %p282 = pneg %p104
        $region63: #{transformer_lm_forward.26} parent=19 // pred_check_branch
          %284 = sbr.rel (%p282) target = $region65
        $region64: #{transformer_lm_forward.26} parent=19 // pred_region
          %p285 = scmp.lt.s32.totalorder %s17, 2
          %s286 = scalar_select %p285, %s17, 2
          %s287 = scalar_lea.vmem %s2, %s286
        $region65: #{transformer_lm_forward.26} parent=19 // pred_fallthru
          _
      $region20: #{transformer_lm_forward.26} parent=5 // pred_fallthru
        _
      %p288 = scmp.le.s32.totalorder 1, %s9
      %p289 = scmp.lt.s32.totalorder %s9, 4
      %p290 = pnand %p288, %p289
      %p291 = pneg %p290
      // Predicated region
      $region66: #{transformer_lm_forward.26} parent=5 // pred_check
        _
      $region67: #{transformer_lm_forward.26} parent=5 // pred_check_branch
        %293 = sbr.rel (%p290) target = $region69
      $region68: #{transformer_lm_forward.26} parent=5 // pred_region
        %s294 = ssub.s32 %s9, 1
        %s295 = sand.u32 %s71, 1
        %s296 = sand.u32 %s71, 1
        %s297 = smul.addr %s296, 64
        %s298 = scalar_lea.vmem [#allocation3], %s297
        // Predicated region
        $region70: #{transformer_lm_forward.26} parent=68 // pred_check
          %p299 = pneg %p84
        $region71: #{transformer_lm_forward.26} parent=68 // pred_check_branch
          %301 = sbr.rel (%p299) target = $region73
        $region72: #{transformer_lm_forward.26} parent=68 // pred_region
          _
        $region73: #{transformer_lm_forward.26} parent=68 // pred_fallthru
          _
        %s302 = smul.u32 2, %s19
        %p303 = scmp.lt.s32.totalorder %s302, 1
        %s304 = scalar_select %p303, %s302, 1
        %p305 = scmp.lt.s32.totalorder %s21, 0
        %s306 = scalar_select %p305, %s21, 0
        %s307 = sadd.s32 %s306, %s304
        %s308 = smul.addr %s307, 4
        %s309 = scalar_lea.vmem %s0, %s308
        %p310 = pneg %p56
        %p311 = pneg %p53
        %s312 = sand.u32 %s71, 1
        %s313 = sand.u32 %s71, 1
        %s314 = smul.addr %s313, 64
        %s315 = scalar_lea.vmem [#allocation3], %s314
        %p316 = pneg %p84
        %p317 = pneg %p81
        %p318 = scmp.lt.s32.totalorder %s20, 2
        %s319 = scalar_select %p318, %s20, 2
        %s320 = scalar_lea.vmem %s2, %s319
        %p321 = pneg %p110
        %p322 = pneg %p107
        %p323 = pneg %p138
        %p324 = pneg %p135
        %s325 = sand.u32 %s125, 1
        %s326 = sand.u32 %s125, 1
        %s327 = smul.addr %s326, 8
        %s328 = scalar_lea.vmem [#allocation4], %s327
        %s329 = smul.u32 2, %s19
        %p330 = scmp.lt.s32.totalorder %s329, 1
        %s331 = scalar_select %p330, %s329, 1
        %p332 = scmp.lt.s32.totalorder %s21, 0
        %s333 = scalar_select %p332, %s21, 0
        %s334 = sadd.s32 %s333, %s331
        %s335 = smul.addr %s334, 4
        %s336 = scalar_lea.vmem %s0, %s335
        %s337 = smul.u32 2, %s19
        %s338 = smul.u32 16, %s21
        %p339 = scmp.lt.s32.totalorder %s20, 2
        %s340 = scalar_select %p339, %s20, 2
        %s341 = scalar_lea.vmem %s2, %s340
        %s342 = smul.u32 2, %s19
        %p344 = scmp.eq.s32.totalorder %s21, 0
        // Predicated region
        $region74: #{transformer_lm_forward.26} parent=68 // pred_check
          %p345 = pneg %p344
        $region75: #{transformer_lm_forward.26} parent=68 // pred_check_branch
          %347 = sbr.rel (%p345) target = $region77
        $region76: #{transformer_lm_forward.26} parent=68 // pred_region
          %348 = vst [vmem:[#allocation2] sm:$0xff] 0.0
          %349 = vst [vmem:[#allocation2 + $0x8] sm:$0xff] 0.0
        $region77: #{transformer_lm_forward.26} parent=68 // pred_fallthru
          _
        %v350 = vld [vmem:[#allocation2] sm:$0xff]
        %v351 = vld [vmem:[#allocation2 + $0x8] sm:$0xff]
        %v352 = vld [vmem:[%s336] sm:$0xf]
        %v353 = vld [vmem:[%s336 + $0x4] sm:$0xf]
        %v354 = vld [vmem:[%s298] sm:$0xf]
        %v355 = vld [vmem:[%s298 + $0x4] sm:$0xf]
        %v356 = vld [vmem:[%s298 + $0x8] sm:$0xf]
        %v357 = vld [vmem:[%s298 + $0xc] sm:$0xf]
        %v358 = vld [vmem:[%s298 + $0x10] sm:$0xf]
        %v359 = vld [vmem:[%s298 + $0x14] sm:$0xf]
        %v360 = vld [vmem:[%s298 + $0x18] sm:$0xf]
        %v361 = vld [vmem:[%s298 + $0x1c] sm:$0xf]
        %v362 = vld [vmem:[%s298 + $0x20] sm:$0xf]
        %v363 = vld [vmem:[%s298 + $0x24] sm:$0xf]
        %v364 = vld [vmem:[%s298 + $0x28] sm:$0xf]
        %v365 = vld [vmem:[%s298 + $0x2c] sm:$0xf]
        %v366 = vld [vmem:[%s298 + $0x30] sm:$0xf]
        %v367 = vld [vmem:[%s298 + $0x34] sm:$0xf]
        %v368 = vld [vmem:[%s298 + $0x38] sm:$0xf]
        %v369 = vld [vmem:[%s298 + $0x3c] sm:$0xf]
        %v372 = vunpack.c.l.b16 %v352
        %v373 = vunpack.c.l.b16 %v353
        %v374 = vpack.c.b16 %v373, %v372
        %v392 = vunpack.c.l.b16 %v354
        %v393 = vunpack.c.l.b16 %v355
        %v394 = vunpack.c.l.b16 %v356
        %v395 = vunpack.c.l.b16 %v357
        %v396 = vunpack.c.l.b16 %v358
        %v397 = vunpack.c.l.b16 %v359
        %v398 = vunpack.c.l.b16 %v360
        %v399 = vunpack.c.l.b16 %v361
        %v400 = vunpack.c.l.b16 %v362
        %v401 = vunpack.c.l.b16 %v363
        %v402 = vunpack.c.l.b16 %v364
        %v403 = vunpack.c.l.b16 %v365
        %v404 = vunpack.c.l.b16 %v366
        %v405 = vunpack.c.l.b16 %v367
        %v406 = vunpack.c.l.b16 %v368
        %v407 = vunpack.c.l.b16 %v369
        %v408 = vpack.c.b16 %v393, %v392
        %v409 = vpack.c.b16 %v395, %v394
        %v410 = vpack.c.b16 %v397, %v396
        %v411 = vpack.c.b16 %v399, %v398
        %v412 = vpack.c.b16 %v401, %v400
        %v413 = vpack.c.b16 %v403, %v402
        %v414 = vpack.c.b16 %v405, %v404
        %v415 = vpack.c.b16 %v407, %v406
        %424 = vmatprep.subr.bf16.mxu0 0
        %425 = vmatpush1.bf16.msra.mxu0 %v415
        %426 = vmatprep.subr.bf16.mxu0 0
        %427 = vmatpush1.bf16.msra.mxu0 %v414
        %428 = vmatprep.subr.bf16.mxu0 0
        %429 = vmatpush1.bf16.msra.mxu0 %v413
        %430 = vmatprep.subr.bf16.mxu0 0
        %431 = vmatpush1.bf16.msra.mxu0 %v412
        %432 = vmatprep.subr.bf16.mxu0 0
        %433 = vmatpush1.bf16.msra.mxu0 %v411
        %434 = vmatprep.subr.bf16.mxu0 0
        %435 = vmatpush1.bf16.msra.mxu0 %v410
        %436 = vmatprep.subr.bf16.mxu0 0
        %437 = vmatpush1.bf16.msra.mxu0 %v409
        %438 = vmatprep.subr.bf16.mxu0 0
        %439 = vmatpush1.bf16.msra.mxu0 %v408
        %440 = vmatprep.subr.bf16.mxu0 0
        %441 = vmatpush2.bf16.msra.mxu0 0
        %442 = vmatprep.subr.bf16.mxu0 0
        %443 = vmatpush2.bf16.msra.mxu0 0
        %444 = vmatprep.subr.bf16.mxu0 0
        %445 = vmatpush2.bf16.msra.mxu0 0
        %446 = vmatprep.subr.bf16.mxu0 0
        %447 = vmatpush2.bf16.msra.mxu0 0
        %448 = vmatprep.subr.bf16.mxu0 0
        %449 = vmatpush2.bf16.msra.mxu0 0
        %450 = vmatprep.subr.bf16.mxu0 0
        %451 = vmatpush2.bf16.msra.mxu0 0
        %452 = vmatprep.subr.bf16.mxu0 0
        %453 = vmatpush2.bf16.msra.mxu0 0
        %454 = vmatprep.subr.bf16.mxu0 0
        %455 = vmatpush2.bf16.msra.mxu0 0
        %456 = vmatprep.mubr.bf16.mxu0 0
        %457 = vmatmul.mubr.bf16.gmra.mxu0 %v374
        %v458 = vpop.f32.mrf.mxu0
        %v459 = vadd.f32 0.0, %v458
        %v460 = vpop.f32.mrf.mxu0
        %v461 = vpop.f32.mrf.mxu0
        %v462 = vadd.f32 0.0, %v461
        %v463 = vpop.f32.mrf.mxu0
        %464 = vdwg.mxu0
        %v465 = vadd.f32 %v350, %v459
        %v466 = vadd.f32 %v351, %v462
        %467 = vst [vmem:[#allocation2] sm:$0xff] %v465
        %468 = vst [vmem:[#allocation2 + $0x8] sm:$0xff] %v466
        // Predicated region
        $region78: #{transformer_lm_forward.26} parent=68 // pred_check
          %p469 = pneg %p344
        $region79: #{transformer_lm_forward.26} parent=68 // pred_check_branch
          %471 = sbr.rel (%p469) target = $region81
        $region80: #{transformer_lm_forward.26} parent=68 // pred_region
          %v472 = vld [vmem:[#allocation2] sm:$0xff]
          %v473 = vld [vmem:[#allocation2 + $0x8] sm:$0xff]
          %v474 = vld [vmem:[%s341] sm:$0x1]
          %v476 = vlaneseq
          %v477 = vshrl.u32 %v476, 7
          %v478 = vsub.s32 0, %v477
          %v479 = vrot.slane %v474, %v478
          %v481 = vadd.f32 %v472, %v479
          %v482 = vadd.f32 %v473, %v479
          %v483 = vpack.c.bf16 %v482, %v481
          %v485 = vunpack.c.l.b16 %v483
          %v486 = vunpack.c.h.b16 %v483
          %v487 = vpack.c.b16 %v485, %v485
          %v488 = vpack.c.b16 %v486, %v486
          %491 = vst [vmem:[%s328] sm:$0xf] %v487
          %492 = vst [vmem:[%s328 + $0x4] sm:$0xf] %v488
        $region81: #{transformer_lm_forward.26} parent=68 // pred_fallthru
          _
        %s493 = sand.u32 %s125, 1
        %s494 = sand.u32 %s125, 1
        %s495 = smul.addr %s494, 8
        %s496 = scalar_lea.vmem [#allocation4], %s495
        // Predicated region
        $region82: #{transformer_lm_forward.26} parent=68 // pred_check
          %p497 = pneg %p135
        $region83: #{transformer_lm_forward.26} parent=68 // pred_check_branch
          %499 = sbr.rel (%p497) target = $region85
        $region84: #{transformer_lm_forward.26} parent=68 // pred_region
          %s500 = smul.u32 2, %s19
          %s501 = smul.addr %s500, 3
          %s502 = sadd.s32 %s20, %s501
          %s503 = smul.addr %s502, 4
          %s504 = scalar_lea.vmem %s3, %s503
          // Predicated region
          $region86: #{transformer_lm_forward.26} parent=84 // pred_check
            _
          $region87: #{transformer_lm_forward.26} parent=84 // pred_check_branch
            %506 = sbr.rel (0) target = $region89
          $region88: #{transformer_lm_forward.26} parent=84 // pred_region
            // Predicated region
            $region90: #{transformer_lm_forward.26} parent=88 // pred_check
              _
            $region91: #{transformer_lm_forward.26} parent=88 // pred_check_branch
              %508 = sbr.rel target = $region93
            $region92: #{transformer_lm_forward.26} parent=88 // pred_region
              // Predicated region
              $region105: #{transformer_lm_forward.26} parent=92 // pred_check
                _
              $region106: #{transformer_lm_forward.26} parent=92 // pred_check_branch
                %526 = sbr.rel (0) target = $region108
              $region107: #{transformer_lm_forward.26} parent=92 // pred_region
                loop: start=0, step=1, limit=1
                $region109: #{transformer_lm_forward.26} parent=107 // loop_pre_header
                  _
                $region110: #{transformer_lm_forward.26} parent=107 // loop_header
                  %s528 = sphi 0, %s532
                  %p529 = scmp.ge.s32.totalorder %s528, 1
                  %s533 = sphi %s496, %s496
                  %s534 = sphi %s504, %s504
                $region111: #{transformer_lm_forward.26} parent=107 // loop_header_branch
                  %531 = sbr.rel (%p529) target = $region115
                $region112: #{transformer_lm_forward.26} parent=107 // loop_body
                  _
                $region113: #{transformer_lm_forward.26} parent=107 // loop_footer
                  %s532 = sadd.s32 1, %s528
                $region114: #{transformer_lm_forward.26} parent=107 // loop_footer_branch
                  %527 = sbr.rel target = $region110
                $region115: #{transformer_lm_forward.26} parent=107 // loop_exit
                  _
                %s536 = ssub.s32 16, 1
                loop: start=0, step=1, limit=1
                $region116: #{transformer_lm_forward.26} parent=107 // loop_pre_header
                  _
                $region117: #{transformer_lm_forward.26} parent=107 // loop_header
                  %s538 = sphi 0, %s542
                  %p539 = scmp.ge.s32.totalorder %s538, 1
                  %s543 = sphi %s496, %s496
                  %s544 = sphi %s504, %s504
                $region118: #{transformer_lm_forward.26} parent=107 // loop_header_branch
                  %541 = sbr.rel (%p539) target = $region122
                $region119: #{transformer_lm_forward.26} parent=107 // loop_body
                  %v545 = vld [vmem:[%s543] sm:%s536]
                  %546 = vst [vmem:[%s544] sm:%s536] %v545
                  %v547 = vld [vmem:[%s543 + $0x4] sm:%s536]
                  %548 = vst [vmem:[%s544 + $0xc] sm:%s536] %v547
                $region120: #{transformer_lm_forward.26} parent=107 // loop_footer
                  %s542 = sadd.s32 1, %s538
                $region121: #{transformer_lm_forward.26} parent=107 // loop_footer_branch
                  %537 = sbr.rel target = $region117
                $region122: #{transformer_lm_forward.26} parent=107 // loop_exit
                  _
              $region108: #{transformer_lm_forward.26} parent=92 // pred_fallthru
                _
            $region93: #{transformer_lm_forward.26} parent=88 // pred_fallthru
              _
            // Predicated region
            $region94: #{transformer_lm_forward.26} parent=88 // pred_check
              _
            $region95: #{transformer_lm_forward.26} parent=88 // pred_check_branch
              %510 = sbr.rel (0) target = $region97
            $region96: #{transformer_lm_forward.26} parent=88 // pred_region
              %s512 = ssub.s32 16, 1
              loop: start=0, step=1, limit=1
              $region98: #{transformer_lm_forward.26} parent=96 // loop_pre_header
                _
              $region99: #{transformer_lm_forward.26} parent=96 // loop_header
                %s514 = sphi 0, %s518
                %p515 = scmp.ge.s32.totalorder %s514, 1
                %s519 = sphi %s496, %s496
                %s520 = sphi %s504, %s504
              $region100: #{transformer_lm_forward.26} parent=96 // loop_header_branch
                %517 = sbr.rel (%p515) target = $region104
              $region101: #{transformer_lm_forward.26} parent=96 // loop_body
                %v521 = vld [vmem:[%s519] sm:%s512]
                %522 = vst [vmem:[%s520] sm:%s512] %v521
                %v523 = vld [vmem:[%s519 + $0x4] sm:%s512]
                %524 = vst [vmem:[%s520 + $0xc] sm:%s512] %v523
              $region102: #{transformer_lm_forward.26} parent=96 // loop_footer
                %s518 = sadd.s32 1, %s514
              $region103: #{transformer_lm_forward.26} parent=96 // loop_footer_branch
                %513 = sbr.rel target = $region99
              $region104: #{transformer_lm_forward.26} parent=96 // loop_exit
                _
            $region97: #{transformer_lm_forward.26} parent=88 // pred_fallthru
              _
          $region89: #{transformer_lm_forward.26} parent=84 // pred_fallthru
            _
          %549 = vnop
        $region85: #{transformer_lm_forward.26} parent=68 // pred_fallthru
          _
      $region69: #{transformer_lm_forward.26} parent=5 // pred_fallthru
        _
      %p550 = scmp.le.s32.totalorder 2, %s9
      // Predicated region
      $region123: #{transformer_lm_forward.26} parent=5 // pred_check
        %p551 = pneg %p550
      $region124: #{transformer_lm_forward.26} parent=5 // pred_check_branch
        %553 = sbr.rel (%p551) target = $region126
      $region125: #{transformer_lm_forward.26} parent=5 // pred_region
        %s554 = ssub.s32 %s9, 2
        // Predicated region
        $region127: #{transformer_lm_forward.26} parent=125 // pred_check
          %p555 = pneg %p141
        $region128: #{transformer_lm_forward.26} parent=125 // pred_check_branch
          %557 = sbr.rel (%p555) target = $region130
        $region129: #{transformer_lm_forward.26} parent=125 // pred_region
          %s558 = sand.u32 %s126, 1
          %s559 = sand.u32 %s126, 1
          %s560 = smul.addr %s559, 8
          %s561 = scalar_lea.vmem [#allocation4], %s560
        $region130: #{transformer_lm_forward.26} parent=125 // pred_fallthru
          _
      $region126: #{transformer_lm_forward.26} parent=5 // pred_fallthru
        _
    $region6: #{transformer_lm_forward.26} parent=1 // loop_footer
      %s13 = sadd.s32 1, %s9
    $region7: #{transformer_lm_forward.26} parent=1 // loop_footer_branch
      %8 = sbr.rel target = $region3
    $region8: #{transformer_lm_forward.26} parent=1 // loop_exit
      _

// kernel: transformer_lm_forward.28
$region0: #{transformer_lm_forward.28}
  #allocation0 [shape = 'u32[]', space=smem, size = 0x4, offset = 0x4, fixed_abs, tag = 'smem constant byte address 0x4 - core index']
  #allocation1 [shape = 'u32[144,128]{1,0:T(1,128)}', space=vmem, size = 0x12000, scoped, tag = 'internal scratch']
  #allocation2 [shape = 'f32[16,128]{1,0:T(8,128)}', space=vmem, size = 0x2000, scoped, tag = 'scratch operand']
  %s0 = inlined_call_operand.vmem [shape: bf16[16,128], index: 0, kind: input, shape index: {}]
  %s1 = inlined_call_operand.vmem [shape: bf16[128,128], index: 1, kind: input, shape index: {}]
  %s2 = inlined_call_operand.vmem [shape: f32[1,128], index: 2, kind: input, shape index: {}]
  %s3 = inlined_call_operand.vmem [shape: bf16[16,128], index: 3, kind: input, shape index: {}]
  %s4 = inlined_call_operand.vmem [shape: f32[1,128], index: 4, kind: input, shape index: {}]
  %s5 = inlined_call_operand.vmem [shape: f32[1,128], index: 5, kind: input, shape index: {}]
  %s6 = inlined_call_operand.vmem [shape: bf16[16,128], index: 6, kind: output, shape index: {}]
  %s7 = sld [smem:[#allocation0]]
  $region42: #{transformer_lm_forward.28} parent=0
    _
  %s9 = ssub.s32 1, %s7
  %s10 = scalar_select 0, %s9, %s7
  // Predicated region
  $region2: #{transformer_lm_forward.28} parent=0 // pred_check
    _
  $region3: #{transformer_lm_forward.28} parent=0 // pred_check_branch
    %12 = sbr.rel (0) target = $region5
  $region4: #{transformer_lm_forward.28} parent=0 // pred_region
    _
  $region5: #{transformer_lm_forward.28} parent=0 // pred_fallthru
    _
  // Predicated region
  $region6: #{transformer_lm_forward.28} parent=0 // pred_check
    _
  $region7: #{transformer_lm_forward.28} parent=0 // pred_check_branch
    %14 = sbr.rel (0) target = $region9
  $region8: #{transformer_lm_forward.28} parent=0 // pred_region
    _
  $region9: #{transformer_lm_forward.28} parent=0 // pred_fallthru
    _
  // Predicated region
  $region10: #{transformer_lm_forward.28} parent=0 // pred_check
    _
  $region11: #{transformer_lm_forward.28} parent=0 // pred_check_branch
    %16 = sbr.rel (0) target = $region13
  $region12: #{transformer_lm_forward.28} parent=0 // pred_region
    _
  $region13: #{transformer_lm_forward.28} parent=0 // pred_fallthru
    _
  // Predicated region
  $region14: #{transformer_lm_forward.28} parent=0 // pred_check
    _
  $region15: #{transformer_lm_forward.28} parent=0 // pred_check_branch
    %18 = sbr.rel (0) target = $region17
  $region16: #{transformer_lm_forward.28} parent=0 // pred_region
    _
  $region17: #{transformer_lm_forward.28} parent=0 // pred_fallthru
    _
  // Predicated region
  $region18: #{transformer_lm_forward.28} parent=0 // pred_check
    _
  $region19: #{transformer_lm_forward.28} parent=0 // pred_check_branch
    %20 = sbr.rel (0) target = $region21
  $region20: #{transformer_lm_forward.28} parent=0 // pred_region
    _
  $region21: #{transformer_lm_forward.28} parent=0 // pred_fallthru
    _
  // Predicated region
  $region22: #{transformer_lm_forward.28} parent=0 // pred_check
    _
  $region23: #{transformer_lm_forward.28} parent=0 // pred_check_branch
    %22 = sbr.rel (0) target = $region25
  $region24: #{transformer_lm_forward.28} parent=0 // pred_region
    _
  $region25: #{transformer_lm_forward.28} parent=0 // pred_fallthru
    _
  %p24 = scmp.eq.s32.totalorder 0, 0
  // Predicated region
  $region26: #{transformer_lm_forward.28} parent=0 // pred_check
    %p25 = pneg %p24
  $region27: #{transformer_lm_forward.28} parent=0 // pred_check_branch
    %27 = sbr.rel (%p25) target = $region29
  $region28: #{transformer_lm_forward.28} parent=0 // pred_region
    %28 = vst [vmem:[#allocation2] sm:$0xff] 0.0
    %29 = vst [vmem:[#allocation2 + $0x8] sm:$0xff] 0.0
  $region29: #{transformer_lm_forward.28} parent=0 // pred_fallthru
    _
  %v30 = vld [vmem:[#allocation2] sm:$0xff]
  %v31 = vld [vmem:[#allocation2 + $0x8] sm:$0xff]
  %v32 = vld [vmem:[%s0] sm:$0xf]
  %v33 = vld [vmem:[%s0 + $0x4] sm:$0xf]
  %v34 = vld [vmem:[%s1] sm:$0xf]
  %v35 = vld [vmem:[%s1 + $0x4] sm:$0xf]
  %v36 = vld [vmem:[%s1 + $0x8] sm:$0xf]
  %v37 = vld [vmem:[%s1 + $0xc] sm:$0xf]
  %v38 = vld [vmem:[%s1 + $0x10] sm:$0xf]
  %v39 = vld [vmem:[%s1 + $0x14] sm:$0xf]
  %v40 = vld [vmem:[%s1 + $0x18] sm:$0xf]
  %v41 = vld [vmem:[%s1 + $0x1c] sm:$0xf]
  %v42 = vld [vmem:[%s1 + $0x20] sm:$0xf]
  %v43 = vld [vmem:[%s1 + $0x24] sm:$0xf]
  %v44 = vld [vmem:[%s1 + $0x28] sm:$0xf]
  %v45 = vld [vmem:[%s1 + $0x2c] sm:$0xf]
  %v46 = vld [vmem:[%s1 + $0x30] sm:$0xf]
  %v47 = vld [vmem:[%s1 + $0x34] sm:$0xf]
  %v48 = vld [vmem:[%s1 + $0x38] sm:$0xf]
  %v49 = vld [vmem:[%s1 + $0x3c] sm:$0xf]
  %v52 = vunpack.c.l.b16 %v32
  %v53 = vunpack.c.l.b16 %v33
  %v54 = vpack.c.b16 %v53, %v52
  %v72 = vunpack.c.l.b16 %v34
  %v73 = vunpack.c.l.b16 %v35
  %v74 = vunpack.c.l.b16 %v36
  %v75 = vunpack.c.l.b16 %v37
  %v76 = vunpack.c.l.b16 %v38
  %v77 = vunpack.c.l.b16 %v39
  %v78 = vunpack.c.l.b16 %v40
  %v79 = vunpack.c.l.b16 %v41
  %v80 = vunpack.c.l.b16 %v42
  %v81 = vunpack.c.l.b16 %v43
  %v82 = vunpack.c.l.b16 %v44
  %v83 = vunpack.c.l.b16 %v45
  %v84 = vunpack.c.l.b16 %v46
  %v85 = vunpack.c.l.b16 %v47
  %v86 = vunpack.c.l.b16 %v48
  %v87 = vunpack.c.l.b16 %v49
  %v88 = vpack.c.b16 %v73, %v72
  %v89 = vpack.c.b16 %v75, %v74
  %v90 = vpack.c.b16 %v77, %v76
  %v91 = vpack.c.b16 %v79, %v78
  %v92 = vpack.c.b16 %v81, %v80
  %v93 = vpack.c.b16 %v83, %v82
  %v94 = vpack.c.b16 %v85, %v84
  %v95 = vpack.c.b16 %v87, %v86
  %104 = vmatprep.subr.bf16.mxu0 0
  %105 = vmatpush1.bf16.msra.mxu0 %v95
  %106 = vmatprep.subr.bf16.mxu0 0
  %107 = vmatpush1.bf16.msra.mxu0 %v94
  %108 = vmatprep.subr.bf16.mxu0 0
  %109 = vmatpush1.bf16.msra.mxu0 %v93
  %110 = vmatprep.subr.bf16.mxu0 0
  %111 = vmatpush1.bf16.msra.mxu0 %v92
  %112 = vmatprep.subr.bf16.mxu0 0
  %113 = vmatpush1.bf16.msra.mxu0 %v91
  %114 = vmatprep.subr.bf16.mxu0 0
  %115 = vmatpush1.bf16.msra.mxu0 %v90
  %116 = vmatprep.subr.bf16.mxu0 0
  %117 = vmatpush1.bf16.msra.mxu0 %v89
  %118 = vmatprep.subr.bf16.mxu0 0
  %119 = vmatpush1.bf16.msra.mxu0 %v88
  %120 = vmatprep.subr.bf16.mxu0 0
  %121 = vmatpush2.bf16.msra.mxu0 0
  %122 = vmatprep.subr.bf16.mxu0 0
  %123 = vmatpush2.bf16.msra.mxu0 0
  %124 = vmatprep.subr.bf16.mxu0 0
  %125 = vmatpush2.bf16.msra.mxu0 0
  %126 = vmatprep.subr.bf16.mxu0 0
  %127 = vmatpush2.bf16.msra.mxu0 0
  %128 = vmatprep.subr.bf16.mxu0 0
  %129 = vmatpush2.bf16.msra.mxu0 0
  %130 = vmatprep.subr.bf16.mxu0 0
  %131 = vmatpush2.bf16.msra.mxu0 0
  %132 = vmatprep.subr.bf16.mxu0 0
  %133 = vmatpush2.bf16.msra.mxu0 0
  %134 = vmatprep.subr.bf16.mxu0 0
  %135 = vmatpush2.bf16.msra.mxu0 0
  %136 = vmatprep.mubr.bf16.mxu0 0
  %137 = vmatmul.mubr.bf16.gmra.mxu0 %v54
  %v138 = vpop.f32.mrf.mxu0
  %v139 = vadd.f32 0.0, %v138
  %v140 = vpop.f32.mrf.mxu0
  %v141 = vpop.f32.mrf.mxu0
  %v142 = vadd.f32 0.0, %v141
  %v143 = vpop.f32.mrf.mxu0
  %144 = vdwg.mxu0
  %v145 = vadd.f32 %v30, %v139
  %v146 = vadd.f32 %v31, %v142
  %147 = vst [vmem:[#allocation2] sm:$0xff] %v145
  %148 = vst [vmem:[#allocation2 + $0x8] sm:$0xff] %v146
  // Predicated region
  $region30: #{transformer_lm_forward.28} parent=0 // pred_check
    %p149 = pneg %p24
  $region31: #{transformer_lm_forward.28} parent=0 // pred_check_branch
    %151 = sbr.rel (%p149) target = $region33
  $region32: #{transformer_lm_forward.28} parent=0 // pred_region
    %v152 = vld [vmem:[#allocation2] sm:$0xff]
    %v153 = vld [vmem:[#allocation2 + $0x8] sm:$0xff]
    %v154 = vld [vmem:[%s2] sm:$0x1]
    %v156 = vlaneseq
    %v157 = vshrl.u32 %v156, 7
    %v158 = vsub.s32 0, %v157
    %v159 = vrot.slane %v154, %v158
    %v161 = vadd.f32 %v152, %v159
    %v162 = vadd.f32 %v153, %v159
    %v163 = vld [vmem:[%s3] sm:$0xf]
    %v164 = vld [vmem:[%s3 + $0x4] sm:$0xf]
    %v165 = vunpack.c.l.bf16 %v163
    %v166 = vunpack.c.l.bf16 %v164
    %v167 = vadd.f32 %v161, %v165
    %v168 = vadd.f32 %v162, %v166
    %169 = vadd.xlane.f32.xlu0 %v167
    %v170 = vpop.xlane.xlu0 %169
    %171 = vadd.xlane.f32.xlu0 %v168
    %v172 = vpop.xlane.xlu0 %171
    %v173 = vrcp.pop 128.0
    %v174 = vmul.f32 %v170, %v173
    %v175 = vmul.f32 %v172, %v173
    %v176 = vsub.f32 %v167, %v174
    %v177 = vsub.f32 %v168, %v175
    %v178 = vmul.f32 %v176, %v176
    %v179 = vmul.f32 %v177, %v177
    %180 = vadd.xlane.f32.xlu0 %v178
    %v181 = vpop.xlane.xlu0 %180
    %182 = vadd.xlane.f32.xlu0 %v179
    %v183 = vpop.xlane.xlu0 %182
    %v184 = vmul.f32 %v181, %v173
    %v185 = vmul.f32 %v183, %v173
    %v186 = vadd.f32 %v184, 1e-05
    %v187 = vadd.f32 %v185, 1e-05
    %v188 = vrsqrt.pop %v186
    %v189 = vrsqrt.pop %v187
    %v190 = vmul.f32 %v176, %v188
    %v191 = vmul.f32 %v177, %v189
    %v192 = vld [vmem:[%s4] sm:$0x1]
    %v194 = vlaneseq
    %v195 = vshrl.u32 %v194, 7
    %v196 = vsub.s32 0, %v195
    %v197 = vrot.slane %v192, %v196
    %v199 = vmul.f32 %v190, %v197
    %v200 = vmul.f32 %v191, %v197
    %v201 = vld [vmem:[%s5] sm:$0x1]
    %v203 = vlaneseq
    %v204 = vshrl.u32 %v203, 7
    %v205 = vsub.s32 0, %v204
    %v206 = vrot.slane %v201, %v205
    %v208 = vadd.f32 %v199, %v206
    %v209 = vadd.f32 %v200, %v206
    %v210 = vpack.c.bf16 %v209, %v208
    %v212 = vunpack.c.l.b16 %v210
    %v213 = vunpack.c.h.b16 %v210
    %v214 = vpack.c.b16 %v212, %v212
    %v215 = vpack.c.b16 %v213, %v213
    %218 = vst [vmem:[%s6] sm:$0xf] %v214
    %219 = vst [vmem:[%s6 + $0x4] sm:$0xf] %v215
  $region33: #{transformer_lm_forward.28} parent=0 // pred_fallthru
    _
  // Predicated region
  $region34: #{transformer_lm_forward.28} parent=0 // pred_check
    _
  $region35: #{transformer_lm_forward.28} parent=0 // pred_check_branch
    %221 = sbr.rel (0) target = $region37
  $region36: #{transformer_lm_forward.28} parent=0 // pred_region
    _
  $region37: #{transformer_lm_forward.28} parent=0 // pred_fallthru
    _
  // Predicated region
  $region38: #{transformer_lm_forward.28} parent=0 // pred_check
    _
  $region39: #{transformer_lm_forward.28} parent=0 // pred_check_branch
    %223 = sbr.rel (0) target = $region41
  $region40: #{transformer_lm_forward.28} parent=0 // pred_region
    _
  $region41: #{transformer_lm_forward.28} parent=0 // pred_fallthru
    _

// kernel: transformer_lm_forward.27
$region0: #{transformer_lm_forward.27}
  #allocation0 [shape = 'u32[]', space=smem, size = 0x4, offset = 0x4, fixed_abs, tag = 'smem constant byte address 0x4 - core index']
  #allocation1 [shape = 'u32[144,128]{1,0:T(1,128)}', space=vmem, size = 0x12000, scoped, tag = 'internal scratch']
  %s0 = inlined_call_operand.vmem [shape: bf16[2,8,384], index: 0, kind: input, shape index: {}, may-alias: {0,1,2}]
  %s1 = inlined_call_operand.vmem [shape: bf16[2,8,384], index: 1, kind: input, shape index: {}, may-alias: {0,1,2}]
  %s2 = inlined_call_operand.vmem [shape: bf16[2,8,384], index: 2, kind: input, shape index: {}, may-alias: {0,1,2}]
  %s3 = inlined_call_operand.vmem [shape: bf16[2,8,128], index: 3, kind: output, shape index: {}]
  %s4 = sld [smem:[#allocation0]]
  $region45: #{transformer_lm_forward.27} parent=0
    _
  %s6 = ssub.s32 1, %s4
  %s7 = scalar_select 0, %s6, %s4
  loop: start=0, step=1, limit=4
  $region2: #{transformer_lm_forward.27} parent=0 // loop_pre_header
    _
  $region3: #{transformer_lm_forward.27} parent=0 // loop_header
    %s9 = sphi 0, %s13
    %p10 = scmp.ge.s32.totalorder %s9, 4
    %s16 = sphi 0, %s28
    %s17 = sphi 0, %s24
    %s18 = sphi 0, %s16
    %s19 = sphi 0, %s17
    %s20 = sphi 0, %s18
    %s21 = sphi 0, %s19
    %s33 = sphi 0, %s35
    %s36 = sphi 0, %s33
    %s37 = sphi 0, %s36
    %s53 = sphi 0, %s37
    %s59 = sphi 0, %s61
    %s62 = sphi 0, %s59
    %s63 = sphi 0, %s62
    %s79 = sphi 0, %s63
    %s85 = sphi 0, %s87
    %s88 = sphi 0, %s85
    %s89 = sphi 0, %s88
    %s105 = sphi 0, %s89
    %s113 = sphi 0, %s115
    %s116 = sphi 0, %s113
    %s117 = sphi 0, %s116
    %s133 = sphi 0, %s117
  $region4: #{transformer_lm_forward.27} parent=0 // loop_header_branch
    %12 = sbr.rel (%p10) target = $region8
  $region5: #{transformer_lm_forward.27} parent=0 // loop_body
    %s14 = ssub.s32 %s9, 1
    %s15 = ssub.s32 %s9, 2
    %s22 = sadd.s32 1, %s17
    %p23 = scmp.ge.s32.totalorder %s22, 1
    %s24 = scalar_select %p23, 0, %s22
    %s25 = sadd.s32 1, %s16
    %s26 = scalar_select %p23, %s25, %s16
    %p27 = scmp.ge.s32.totalorder %s26, 2
    %s28 = scalar_select %p27, 0, %s26
    %s29 = ssub.s32 %s16, %s28
    %s30 = ssub.s32 %s17, %s24
    %s31 = sor.u32 %s29, %s30
    %p32 = scmp.eq.s32.totalorder %s31, 0
    %s34 = sadd.s32 %s33, 1
    %s35 = scalar_select %p32, %s33, %s34
    %p38 = pneg %p32
    %p39 = scmp.eq.s32.totalorder %s9, 1
    %p40 = por %p38, %p39
    %p41 = scmp.ne.s32.totalorder %s33, %s36
    %p42 = scmp.eq.s32.totalorder %s9, 0
    %p43 = por %p41, %p42
    %p44 = scmp.ne.s32.totalorder %s33, %s36
    %p45 = scmp.eq.s32.totalorder %s14, 1
    %p46 = por %p44, %p45
    %p47 = scmp.ne.s32.totalorder %s36, %s37
    %p48 = scmp.eq.s32.totalorder %s14, 0
    %p49 = por %p47, %p48
    %p50 = scmp.ne.s32.totalorder %s36, %s37
    %p51 = scmp.eq.s32.totalorder %s15, 1
    %p52 = por %p50, %p51
    %p54 = scmp.ne.s32.totalorder %s37, %s53
    %p55 = scmp.eq.s32.totalorder %s15, 0
    %p56 = por %p54, %p55
    %s57 = ssub.s32 %s16, %s28
    %p58 = scmp.eq.s32.totalorder %s57, 0
    %s60 = sadd.s32 %s59, 1
    %s61 = scalar_select %p58, %s59, %s60
    %p64 = pneg %p58
    %p65 = scmp.eq.s32.totalorder %s9, 1
    %p66 = por %p64, %p65
    %p67 = scmp.ne.s32.totalorder %s59, %s62
    %p68 = scmp.eq.s32.totalorder %s9, 0
    %p69 = por %p67, %p68
    %p70 = scmp.ne.s32.totalorder %s59, %s62
    %p71 = scmp.eq.s32.totalorder %s14, 1
    %p72 = por %p70, %p71
    %p73 = scmp.ne.s32.totalorder %s62, %s63
    %p74 = scmp.eq.s32.totalorder %s14, 0
    %p75 = por %p73, %p74
    %p76 = scmp.ne.s32.totalorder %s62, %s63
    %p77 = scmp.eq.s32.totalorder %s15, 1
    %p78 = por %p76, %p77
    %p80 = scmp.ne.s32.totalorder %s63, %s79
    %p81 = scmp.eq.s32.totalorder %s15, 0
    %p82 = por %p80, %p81
    %s83 = ssub.s32 %s16, %s28
    %p84 = scmp.eq.s32.totalorder %s83, 0
    %s86 = sadd.s32 %s85, 1
    %s87 = scalar_select %p84, %s85, %s86
    %p90 = pneg %p84
    %p91 = scmp.eq.s32.totalorder %s9, 1
    %p92 = por %p90, %p91
    %p93 = scmp.ne.s32.totalorder %s85, %s88
    %p94 = scmp.eq.s32.totalorder %s9, 0
    %p95 = por %p93, %p94
    %p96 = scmp.ne.s32.totalorder %s85, %s88
    %p97 = scmp.eq.s32.totalorder %s14, 1
    %p98 = por %p96, %p97
    %p99 = scmp.ne.s32.totalorder %s88, %s89
    %p100 = scmp.eq.s32.totalorder %s14, 0
    %p101 = por %p99, %p100
    %p102 = scmp.ne.s32.totalorder %s88, %s89
    %p103 = scmp.eq.s32.totalorder %s15, 1
    %p104 = por %p102, %p103
    %p106 = scmp.ne.s32.totalorder %s89, %s105
    %p107 = scmp.eq.s32.totalorder %s15, 0
    %p108 = por %p106, %p107
    %s109 = ssub.s32 %s16, %s28
    %s110 = ssub.s32 %s17, %s24
    %s111 = sor.u32 %s109, %s110
    %p112 = scmp.eq.s32.totalorder %s111, 0
    %s114 = sadd.s32 %s113, 1
    %s115 = scalar_select %p112, %s113, %s114
    %p118 = pneg %p112
    %p119 = scmp.eq.s32.totalorder %s9, 1
    %p120 = por %p118, %p119
    %p121 = scmp.ne.s32.totalorder %s113, %s116
    %p122 = scmp.eq.s32.totalorder %s9, 0
    %p123 = por %p121, %p122
    %p124 = scmp.ne.s32.totalorder %s113, %s116
    %p125 = scmp.eq.s32.totalorder %s14, 1
    %p126 = por %p124, %p125
    %p127 = scmp.ne.s32.totalorder %s116, %s117
    %p128 = scmp.eq.s32.totalorder %s14, 0
    %p129 = por %p127, %p128
    %p130 = scmp.ne.s32.totalorder %s116, %s117
    %p131 = scmp.eq.s32.totalorder %s15, 1
    %p132 = por %p130, %p131
    %p134 = scmp.ne.s32.totalorder %s117, %s133
    %p135 = scmp.eq.s32.totalorder %s15, 0
    %p136 = por %p134, %p135
    %p137 = scmp.le.s32.totalorder 1, %s9
    %p138 = scmp.lt.s32.totalorder %s9, 3
    %p139 = pnand %p137, %p138
    %p140 = pneg %p139
    // Predicated region
    $region9: #{transformer_lm_forward.27} parent=5 // pred_check
      _
    $region10: #{transformer_lm_forward.27} parent=5 // pred_check_branch
      %142 = sbr.rel (%p139) target = $region12
    $region11: #{transformer_lm_forward.27} parent=5 // pred_region
      %s143 = ssub.s32 %s9, 1
    $region12: #{transformer_lm_forward.27} parent=5 // pred_fallthru
      _
    %p144 = scmp.lt.s32.totalorder %s9, 2
    // Predicated region
    $region13: #{transformer_lm_forward.27} parent=5 // pred_check
      %p145 = pneg %p144
    $region14: #{transformer_lm_forward.27} parent=5 // pred_check_branch
      %147 = sbr.rel (%p145) target = $region16
    $region15: #{transformer_lm_forward.27} parent=5 // pred_region
      // Predicated region
      $region17: #{transformer_lm_forward.27} parent=15 // pred_check
        %p148 = pneg %p43
      $region18: #{transformer_lm_forward.27} parent=15 // pred_check_branch
        %150 = sbr.rel (%p148) target = $region20
      $region19: #{transformer_lm_forward.27} parent=15 // pred_region
        %p151 = scmp.lt.s32.totalorder %s16, 1
        %s152 = scalar_select %p151, %s16, 1
        %p153 = scmp.lt.s32.totalorder %s17, 0
        %s154 = scalar_select %p153, %s17, 0
        %s155 = smul.addr %s154, 3
        %s156 = smul.addr %s152, 3
        %s157 = sadd.s32 %s155, %s156
        %s158 = smul.addr %s157, 4
        %s159 = scalar_lea.vmem %s0, %s158
      $region20: #{transformer_lm_forward.27} parent=15 // pred_fallthru
        _
      // Predicated region
      $region21: #{transformer_lm_forward.27} parent=15 // pred_check
        %p160 = pneg %p69
      $region22: #{transformer_lm_forward.27} parent=15 // pred_check_branch
        %162 = sbr.rel (%p160) target = $region24
      $region23: #{transformer_lm_forward.27} parent=15 // pred_region
        %p163 = scmp.lt.s32.totalorder %s16, 1
        %s164 = scalar_select %p163, %s16, 1
        %s165 = smul.addr %s164, 3
        %s166 = sadd.s32 1, %s165
        %s167 = smul.addr %s166, 4
        %s168 = scalar_lea.vmem %s1, %s167
      $region24: #{transformer_lm_forward.27} parent=15 // pred_fallthru
        _
      // Predicated region
      $region25: #{transformer_lm_forward.27} parent=15 // pred_check
        %p169 = pneg %p95
      $region26: #{transformer_lm_forward.27} parent=15 // pred_check_branch
        %171 = sbr.rel (%p169) target = $region28
      $region27: #{transformer_lm_forward.27} parent=15 // pred_region
        %p172 = scmp.lt.s32.totalorder %s16, 1
        %s173 = scalar_select %p172, %s16, 1
        %s174 = smul.addr %s173, 3
        %s175 = sadd.s32 2, %s174
        %s176 = smul.addr %s175, 4
        %s177 = scalar_lea.vmem %s2, %s176
      $region28: #{transformer_lm_forward.27} parent=15 // pred_fallthru
        _
    $region16: #{transformer_lm_forward.27} parent=5 // pred_fallthru
      _
    %p178 = scmp.le.s32.totalorder 1, %s9
    %p179 = scmp.lt.s32.totalorder %s9, 3
    %p180 = pnand %p178, %p179
    %p181 = pneg %p180
    // Predicated region
    $region29: #{transformer_lm_forward.27} parent=5 // pred_check
      _
    $region30: #{transformer_lm_forward.27} parent=5 // pred_check_branch
      %183 = sbr.rel (%p180) target = $region32
    $region31: #{transformer_lm_forward.27} parent=5 // pred_region
      %s184 = ssub.s32 %s9, 1
      %p185 = scmp.lt.s32.totalorder %s18, 1
      %s186 = scalar_select %p185, %s18, 1
      %p187 = scmp.lt.s32.totalorder %s19, 0
      %s188 = scalar_select %p187, %s19, 0
      %s189 = smul.addr %s188, 3
      %s190 = smul.addr %s186, 3
      %s191 = sadd.s32 %s189, %s190
      %s192 = smul.addr %s191, 4
      %s193 = scalar_lea.vmem %s0, %s192
      %p194 = pneg %p49
      %p195 = pneg %p46
      %p196 = scmp.lt.s32.totalorder %s18, 1
      %s197 = scalar_select %p196, %s18, 1
      %s198 = smul.addr %s197, 3
      %s199 = sadd.s32 1, %s198
      %s200 = smul.addr %s199, 4
      %s201 = scalar_lea.vmem %s1, %s200
      %p202 = pneg %p75
      %p203 = pneg %p72
      %p204 = scmp.lt.s32.totalorder %s18, 1
      %s205 = scalar_select %p204, %s18, 1
      %s206 = smul.addr %s205, 3
      %s207 = sadd.s32 2, %s206
      %s208 = smul.addr %s207, 4
      %s209 = scalar_lea.vmem %s2, %s208
      %p210 = pneg %p101
      %p211 = pneg %p98
      %p212 = pneg %p129
      %p213 = pneg %p126
      %p214 = scmp.lt.s32.totalorder %s18, 1
      %s215 = scalar_select %p214, %s18, 1
      %p216 = scmp.lt.s32.totalorder %s19, 0
      %s217 = scalar_select %p216, %s19, 0
      %s218 = sadd.s32 %s217, %s215
      %s219 = smul.addr %s218, 4
      %s220 = scalar_lea.vmem %s3, %s219
      %p221 = scmp.lt.s32.totalorder %s18, 1
      %s222 = scalar_select %p221, %s18, 1
      %p223 = scmp.lt.s32.totalorder %s19, 0
      %s224 = scalar_select %p223, %s19, 0
      %s225 = smul.addr %s224, 3
      %s226 = smul.addr %s222, 3
      %s227 = sadd.s32 %s225, %s226
      %s228 = smul.addr %s227, 4
      %s229 = scalar_lea.vmem %s0, %s228
      %p230 = scmp.lt.s32.totalorder %s18, 1
      %s231 = scalar_select %p230, %s18, 1
      %s232 = smul.addr %s231, 3
      %s233 = sadd.s32 1, %s232
      %s234 = smul.addr %s233, 4
      %s235 = scalar_lea.vmem %s1, %s234
      %p236 = scmp.lt.s32.totalorder %s18, 1
      %s237 = scalar_select %p236, %s18, 1
      %s238 = smul.addr %s237, 3
      %s239 = sadd.s32 2, %s238
      %s240 = smul.addr %s239, 4
      %s241 = scalar_lea.vmem %s2, %s240
      %p242 = scmp.lt.s32.totalorder %s18, 1
      %s243 = scalar_select %p242, %s18, 1
      %p244 = scmp.lt.s32.totalorder %s19, 0
      %s245 = scalar_select %p244, %s19, 0
      %s246 = sadd.s32 %s245, %s243
      %s247 = smul.addr %s246, 4
      %s248 = scalar_lea.vmem %s3, %s247
      %v250 = vld [vmem:[%s229] sm:$0xf]
      %v251 = vld [vmem:[%s235] sm:$0xf]
      %v252 = vld [vmem:[%s241] sm:$0xf]
      %vm253 = vcmask 261120
      %v255 = vsel %vm253, %v250, 0
      %v258 = vsel %vm253, %v251, 0
      %260 = vmatprep.subr.bf16.mxu0 0
      %261 = vmatpush1.bf16.xpose.msra.mxu0 0
      %262 = vmatprep.subr.bf16.mxu0 0
      %263 = vmatpush1.bf16.xpose.msra.mxu0 0
      %264 = vmatprep.subr.bf16.mxu0 0
      %265 = vmatpush1.bf16.xpose.msra.mxu0 0
      %266 = vmatprep.subr.bf16.mxu0 0
      %267 = vmatpush1.bf16.xpose.msra.mxu0 0
      %268 = vmatprep.subr.bf16.mxu0 0
      %269 = vmatpush1.bf16.xpose.msra.mxu0 0
      %270 = vmatprep.subr.bf16.mxu0 0
      %271 = vmatpush1.bf16.xpose.msra.mxu0 0
      %272 = vmatprep.subr.bf16.mxu0 0
      %273 = vmatpush1.bf16.xpose.msra.mxu0 0
      %274 = vmatprep.subr.bf16.mxu0 0
      %275 = vmatpush1.bf16.xpose.msra.mxu0 %v258
      %276 = vmatprep.subr.bf16.mxu0 0
      %277 = vmatpush2.bf16.xpose.msra.mxu0 0
      %278 = vmatprep.subr.bf16.mxu0 0
      %279 = vmatpush2.bf16.xpose.msra.mxu0 0
      %280 = vmatprep.subr.bf16.mxu0 0
      %281 = vmatpush2.bf16.xpose.msra.mxu0 0
      %282 = vmatprep.subr.bf16.mxu0 0
      %283 = vmatpush2.bf16.xpose.msra.mxu0 0
      %284 = vmatprep.subr.bf16.mxu0 0
      %285 = vmatpush2.bf16.xpose.msra.mxu0 0
      %286 = vmatprep.subr.bf16.mxu0 0
      %287 = vmatpush2.bf16.xpose.msra.mxu0 0
      %288 = vmatprep.subr.bf16.mxu0 0
      %289 = vmatpush2.bf16.xpose.msra.mxu0 0
      %290 = vmatprep.subr.bf16.mxu0 0
      %291 = vmatpush2.bf16.xpose.msra.mxu0 0
      %292 = vmatprep.mubr.bf16.mxu0 0
      %293 = vmatmul.mubr.bf16.gmra.mxu0 %v255
      %v294 = vpop.f32.mrf.mxu0
      %v295 = vadd.f32 0.0, %v294
      %v296 = vpop.f32.mrf.mxu0
      %v297 = vpop.f32.mrf.mxu0
      %v298 = vpop.f32.mrf.mxu0
      %299 = vdwg.mxu0
      %v300 = vmul.f32 %v295, 0.17677669
      %vm301 = vcmask 64512
      %v302 = vsel %vm301, %v300, -inf
      %303 = vmax.xlane.f32.xlu0 %v302
      %v304 = vpop.xlane.xlu0 %303
      %v305 = vsub.f32 %v300, %v304
      %v306 = vmul.f32 %v305, 1.442695
      %v307 = vpow.pop %v306
      %v308 = vsel %vm301, %v307, 0.0
      %309 = vadd.xlane.f32.xlu0 %v308
      %v310 = vpop.xlane.xlu0 %309
      %v311 = vrcp.pop %v310
      %v312 = vmul.f32 %v307, %v311
      %v313 = vpack.c.bf16 %v312, %v312
      %v315 = vsel %vm301, %v313, 0
      %vm317 = vcmask 1043456
      %v319 = vsel %vm317, %v252, 0
      %321 = vmatprep.subr.bf16.mxu0 0
      %322 = vmatpush1.bf16.msra.mxu0 0
      %323 = vmatprep.subr.bf16.mxu0 0
      %324 = vmatpush1.bf16.msra.mxu0 0
      %325 = vmatprep.subr.bf16.mxu0 0
      %326 = vmatpush1.bf16.msra.mxu0 0
      %327 = vmatprep.subr.bf16.mxu0 0
      %328 = vmatpush1.bf16.msra.mxu0 0
      %329 = vmatprep.subr.bf16.mxu0 0
      %330 = vmatpush1.bf16.msra.mxu0 0
      %331 = vmatprep.subr.bf16.mxu0 0
      %332 = vmatpush1.bf16.msra.mxu0 0
      %333 = vmatprep.subr.bf16.mxu0 0
      %334 = vmatpush1.bf16.msra.mxu0 0
      %335 = vmatprep.subr.bf16.mxu0 0
      %336 = vmatpush1.bf16.msra.mxu0 %v319
      %337 = vmatprep.subr.bf16.mxu0 0
      %338 = vmatpush2.bf16.msra.mxu0 0
      %339 = vmatprep.subr.bf16.mxu0 0
      %340 = vmatpush2.bf16.msra.mxu0 0
      %341 = vmatprep.subr.bf16.mxu0 0
      %342 = vmatpush2.bf16.msra.mxu0 0
      %343 = vmatprep.subr.bf16.mxu0 0
      %344 = vmatpush2.bf16.msra.mxu0 0
      %345 = vmatprep.subr.bf16.mxu0 0
      %346 = vmatpush2.bf16.msra.mxu0 0
      %347 = vmatprep.subr.bf16.mxu0 0
      %348 = vmatpush2.bf16.msra.mxu0 0
      %349 = vmatprep.subr.bf16.mxu0 0
      %350 = vmatpush2.bf16.msra.mxu0 0
      %351 = vmatprep.subr.bf16.mxu0 0
      %352 = vmatpush2.bf16.msra.mxu0 0
      %353 = vmatprep.mubr.bf16.mxu0 0
      %354 = vmatmul.mubr.bf16.gmra.mxu0 %v315
      %v355 = vpop.f32.mrf.mxu0
      %v356 = vadd.f32 0.0, %v355
      %v357 = vpop.f32.mrf.mxu0
      %v358 = vpop.f32.mrf.mxu0
      %v359 = vpop.f32.mrf.mxu0
      %360 = vdwg.mxu0
      %v362 = vunpack.c.l.b16 %v250
      %v363 = vpack.c.b16 %v362, %v362
      %364 = vrot.lane.b32.xlu0 %v363, 96
      %v365 = vpop.permute.xlu0 %364
      %v367 = vunpack.c.l.b16 %v251
      %v368 = vpack.c.b16 %v367, %v367
      %369 = vrot.lane.b32.xlu0 %v368, 96
      %v370 = vpop.permute.xlu0 %369
      %v372 = vsel %vm253, %v365, 0
      %v375 = vsel %vm253, %v370, 0
      %377 = vmatprep.subr.bf16.mxu0 0
      %378 = vmatpush1.bf16.xpose.msra.mxu0 0
      %379 = vmatprep.subr.bf16.mxu0 0
      %380 = vmatpush1.bf16.xpose.msra.mxu0 0
      %381 = vmatprep.subr.bf16.mxu0 0
      %382 = vmatpush1.bf16.xpose.msra.mxu0 0
      %383 = vmatprep.subr.bf16.mxu0 0
      %384 = vmatpush1.bf16.xpose.msra.mxu0 0
      %385 = vmatprep.subr.bf16.mxu0 0
      %386 = vmatpush1.bf16.xpose.msra.mxu0 0
      %387 = vmatprep.subr.bf16.mxu0 0
      %388 = vmatpush1.bf16.xpose.msra.mxu0 0
      %389 = vmatprep.subr.bf16.mxu0 0
      %390 = vmatpush1.bf16.xpose.msra.mxu0 0
      %391 = vmatprep.subr.bf16.mxu0 0
      %392 = vmatpush1.bf16.xpose.msra.mxu0 %v375
      %393 = vmatprep.subr.bf16.mxu0 0
      %394 = vmatpush2.bf16.xpose.msra.mxu0 0
      %395 = vmatprep.subr.bf16.mxu0 0
      %396 = vmatpush2.bf16.xpose.msra.mxu0 0
      %397 = vmatprep.subr.bf16.mxu0 0
      %398 = vmatpush2.bf16.xpose.msra.mxu0 0
      %399 = vmatprep.subr.bf16.mxu0 0
      %400 = vmatpush2.bf16.xpose.msra.mxu0 0
      %401 = vmatprep.subr.bf16.mxu0 0
      %402 = vmatpush2.bf16.xpose.msra.mxu0 0
      %403 = vmatprep.subr.bf16.mxu0 0
      %404 = vmatpush2.bf16.xpose.msra.mxu0 0
      %405 = vmatprep.subr.bf16.mxu0 0
      %406 = vmatpush2.bf16.xpose.msra.mxu0 0
      %407 = vmatprep.subr.bf16.mxu0 0
      %408 = vmatpush2.bf16.xpose.msra.mxu0 0
      %409 = vmatprep.mubr.bf16.mxu0 0
      %410 = vmatmul.mubr.bf16.gmra.mxu0 %v372
      %v411 = vpop.f32.mrf.mxu0
      %v412 = vadd.f32 0.0, %v411
      %v413 = vpop.f32.mrf.mxu0
      %v414 = vpop.f32.mrf.mxu0
      %v415 = vpop.f32.mrf.mxu0
      %416 = vdwg.mxu0
      %v417 = vmul.f32 %v412, 0.17677669
      %v418 = vsel %vm301, %v417, -inf
      %419 = vmax.xlane.f32.xlu0 %v418
      %v420 = vpop.xlane.xlu0 %419
      %v421 = vsub.f32 %v417, %v420
      %v422 = vmul.f32 %v421, 1.442695
      %v423 = vpow.pop %v422
      %v424 = vsel %vm301, %v423, 0.0
      %425 = vadd.xlane.f32.xlu0 %v424
      %v426 = vpop.xlane.xlu0 %425
      %v427 = vrcp.pop %v426
      %v428 = vmul.f32 %v423, %v427
      %v429 = vpack.c.bf16 %v428, %v428
      %v431 = vunpack.c.l.b16 %v252
      %v432 = vpack.c.b16 %v431, %v431
      %433 = vrot.lane.b32.xlu0 %v432, 96
      %v434 = vpop.permute.xlu0 %433
      %v436 = vsel %vm301, %v429, 0
      %v439 = vsel %vm317, %v434, 0
      %441 = vmatprep.subr.bf16.mxu0 0
      %442 = vmatpush1.bf16.msra.mxu0 0
      %443 = vmatprep.subr.bf16.mxu0 0
      %444 = vmatpush1.bf16.msra.mxu0 0
      %445 = vmatprep.subr.bf16.mxu0 0
      %446 = vmatpush1.bf16.msra.mxu0 0
      %447 = vmatprep.subr.bf16.mxu0 0
      %448 = vmatpush1.bf16.msra.mxu0 0
      %449 = vmatprep.subr.bf16.mxu0 0
      %450 = vmatpush1.bf16.msra.mxu0 0
      %451 = vmatprep.subr.bf16.mxu0 0
      %452 = vmatpush1.bf16.msra.mxu0 0
      %453 = vmatprep.subr.bf16.mxu0 0
      %454 = vmatpush1.bf16.msra.mxu0 0
      %455 = vmatprep.subr.bf16.mxu0 0
      %456 = vmatpush1.bf16.msra.mxu0 %v439
      %457 = vmatprep.subr.bf16.mxu0 0
      %458 = vmatpush2.bf16.msra.mxu0 0
      %459 = vmatprep.subr.bf16.mxu0 0
      %460 = vmatpush2.bf16.msra.mxu0 0
      %461 = vmatprep.subr.bf16.mxu0 0
      %462 = vmatpush2.bf16.msra.mxu0 0
      %463 = vmatprep.subr.bf16.mxu0 0
      %464 = vmatpush2.bf16.msra.mxu0 0
      %465 = vmatprep.subr.bf16.mxu0 0
      %466 = vmatpush2.bf16.msra.mxu0 0
      %467 = vmatprep.subr.bf16.mxu0 0
      %468 = vmatpush2.bf16.msra.mxu0 0
      %469 = vmatprep.subr.bf16.mxu0 0
      %470 = vmatpush2.bf16.msra.mxu0 0
      %471 = vmatprep.subr.bf16.mxu0 0
      %472 = vmatpush2.bf16.msra.mxu0 0
      %473 = vmatprep.mubr.bf16.mxu0 0
      %474 = vmatmul.mubr.bf16.gmra.mxu0 %v436
      %v475 = vpop.f32.mrf.mxu0
      %v476 = vadd.f32 0.0, %v475
      %v477 = vpop.f32.mrf.mxu0
      %v478 = vpop.f32.mrf.mxu0
      %v479 = vpop.f32.mrf.mxu0
      %480 = vdwg.mxu0
      %481 = vrot.lane.b32.xlu0 %v363, 64
      %v482 = vpop.permute.xlu0 %481
      %483 = vrot.lane.b32.xlu0 %v368, 64
      %v484 = vpop.permute.xlu0 %483
      %v486 = vsel %vm253, %v482, 0
      %v489 = vsel %vm253, %v484, 0
      %491 = vmatprep.subr.bf16.mxu0 0
      %492 = vmatpush1.bf16.xpose.msra.mxu0 0
      %493 = vmatprep.subr.bf16.mxu0 0
      %494 = vmatpush1.bf16.xpose.msra.mxu0 0
      %495 = vmatprep.subr.bf16.mxu0 0
      %496 = vmatpush1.bf16.xpose.msra.mxu0 0
      %497 = vmatprep.subr.bf16.mxu0 0
      %498 = vmatpush1.bf16.xpose.msra.mxu0 0
      %499 = vmatprep.subr.bf16.mxu0 0
      %500 = vmatpush1.bf16.xpose.msra.mxu0 0
      %501 = vmatprep.subr.bf16.mxu0 0
      %502 = vmatpush1.bf16.xpose.msra.mxu0 0
      %503 = vmatprep.subr.bf16.mxu0 0
      %504 = vmatpush1.bf16.xpose.msra.mxu0 0
      %505 = vmatprep.subr.bf16.mxu0 0
      %506 = vmatpush1.bf16.xpose.msra.mxu0 %v489
      %507 = vmatprep.subr.bf16.mxu0 0
      %508 = vmatpush2.bf16.xpose.msra.mxu0 0
      %509 = vmatprep.subr.bf16.mxu0 0
      %510 = vmatpush2.bf16.xpose.msra.mxu0 0
      %511 = vmatprep.subr.bf16.mxu0 0
      %512 = vmatpush2.bf16.xpose.msra.mxu0 0
      %513 = vmatprep.subr.bf16.mxu0 0
      %514 = vmatpush2.bf16.xpose.msra.mxu0 0
      %515 = vmatprep.subr.bf16.mxu0 0
      %516 = vmatpush2.bf16.xpose.msra.mxu0 0
      %517 = vmatprep.subr.bf16.mxu0 0
      %518 = vmatpush2.bf16.xpose.msra.mxu0 0
      %519 = vmatprep.subr.bf16.mxu0 0
      %520 = vmatpush2.bf16.xpose.msra.mxu0 0
      %521 = vmatprep.subr.bf16.mxu0 0
      %522 = vmatpush2.bf16.xpose.msra.mxu0 0
      %523 = vmatprep.mubr.bf16.mxu0 0
      %524 = vmatmul.mubr.bf16.gmra.mxu0 %v486
      %v525 = vpop.f32.mrf.mxu0
      %v526 = vadd.f32 0.0, %v525
      %v527 = vpop.f32.mrf.mxu0
      %v528 = vpop.f32.mrf.mxu0
      %v529 = vpop.f32.mrf.mxu0
      %530 = vdwg.mxu0
      %v531 = vmul.f32 %v526, 0.17677669
      %v532 = vsel %vm301, %v531, -inf
      %533 = vmax.xlane.f32.xlu0 %v532
      %v534 = vpop.xlane.xlu0 %533
      %v535 = vsub.f32 %v531, %v534
      %v536 = vmul.f32 %v535, 1.442695
      %v537 = vpow.pop %v536
      %v538 = vsel %vm301, %v537, 0.0
      %539 = vadd.xlane.f32.xlu0 %v538
      %v540 = vpop.xlane.xlu0 %539
      %v541 = vrcp.pop %v540
      %v542 = vmul.f32 %v537, %v541
      %v543 = vpack.c.bf16 %v542, %v542
      %544 = vrot.lane.b32.xlu0 %v432, 64
      %v545 = vpop.permute.xlu0 %544
      %v547 = vsel %vm301, %v543, 0
      %v550 = vsel %vm317, %v545, 0
      %552 = vmatprep.subr.bf16.mxu0 0
      %553 = vmatpush1.bf16.msra.mxu0 0
      %554 = vmatprep.subr.bf16.mxu0 0
      %555 = vmatpush1.bf16.msra.mxu0 0
      %556 = vmatprep.subr.bf16.mxu0 0
      %557 = vmatpush1.bf16.msra.mxu0 0
      %558 = vmatprep.subr.bf16.mxu0 0
      %559 = vmatpush1.bf16.msra.mxu0 0
      %560 = vmatprep.subr.bf16.mxu0 0
      %561 = vmatpush1.bf16.msra.mxu0 0
      %562 = vmatprep.subr.bf16.mxu0 0
      %563 = vmatpush1.bf16.msra.mxu0 0
      %564 = vmatprep.subr.bf16.mxu0 0
      %565 = vmatpush1.bf16.msra.mxu0 0
      %566 = vmatprep.subr.bf16.mxu0 0
      %567 = vmatpush1.bf16.msra.mxu0 %v550
      %568 = vmatprep.subr.bf16.mxu0 0
      %569 = vmatpush2.bf16.msra.mxu0 0
      %570 = vmatprep.subr.bf16.mxu0 0
      %571 = vmatpush2.bf16.msra.mxu0 0
      %572 = vmatprep.subr.bf16.mxu0 0
      %573 = vmatpush2.bf16.msra.mxu0 0
      %574 = vmatprep.subr.bf16.mxu0 0
      %575 = vmatpush2.bf16.msra.mxu0 0
      %576 = vmatprep.subr.bf16.mxu0 0
      %577 = vmatpush2.bf16.msra.mxu0 0
      %578 = vmatprep.subr.bf16.mxu0 0
      %579 = vmatpush2.bf16.msra.mxu0 0
      %580 = vmatprep.subr.bf16.mxu0 0
      %581 = vmatpush2.bf16.msra.mxu0 0
      %582 = vmatprep.subr.bf16.mxu0 0
      %583 = vmatpush2.bf16.msra.mxu0 0
      %584 = vmatprep.mubr.bf16.mxu0 0
      %585 = vmatmul.mubr.bf16.gmra.mxu0 %v547
      %v586 = vpop.f32.mrf.mxu0
      %v587 = vadd.f32 0.0, %v586
      %v588 = vpop.f32.mrf.mxu0
      %v589 = vpop.f32.mrf.mxu0
      %v590 = vpop.f32.mrf.mxu0
      %591 = vdwg.mxu0
      %592 = vrot.lane.b32.xlu0 %v363, 32
      %v593 = vpop.permute.xlu0 %592
      %594 = vrot.lane.b32.xlu0 %v368, 32
      %v595 = vpop.permute.xlu0 %594
      %v597 = vsel %vm253, %v593, 0
      %v600 = vsel %vm253, %v595, 0
      %602 = vmatprep.subr.bf16.mxu0 0
      %603 = vmatpush1.bf16.xpose.msra.mxu0 0
      %604 = vmatprep.subr.bf16.mxu0 0
      %605 = vmatpush1.bf16.xpose.msra.mxu0 0
      %606 = vmatprep.subr.bf16.mxu0 0
      %607 = vmatpush1.bf16.xpose.msra.mxu0 0
      %608 = vmatprep.subr.bf16.mxu0 0
      %609 = vmatpush1.bf16.xpose.msra.mxu0 0
      %610 = vmatprep.subr.bf16.mxu0 0
      %611 = vmatpush1.bf16.xpose.msra.mxu0 0
      %612 = vmatprep.subr.bf16.mxu0 0
      %613 = vmatpush1.bf16.xpose.msra.mxu0 0
      %614 = vmatprep.subr.bf16.mxu0 0
      %615 = vmatpush1.bf16.xpose.msra.mxu0 0
      %616 = vmatprep.subr.bf16.mxu0 0
      %617 = vmatpush1.bf16.xpose.msra.mxu0 %v600
      %618 = vmatprep.subr.bf16.mxu0 0
      %619 = vmatpush2.bf16.xpose.msra.mxu0 0
      %620 = vmatprep.subr.bf16.mxu0 0
      %621 = vmatpush2.bf16.xpose.msra.mxu0 0
      %622 = vmatprep.subr.bf16.mxu0 0
      %623 = vmatpush2.bf16.xpose.msra.mxu0 0
      %624 = vmatprep.subr.bf16.mxu0 0
      %625 = vmatpush2.bf16.xpose.msra.mxu0 0
      %626 = vmatprep.subr.bf16.mxu0 0
      %627 = vmatpush2.bf16.xpose.msra.mxu0 0
      %628 = vmatprep.subr.bf16.mxu0 0
      %629 = vmatpush2.bf16.xpose.msra.mxu0 0
      %630 = vmatprep.subr.bf16.mxu0 0
      %631 = vmatpush2.bf16.xpose.msra.mxu0 0
      %632 = vmatprep.subr.bf16.mxu0 0
      %633 = vmatpush2.bf16.xpose.msra.mxu0 0
      %634 = vmatprep.mubr.bf16.mxu0 0
      %635 = vmatmul.mubr.bf16.gmra.mxu0 %v597
      %v636 = vpop.f32.mrf.mxu0
      %v637 = vadd.f32 0.0, %v636
      %v638 = vpop.f32.mrf.mxu0
      %v639 = vpop.f32.mrf.mxu0
      %v640 = vpop.f32.mrf.mxu0
      %641 = vdwg.mxu0
      %v642 = vmul.f32 %v637, 0.17677669
      %v643 = vsel %vm301, %v642, -inf
      %644 = vmax.xlane.f32.xlu0 %v643
      %v645 = vpop.xlane.xlu0 %644
      %v646 = vsub.f32 %v642, %v645
      %v647 = vmul.f32 %v646, 1.442695
      %v648 = vpow.pop %v647
      %v649 = vsel %vm301, %v648, 0.0
      %650 = vadd.xlane.f32.xlu0 %v649
      %v651 = vpop.xlane.xlu0 %650
      %v652 = vrcp.pop %v651
      %v653 = vmul.f32 %v648, %v652
      %v654 = vpack.c.bf16 %v653, %v653
      %655 = vrot.lane.b32.xlu0 %v432, 32
      %v656 = vpop.permute.xlu0 %655
      %v658 = vsel %vm301, %v654, 0
      %v661 = vsel %vm317, %v656, 0
      %663 = vmatprep.subr.bf16.mxu0 0
      %664 = vmatpush1.bf16.msra.mxu0 0
      %665 = vmatprep.subr.bf16.mxu0 0
      %666 = vmatpush1.bf16.msra.mxu0 0
      %667 = vmatprep.subr.bf16.mxu0 0
      %668 = vmatpush1.bf16.msra.mxu0 0
      %669 = vmatprep.subr.bf16.mxu0 0
      %670 = vmatpush1.bf16.msra.mxu0 0
      %671 = vmatprep.subr.bf16.mxu0 0
      %672 = vmatpush1.bf16.msra.mxu0 0
      %673 = vmatprep.subr.bf16.mxu0 0
      %674 = vmatpush1.bf16.msra.mxu0 0
      %675 = vmatprep.subr.bf16.mxu0 0
      %676 = vmatpush1.bf16.msra.mxu0 0
      %677 = vmatprep.subr.bf16.mxu0 0
      %678 = vmatpush1.bf16.msra.mxu0 %v661
      %679 = vmatprep.subr.bf16.mxu0 0
      %680 = vmatpush2.bf16.msra.mxu0 0
      %681 = vmatprep.subr.bf16.mxu0 0
      %682 = vmatpush2.bf16.msra.mxu0 0
      %683 = vmatprep.subr.bf16.mxu0 0
      %684 = vmatpush2.bf16.msra.mxu0 0
      %685 = vmatprep.subr.bf16.mxu0 0
      %686 = vmatpush2.bf16.msra.mxu0 0
      %687 = vmatprep.subr.bf16.mxu0 0
      %688 = vmatpush2.bf16.msra.mxu0 0
      %689 = vmatprep.subr.bf16.mxu0 0
      %690 = vmatpush2.bf16.msra.mxu0 0
      %691 = vmatprep.subr.bf16.mxu0 0
      %692 = vmatpush2.bf16.msra.mxu0 0
      %693 = vmatprep.subr.bf16.mxu0 0
      %694 = vmatpush2.bf16.msra.mxu0 0
      %695 = vmatprep.mubr.bf16.mxu0 0
      %696 = vmatmul.mubr.bf16.gmra.mxu0 %v658
      %v697 = vpop.f32.mrf.mxu0
      %v698 = vadd.f32 0.0, %v697
      %v699 = vpop.f32.mrf.mxu0
      %v700 = vpop.f32.mrf.mxu0
      %v701 = vpop.f32.mrf.mxu0
      %702 = vdwg.mxu0
      %704 = vrot.lane.b32.xlu0 %v476, 32
      %v705 = vpop.permute.xlu0 %704
      %708 = vrot.lane.b32.xlu0 %v587, 64
      %v709 = vpop.permute.xlu0 %708
      %712 = vrot.lane.b32.xlu0 %v698, 96
      %v713 = vpop.permute.xlu0 %712
      %v715 = vsel %vm253, %v356, %v705
      %vm716 = vcmask 523264
      %v717 = vsel %vm716, %v715, %v709
      %vm718 = vcmask 785408
      %v719 = vsel %vm718, %v717, %v713
      %v720 = vpack.c.bf16 %v719, %v719
      %721 = vst [vmem:[%s248] sm:$0xf] %v720
      %p722 = scmp.lt.s32.totalorder %s18, 1
      %s723 = scalar_select %p722, %s18, 1
      %p724 = scmp.lt.s32.totalorder %s19, 0
      %s725 = scalar_select %p724, %s19, 0
      %s726 = sadd.s32 %s725, %s723
      %s727 = smul.addr %s726, 4
      %s728 = scalar_lea.vmem %s3, %s727
      // Predicated region
      $region33: #{transformer_lm_forward.27} parent=31 // pred_check
        %p729 = pneg %p126
      $region34: #{transformer_lm_forward.27} parent=31 // pred_check_branch
        %731 = sbr.rel (%p729) target = $region36
      $region35: #{transformer_lm_forward.27} parent=31 // pred_region
        _
      $region36: #{transformer_lm_forward.27} parent=31 // pred_fallthru
        _
    $region32: #{transformer_lm_forward.27} parent=5 // pred_fallthru
      _
    %p732 = scmp.le.s32.totalorder 2, %s9
    // Predicated region
    $region37: #{transformer_lm_forward.27} parent=5 // pred_check
      %p733 = pneg %p732
    $region38: #{transformer_lm_forward.27} parent=5 // pred_check_branch
      %735 = sbr.rel (%p733) target = $region40
    $region39: #{transformer_lm_forward.27} parent=5 // pred_region
      %s736 = ssub.s32 %s9, 2
      // Predicated region
      $region41: #{transformer_lm_forward.27} parent=39 // pred_check
        %p737 = pneg %p132
      $region42: #{transformer_lm_forward.27} parent=39 // pred_check_branch
        %739 = sbr.rel (%p737) target = $region44
      $region43: #{transformer_lm_forward.27} parent=39 // pred_region
        %p740 = scmp.lt.s32.totalorder %s20, 1
        %s741 = scalar_select %p740, %s20, 1
        %p742 = scmp.lt.s32.totalorder %s21, 0
        %s743 = scalar_select %p742, %s21, 0
        %s744 = sadd.s32 %s743, %s741
        %s745 = smul.addr %s744, 4
        %s746 = scalar_lea.vmem %s3, %s745
      $region44: #{transformer_lm_forward.27} parent=39 // pred_fallthru
        _
    $region40: #{transformer_lm_forward.27} parent=5 // pred_fallthru
      _
  $region6: #{transformer_lm_forward.27} parent=0 // loop_footer
    %s13 = sadd.s32 1, %s9
  $region7: #{transformer_lm_forward.27} parent=0 // loop_footer_branch
    %8 = sbr.rel target = $region3
  $region8: #{transformer_lm_forward.27} parent=0 // loop_exit
    _

// kernel: transformer_lm_forward.29
$region0: #{transformer_lm_forward.29}
  #allocation0 [shape = 'u32[]', space=smem, size = 0x4, offset = 0x4, fixed_abs, tag = 'smem constant byte address 0x4 - core index']
  #allocation1 [shape = 'u32[144,128]{1,0:T(1,128)}', space=vmem, size = 0x12000, scoped, tag = 'internal scratch']
  #allocation2 [shape = 'f32[16,128]{1,0:T(8,128)}', space=vmem, size = 0x2000, scoped, tag = 'scratch operand']
  %s0 = inlined_call_operand.vmem [shape: bf16[16,128], index: 0, kind: input, shape index: {}]
  %s1 = inlined_call_operand.vmem [shape: bf16[128,256], index: 1, kind: input, shape index: {}]
  %s2 = inlined_call_operand.vmem [shape: f32[1,256], index: 2, kind: input, shape index: {}]
  %s3 = inlined_call_operand.vmem [shape: bf16[256,128], index: 3, kind: input, shape index: {}]
  %s4 = inlined_call_operand.vmem [shape: f32[1,128], index: 4, kind: input, shape index: {}]
  %s5 = inlined_call_operand.vmem [shape: f32[1,128], index: 5, kind: input, shape index: {}]
  %s6 = inlined_call_operand.vmem [shape: f32[1,128], index: 6, kind: input, shape index: {}]
  %s7 = inlined_call_operand.vmem [shape: bf16[16,128], index: 7, kind: output, shape index: {}]
  %s8 = sld [smem:[#allocation0]]
  $region46: #{transformer_lm_forward.29} parent=0
    _
  %s10 = ssub.s32 1, %s8
  %s11 = scalar_select 0, %s10, %s8
  // Predicated region
  $region2: #{transformer_lm_forward.29} parent=0 // pred_check
    _
  $region3: #{transformer_lm_forward.29} parent=0 // pred_check_branch
    %13 = sbr.rel (0) target = $region5
  $region4: #{transformer_lm_forward.29} parent=0 // pred_region
    _
  $region5: #{transformer_lm_forward.29} parent=0 // pred_fallthru
    _
  // Predicated region
  $region6: #{transformer_lm_forward.29} parent=0 // pred_check
    _
  $region7: #{transformer_lm_forward.29} parent=0 // pred_check_branch
    %15 = sbr.rel (0) target = $region9
  $region8: #{transformer_lm_forward.29} parent=0 // pred_region
    _
  $region9: #{transformer_lm_forward.29} parent=0 // pred_fallthru
    _
  // Predicated region
  $region10: #{transformer_lm_forward.29} parent=0 // pred_check
    _
  $region11: #{transformer_lm_forward.29} parent=0 // pred_check_branch
    %17 = sbr.rel (0) target = $region13
  $region12: #{transformer_lm_forward.29} parent=0 // pred_region
    _
  $region13: #{transformer_lm_forward.29} parent=0 // pred_fallthru
    _
  // Predicated region
  $region14: #{transformer_lm_forward.29} parent=0 // pred_check
    _
  $region15: #{transformer_lm_forward.29} parent=0 // pred_check_branch
    %19 = sbr.rel (0) target = $region17
  $region16: #{transformer_lm_forward.29} parent=0 // pred_region
    _
  $region17: #{transformer_lm_forward.29} parent=0 // pred_fallthru
    _
  // Predicated region
  $region18: #{transformer_lm_forward.29} parent=0 // pred_check
    _
  $region19: #{transformer_lm_forward.29} parent=0 // pred_check_branch
    %21 = sbr.rel (0) target = $region21
  $region20: #{transformer_lm_forward.29} parent=0 // pred_region
    _
  $region21: #{transformer_lm_forward.29} parent=0 // pred_fallthru
    _
  // Predicated region
  $region22: #{transformer_lm_forward.29} parent=0 // pred_check
    _
  $region23: #{transformer_lm_forward.29} parent=0 // pred_check_branch
    %23 = sbr.rel (0) target = $region25
  $region24: #{transformer_lm_forward.29} parent=0 // pred_region
    _
  $region25: #{transformer_lm_forward.29} parent=0 // pred_fallthru
    _
  // Predicated region
  $region26: #{transformer_lm_forward.29} parent=0 // pred_check
    _
  $region27: #{transformer_lm_forward.29} parent=0 // pred_check_branch
    %25 = sbr.rel (0) target = $region29
  $region28: #{transformer_lm_forward.29} parent=0 // pred_region
    _
  $region29: #{transformer_lm_forward.29} parent=0 // pred_fallthru
    _
  %p27 = scmp.eq.s32.totalorder 0, 0
  // Predicated region
  $region30: #{transformer_lm_forward.29} parent=0 // pred_check
    %p28 = pneg %p27
  $region31: #{transformer_lm_forward.29} parent=0 // pred_check_branch
    %30 = sbr.rel (%p28) target = $region33
  $region32: #{transformer_lm_forward.29} parent=0 // pred_region
    %31 = vst [vmem:[#allocation2] sm:$0xff] 0.0
    %32 = vst [vmem:[#allocation2 + $0x8] sm:$0xff] 0.0
  $region33: #{transformer_lm_forward.29} parent=0 // pred_fallthru
    _
  %v33 = vld [vmem:[%s0] sm:$0xf]
  %v34 = vld [vmem:[%s0 + $0x4] sm:$0xf]
  %v35 = vld [vmem:[%s1] sm:$0xff]
  %v36 = vld [vmem:[%s1 + $0x8] sm:$0xff]
  %v37 = vld [vmem:[%s1 + $0x10] sm:$0xff]
  %v38 = vld [vmem:[%s1 + $0x18] sm:$0xff]
  %v39 = vld [vmem:[%s1 + $0x20] sm:$0xff]
  %v40 = vld [vmem:[%s1 + $0x28] sm:$0xff]
  %v41 = vld [vmem:[%s1 + $0x30] sm:$0xff]
  %v42 = vld [vmem:[%s1 + $0x38] sm:$0xff]
  %v43 = vld [vmem:[%s1 + $0x40] sm:$0xff]
  %v44 = vld [vmem:[%s1 + $0x48] sm:$0xff]
  %v45 = vld [vmem:[%s1 + $0x50] sm:$0xff]
  %v46 = vld [vmem:[%s1 + $0x58] sm:$0xff]
  %v47 = vld [vmem:[%s1 + $0x60] sm:$0xff]
  %v48 = vld [vmem:[%s1 + $0x68] sm:$0xff]
  %v49 = vld [vmem:[%s1 + $0x70] sm:$0xff]
  %v50 = vld [vmem:[%s1 + $0x78] sm:$0xff]
  %v51 = vld [vmem:[%s2] sm:$0x3]
  %v53 = vlaneseq
  %v54 = vshrl.u32 %v53, 7
  %v55 = vsub.s32 0, %v54
  %v56 = vrot.slane %v51, %v55
  %v57 = vlaneseq
  %v58 = vshrl.u32 %v57, 7
  %v59 = vsub.s32 1, %v58
  %v60 = vrot.slane %v51, %v59
  %v65 = vunpack.c.l.b16 %v33
  %v66 = vunpack.c.l.b16 %v34
  %v67 = vpack.c.b16 %v66, %v65
  %v85 = vunpack.c.l.b16 %v35
  %v86 = vunpack.c.h.b16 %v35
  %v87 = vunpack.c.l.b16 %v36
  %v88 = vunpack.c.h.b16 %v36
  %v89 = vunpack.c.l.b16 %v37
  %v90 = vunpack.c.h.b16 %v37
  %v91 = vunpack.c.l.b16 %v38
  %v92 = vunpack.c.h.b16 %v38
  %v93 = vunpack.c.l.b16 %v39
  %v94 = vunpack.c.h.b16 %v39
  %v95 = vunpack.c.l.b16 %v40
  %v96 = vunpack.c.h.b16 %v40
  %v97 = vunpack.c.l.b16 %v41
  %v98 = vunpack.c.h.b16 %v41
  %v99 = vunpack.c.l.b16 %v42
  %v100 = vunpack.c.h.b16 %v42
  %v101 = vunpack.c.l.b16 %v43
  %v102 = vunpack.c.h.b16 %v43
  %v103 = vunpack.c.l.b16 %v44
  %v104 = vunpack.c.h.b16 %v44
  %v105 = vunpack.c.l.b16 %v45
  %v106 = vunpack.c.h.b16 %v45
  %v107 = vunpack.c.l.b16 %v46
  %v108 = vunpack.c.h.b16 %v46
  %v109 = vunpack.c.l.b16 %v47
  %v110 = vunpack.c.h.b16 %v47
  %v111 = vunpack.c.l.b16 %v48
  %v112 = vunpack.c.h.b16 %v48
  %v113 = vunpack.c.l.b16 %v49
  %v114 = vunpack.c.h.b16 %v49
  %v115 = vunpack.c.l.b16 %v50
  %v116 = vunpack.c.h.b16 %v50
  %v117 = vpack.c.b16 %v87, %v85
  %v118 = vpack.c.b16 %v88, %v86
  %v119 = vpack.c.b16 %v91, %v89
  %v120 = vpack.c.b16 %v92, %v90
  %v121 = vpack.c.b16 %v95, %v93
  %v122 = vpack.c.b16 %v96, %v94
  %v123 = vpack.c.b16 %v99, %v97
  %v124 = vpack.c.b16 %v100, %v98
  %v125 = vpack.c.b16 %v103, %v101
  %v126 = vpack.c.b16 %v104, %v102
  %v127 = vpack.c.b16 %v107, %v105
  %v128 = vpack.c.b16 %v108, %v106
  %v129 = vpack.c.b16 %v111, %v109
  %v130 = vpack.c.b16 %v112, %v110
  %v131 = vpack.c.b16 %v115, %v113
  %v132 = vpack.c.b16 %v116, %v114
  %149 = vmatprep.subr.bf16.mxu0 %v132
  %150 = vmatpush1.bf16.msra.mxu0 %v131
  %151 = vmatprep.subr.bf16.mxu0 %v130
  %152 = vmatpush1.bf16.msra.mxu0 %v129
  %153 = vmatprep.subr.bf16.mxu0 %v128
  %154 = vmatpush1.bf16.msra.mxu0 %v127
  %155 = vmatprep.subr.bf16.mxu0 %v126
  %156 = vmatpush1.bf16.msra.mxu0 %v125
  %157 = vmatprep.subr.bf16.mxu0 %v124
  %158 = vmatpush1.bf16.msra.mxu0 %v123
  %159 = vmatprep.subr.bf16.mxu0 %v122
  %160 = vmatpush1.bf16.msra.mxu0 %v121
  %161 = vmatprep.subr.bf16.mxu0 %v120
  %162 = vmatpush1.bf16.msra.mxu0 %v119
  %163 = vmatprep.subr.bf16.mxu0 %v118
  %164 = vmatpush1.bf16.msra.mxu0 %v117
  %165 = vmatprep.subr.bf16.mxu0 0
  %166 = vmatpush2.bf16.msra.mxu0 0
  %167 = vmatprep.subr.bf16.mxu0 0
  %168 = vmatpush2.bf16.msra.mxu0 0
  %169 = vmatprep.subr.bf16.mxu0 0
  %170 = vmatpush2.bf16.msra.mxu0 0
  %171 = vmatprep.subr.bf16.mxu0 0
  %172 = vmatpush2.bf16.msra.mxu0 0
  %173 = vmatprep.subr.bf16.mxu0 0
  %174 = vmatpush2.bf16.msra.mxu0 0
  %175 = vmatprep.subr.bf16.mxu0 0
  %176 = vmatpush2.bf16.msra.mxu0 0
  %177 = vmatprep.subr.bf16.mxu0 0
  %178 = vmatpush2.bf16.msra.mxu0 0
  %179 = vmatprep.subr.bf16.mxu0 0
  %180 = vmatpush2.bf16.msra.mxu0 0
  %181 = vmatprep.mubr.bf16.mxu0 0
  %182 = vmatmul.mubr.bf16.gmra.mxu0 %v67
  %v183 = vpop.f32.mrf.mxu0
  %v184 = vadd.f32 %v56, %v183
  %v185 = vpop.f32.mrf.mxu0
  %v186 = vadd.f32 %v60, %v185
  %v187 = vpop.f32.mrf.mxu0
  %v188 = vadd.f32 %v56, %v187
  %v189 = vpop.f32.mrf.mxu0
  %v190 = vadd.f32 %v60, %v189
  %191 = vdwg.mxu0
  %v192 = vmax.f32 %v184, 0.0
  %v193 = vmax.f32 %v186, 0.0
  %v194 = vmax.f32 %v188, 0.0
  %v195 = vmax.f32 %v190, 0.0
  %v196 = vpack.c.bf16 %v194, %v192
  %v197 = vpack.c.bf16 %v195, %v193
  %v198 = vld [vmem:[#allocation2] sm:$0xff]
  %v199 = vld [vmem:[#allocation2 + $0x8] sm:$0xff]
  %v200 = vld [vmem:[%s3] sm:$0xf]
  %v201 = vld [vmem:[%s3 + $0x4] sm:$0xf]
  %v202 = vld [vmem:[%s3 + $0x8] sm:$0xf]
  %v203 = vld [vmem:[%s3 + $0xc] sm:$0xf]
  %v204 = vld [vmem:[%s3 + $0x10] sm:$0xf]
  %v205 = vld [vmem:[%s3 + $0x14] sm:$0xf]
  %v206 = vld [vmem:[%s3 + $0x18] sm:$0xf]
  %v207 = vld [vmem:[%s3 + $0x1c] sm:$0xf]
  %v208 = vld [vmem:[%s3 + $0x20] sm:$0xf]
  %v209 = vld [vmem:[%s3 + $0x24] sm:$0xf]
  %v210 = vld [vmem:[%s3 + $0x28] sm:$0xf]
  %v211 = vld [vmem:[%s3 + $0x2c] sm:$0xf]
  %v212 = vld [vmem:[%s3 + $0x30] sm:$0xf]
  %v213 = vld [vmem:[%s3 + $0x34] sm:$0xf]
  %v214 = vld [vmem:[%s3 + $0x38] sm:$0xf]
  %v215 = vld [vmem:[%s3 + $0x3c] sm:$0xf]
  %v216 = vld [vmem:[%s3 + $0x40] sm:$0xf]
  %v217 = vld [vmem:[%s3 + $0x44] sm:$0xf]
  %v218 = vld [vmem:[%s3 + $0x48] sm:$0xf]
  %v219 = vld [vmem:[%s3 + $0x4c] sm:$0xf]
  %v220 = vld [vmem:[%s3 + $0x50] sm:$0xf]
  %v221 = vld [vmem:[%s3 + $0x54] sm:$0xf]
  %v222 = vld [vmem:[%s3 + $0x58] sm:$0xf]
  %v223 = vld [vmem:[%s3 + $0x5c] sm:$0xf]
  %v224 = vld [vmem:[%s3 + $0x60] sm:$0xf]
  %v225 = vld [vmem:[%s3 + $0x64] sm:$0xf]
  %v226 = vld [vmem:[%s3 + $0x68] sm:$0xf]
  %v227 = vld [vmem:[%s3 + $0x6c] sm:$0xf]
  %v228 = vld [vmem:[%s3 + $0x70] sm:$0xf]
  %v229 = vld [vmem:[%s3 + $0x74] sm:$0xf]
  %v230 = vld [vmem:[%s3 + $0x78] sm:$0xf]
  %v231 = vld [vmem:[%s3 + $0x7c] sm:$0xf]
  %v264 = vunpack.c.l.b16 %v200
  %v265 = vunpack.c.l.b16 %v201
  %v266 = vunpack.c.l.b16 %v202
  %v267 = vunpack.c.l.b16 %v203
  %v268 = vunpack.c.l.b16 %v204
  %v269 = vunpack.c.l.b16 %v205
  %v270 = vunpack.c.l.b16 %v206
  %v271 = vunpack.c.l.b16 %v207
  %v272 = vunpack.c.l.b16 %v208
  %v273 = vunpack.c.l.b16 %v209
  %v274 = vunpack.c.l.b16 %v210
  %v275 = vunpack.c.l.b16 %v211
  %v276 = vunpack.c.l.b16 %v212
  %v277 = vunpack.c.l.b16 %v213
  %v278 = vunpack.c.l.b16 %v214
  %v279 = vunpack.c.l.b16 %v215
  %v280 = vunpack.c.l.b16 %v216
  %v281 = vunpack.c.l.b16 %v217
  %v282 = vunpack.c.l.b16 %v218
  %v283 = vunpack.c.l.b16 %v219
  %v284 = vunpack.c.l.b16 %v220
  %v285 = vunpack.c.l.b16 %v221
  %v286 = vunpack.c.l.b16 %v222
  %v287 = vunpack.c.l.b16 %v223
  %v288 = vunpack.c.l.b16 %v224
  %v289 = vunpack.c.l.b16 %v225
  %v290 = vunpack.c.l.b16 %v226
  %v291 = vunpack.c.l.b16 %v227
  %v292 = vunpack.c.l.b16 %v228
  %v293 = vunpack.c.l.b16 %v229
  %v294 = vunpack.c.l.b16 %v230
  %v295 = vunpack.c.l.b16 %v231
  %v296 = vpack.c.b16 %v265, %v264
  %v297 = vpack.c.b16 %v267, %v266
  %v298 = vpack.c.b16 %v269, %v268
  %v299 = vpack.c.b16 %v271, %v270
  %v300 = vpack.c.b16 %v273, %v272
  %v301 = vpack.c.b16 %v275, %v274
  %v302 = vpack.c.b16 %v277, %v276
  %v303 = vpack.c.b16 %v279, %v278
  %v304 = vpack.c.b16 %v281, %v280
  %v305 = vpack.c.b16 %v283, %v282
  %v306 = vpack.c.b16 %v285, %v284
  %v307 = vpack.c.b16 %v287, %v286
  %v308 = vpack.c.b16 %v289, %v288
  %v309 = vpack.c.b16 %v291, %v290
  %v310 = vpack.c.b16 %v293, %v292
  %v311 = vpack.c.b16 %v295, %v294
  %328 = vmatprep.subr.bf16.mxu0 0
  %329 = vmatpush1.bf16.msra.mxu0 %v303
  %330 = vmatprep.subr.bf16.mxu0 0
  %331 = vmatpush1.bf16.msra.mxu0 %v302
  %332 = vmatprep.subr.bf16.mxu0 0
  %333 = vmatpush1.bf16.msra.mxu0 %v301
  %334 = vmatprep.subr.bf16.mxu0 0
  %335 = vmatpush1.bf16.msra.mxu0 %v300
  %336 = vmatprep.subr.bf16.mxu0 0
  %337 = vmatpush1.bf16.msra.mxu0 %v299
  %338 = vmatprep.subr.bf16.mxu0 0
  %339 = vmatpush1.bf16.msra.mxu0 %v298
  %340 = vmatprep.subr.bf16.mxu0 0
  %341 = vmatpush1.bf16.msra.mxu0 %v297
  %342 = vmatprep.subr.bf16.mxu0 0
  %343 = vmatpush1.bf16.msra.mxu0 %v296
  %344 = vmatprep.subr.bf16.mxu0 0
  %345 = vmatpush2.bf16.msra.mxu0 %v311
  %346 = vmatprep.subr.bf16.mxu0 0
  %347 = vmatpush2.bf16.msra.mxu0 %v310
  %348 = vmatprep.subr.bf16.mxu0 0
  %349 = vmatpush2.bf16.msra.mxu0 %v309
  %350 = vmatprep.subr.bf16.mxu0 0
  %351 = vmatpush2.bf16.msra.mxu0 %v308
  %352 = vmatprep.subr.bf16.mxu0 0
  %353 = vmatpush2.bf16.msra.mxu0 %v307
  %354 = vmatprep.subr.bf16.mxu0 0
  %355 = vmatpush2.bf16.msra.mxu0 %v306
  %356 = vmatprep.subr.bf16.mxu0 0
  %357 = vmatpush2.bf16.msra.mxu0 %v305
  %358 = vmatprep.subr.bf16.mxu0 0
  %359 = vmatpush2.bf16.msra.mxu0 %v304
  %360 = vmatprep.mubr.bf16.mxu0 %v197
  %361 = vmatmul.mubr.bf16.gmra.mxu0 %v196
  %v362 = vpop.f32.mrf.mxu0
  %v363 = vadd.f32 0.0, %v362
  %v364 = vpop.f32.mrf.mxu0
  %v365 = vpop.f32.mrf.mxu0
  %v366 = vadd.f32 0.0, %v365
  %v367 = vpop.f32.mrf.mxu0
  %368 = vdwg.mxu0
  %v369 = vadd.f32 %v198, %v363
  %v370 = vadd.f32 %v199, %v366
  %371 = vst [vmem:[#allocation2] sm:$0xff] %v369
  %372 = vst [vmem:[#allocation2 + $0x8] sm:$0xff] %v370
  // Predicated region
  $region34: #{transformer_lm_forward.29} parent=0 // pred_check
    %p373 = pneg %p27
  $region35: #{transformer_lm_forward.29} parent=0 // pred_check_branch
    %375 = sbr.rel (%p373) target = $region37
  $region36: #{transformer_lm_forward.29} parent=0 // pred_region
    %v376 = vld [vmem:[#allocation2] sm:$0xff]
    %v377 = vld [vmem:[#allocation2 + $0x8] sm:$0xff]
    %v378 = vld [vmem:[%s4] sm:$0x1]
    %v380 = vlaneseq
    %v381 = vshrl.u32 %v380, 7
    %v382 = vsub.s32 0, %v381
    %v383 = vrot.slane %v378, %v382
    %v385 = vadd.f32 %v376, %v383
    %v386 = vadd.f32 %v377, %v383
    %v387 = vunpack.c.l.bf16 %v33
    %v388 = vunpack.c.l.bf16 %v34
    %v389 = vadd.f32 %v385, %v387
    %v390 = vadd.f32 %v386, %v388
    %391 = vadd.xlane.f32.xlu0 %v389
    %v392 = vpop.xlane.xlu0 %391
    %393 = vadd.xlane.f32.xlu0 %v390
    %v394 = vpop.xlane.xlu0 %393
    %v395 = vrcp.pop 128.0
    %v396 = vmul.f32 %v392, %v395
    %v397 = vmul.f32 %v394, %v395
    %v398 = vsub.f32 %v389, %v396
    %v399 = vsub.f32 %v390, %v397
    %v400 = vmul.f32 %v398, %v398
    %v401 = vmul.f32 %v399, %v399
    %402 = vadd.xlane.f32.xlu0 %v400
    %v403 = vpop.xlane.xlu0 %402
    %404 = vadd.xlane.f32.xlu0 %v401
    %v405 = vpop.xlane.xlu0 %404
    %v406 = vmul.f32 %v403, %v395
    %v407 = vmul.f32 %v405, %v395
    %v408 = vadd.f32 %v406, 1e-05
    %v409 = vadd.f32 %v407, 1e-05
    %v410 = vrsqrt.pop %v408
    %v411 = vrsqrt.pop %v409
    %v412 = vmul.f32 %v398, %v410
    %v413 = vmul.f32 %v399, %v411
    %v414 = vld [vmem:[%s5] sm:$0x1]
    %v416 = vlaneseq
    %v417 = vshrl.u32 %v416, 7
    %v418 = vsub.s32 0, %v417
    %v419 = vrot.slane %v414, %v418
    %v421 = vmul.f32 %v412, %v419
    %v422 = vmul.f32 %v413, %v419
    %v423 = vld [vmem:[%s6] sm:$0x1]
    %v425 = vlaneseq
    %v426 = vshrl.u32 %v425, 7
    %v427 = vsub.s32 0, %v426
    %v428 = vrot.slane %v423, %v427
    %v430 = vadd.f32 %v421, %v428
    %v431 = vadd.f32 %v422, %v428
    %v432 = vpack.c.bf16 %v431, %v430
    %v434 = vunpack.c.l.b16 %v432
    %v435 = vunpack.c.h.b16 %v432
    %v436 = vpack.c.b16 %v434, %v434
    %v437 = vpack.c.b16 %v435, %v435
    %440 = vst [vmem:[%s7] sm:$0xf] %v436
    %441 = vst [vmem:[%s7 + $0x4] sm:$0xf] %v437
  $region37: #{transformer_lm_forward.29} parent=0 // pred_fallthru
    _
  // Predicated region
  $region38: #{transformer_lm_forward.29} parent=0 // pred_check
    _
  $region39: #{transformer_lm_forward.29} parent=0 // pred_check_branch
    %443 = sbr.rel (0) target = $region41
  $region40: #{transformer_lm_forward.29} parent=0 // pred_region
    _
  $region41: #{transformer_lm_forward.29} parent=0 // pred_fallthru
    _
  // Predicated region
  $region42: #{transformer_lm_forward.29} parent=0 // pred_check
    _
  $region43: #{transformer_lm_forward.29} parent=0 // pred_check_branch
    %445 = sbr.rel (0) target = $region45
  $region44: #{transformer_lm_forward.29} parent=0 // pred_region
    _
  $region45: #{transformer_lm_forward.29} parent=0 // pred_fallthru
    _

// kernel: transformer_lm_forward.34
$region0: #{transformer_lm_forward.34}
  #allocation0 [shape = 'u32[]', space=smem, size = 0x4, offset = 0x4, fixed_abs, tag = 'smem constant byte address 0x4 - core index']
  #allocation1 [shape = 'u32[144,128]{1,0:T(1,128)}', space=vmem, size = 0x12000, scoped, tag = 'internal scratch']
  %s0 = inlined_call_operand.vmem [shape: bf16[16,128], index: 0, kind: input, shape index: {}]
  %s1 = inlined_call_operand.vmem [shape: f32[1,128], index: 1, kind: input, shape index: {}]
  %s2 = inlined_call_operand.vmem [shape: f32[1,128], index: 2, kind: input, shape index: {}]
  %s3 = inlined_call_operand.vmem [shape: bf16[16,128], index: 3, kind: output, shape index: {}]
  %s4 = sld [smem:[#allocation0]]
  $region22: #{transformer_lm_forward.34} parent=0
    _
  %s6 = ssub.s32 1, %s4
  %s7 = scalar_select 0, %s6, %s4
  // Predicated region
  $region2: #{transformer_lm_forward.34} parent=0 // pred_check
    _
  $region3: #{transformer_lm_forward.34} parent=0 // pred_check_branch
    %9 = sbr.rel (0) target = $region5
  $region4: #{transformer_lm_forward.34} parent=0 // pred_region
    _
  $region5: #{transformer_lm_forward.34} parent=0 // pred_fallthru
    _
  // Predicated region
  $region6: #{transformer_lm_forward.34} parent=0 // pred_check
    _
  $region7: #{transformer_lm_forward.34} parent=0 // pred_check_branch
    %11 = sbr.rel (0) target = $region9
  $region8: #{transformer_lm_forward.34} parent=0 // pred_region
    _
  $region9: #{transformer_lm_forward.34} parent=0 // pred_fallthru
    _
  // Predicated region
  $region10: #{transformer_lm_forward.34} parent=0 // pred_check
    _
  $region11: #{transformer_lm_forward.34} parent=0 // pred_check_branch
    %13 = sbr.rel (0) target = $region13
  $region12: #{transformer_lm_forward.34} parent=0 // pred_region
    _
  $region13: #{transformer_lm_forward.34} parent=0 // pred_fallthru
    _
  %v14 = vld [vmem:[%s0] sm:$0xf]
  %v15 = vld [vmem:[%s0 + $0x4] sm:$0xf]
  %v16 = vunpack.c.l.bf16 %v14
  %v17 = vunpack.c.l.bf16 %v15
  %18 = vadd.xlane.f32.xlu0 %v16
  %v19 = vpop.xlane.xlu0 %18
  %20 = vadd.xlane.f32.xlu0 %v17
  %v21 = vpop.xlane.xlu0 %20
  %v22 = vrcp.pop 128.0
  %v23 = vmul.f32 %v19, %v22
  %v24 = vmul.f32 %v21, %v22
  %v25 = vsub.f32 %v16, %v23
  %v26 = vsub.f32 %v17, %v24
  %v27 = vmul.f32 %v25, %v25
  %v28 = vmul.f32 %v26, %v26
  %29 = vadd.xlane.f32.xlu0 %v27
  %v30 = vpop.xlane.xlu0 %29
  %31 = vadd.xlane.f32.xlu0 %v28
  %v32 = vpop.xlane.xlu0 %31
  %v33 = vmul.f32 %v30, %v22
  %v34 = vmul.f32 %v32, %v22
  %v35 = vadd.f32 %v33, 1e-05
  %v36 = vadd.f32 %v34, 1e-05
  %v37 = vrsqrt.pop %v35
  %v38 = vrsqrt.pop %v36
  %v39 = vmul.f32 %v25, %v37
  %v40 = vmul.f32 %v26, %v38
  %v41 = vld [vmem:[%s1] sm:$0x1]
  %v43 = vlaneseq
  %v44 = vshrl.u32 %v43, 7
  %v45 = vsub.s32 0, %v44
  %v46 = vrot.slane %v41, %v45
  %v48 = vmul.f32 %v39, %v46
  %v49 = vmul.f32 %v40, %v46
  %v50 = vld [vmem:[%s2] sm:$0x1]
  %v52 = vlaneseq
  %v53 = vshrl.u32 %v52, 7
  %v54 = vsub.s32 0, %v53
  %v55 = vrot.slane %v50, %v54
  %v57 = vadd.f32 %v48, %v55
  %v58 = vadd.f32 %v49, %v55
  %v59 = vpack.c.bf16 %v58, %v57
  %v61 = vunpack.c.l.b16 %v59
  %v62 = vunpack.c.h.b16 %v59
  %v63 = vpack.c.b16 %v61, %v61
  %v64 = vpack.c.b16 %v62, %v62
  %67 = vst [vmem:[%s3] sm:$0xf] %v63
  %68 = vst [vmem:[%s3 + $0x4] sm:$0xf] %v64
  // Predicated region
  $region14: #{transformer_lm_forward.34} parent=0 // pred_check
    _
  $region15: #{transformer_lm_forward.34} parent=0 // pred_check_branch
    %70 = sbr.rel (0) target = $region17
  $region16: #{transformer_lm_forward.34} parent=0 // pred_region
    _
  $region17: #{transformer_lm_forward.34} parent=0 // pred_fallthru
    _
  // Predicated region
  $region18: #{transformer_lm_forward.34} parent=0 // pred_check
    _
  $region19: #{transformer_lm_forward.34} parent=0 // pred_check_branch
    %72 = sbr.rel (0) target = $region21
  $region20: #{transformer_lm_forward.34} parent=0 // pred_region
    _
  $region21: #{transformer_lm_forward.34} parent=0 // pred_fallthru
    _

// kernel: transformer_lm_forward.39
$region0: #{transformer_lm_forward.39}
  #allocation0 [shape = 'u32[]', space=smem, size = 0x4, offset = 0x4, fixed_abs, tag = 'smem constant byte address 0x4 - core index']
  #allocation1 [shape = 'u32[144,128]{1,0:T(1,128)}', space=vmem, size = 0x12000, scoped, tag = 'internal scratch']
  #allocation2 [shape = 'f32[16,256]{1,0:T(8,128)}', space=vmem, size = 0x4000, scoped, tag = 'scratch operand']
  %s0 = inlined_call_operand.vmem [shape: bf16[16,128], index: 0, kind: input, shape index: {}]
  %s1 = inlined_call_operand.vmem [shape: bf16[128,256], index: 1, kind: input, shape index: {}]
  %s2 = inlined_call_operand.vmem [shape: f32[1,256], index: 2, kind: input, shape index: {}]
  %s3 = inlined_call_operand.vmem [shape: bf16[16,256], index: 3, kind: output, shape index: {}]
  %s4 = sld [smem:[#allocation0]]
  $region30: #{transformer_lm_forward.39} parent=0
    _
  %s6 = ssub.s32 1, %s4
  %s7 = scalar_select 0, %s6, %s4
  // Predicated region
  $region2: #{transformer_lm_forward.39} parent=0 // pred_check
    _
  $region3: #{transformer_lm_forward.39} parent=0 // pred_check_branch
    %9 = sbr.rel (0) target = $region5
  $region4: #{transformer_lm_forward.39} parent=0 // pred_region
    _
  $region5: #{transformer_lm_forward.39} parent=0 // pred_fallthru
    _
  // Predicated region
  $region6: #{transformer_lm_forward.39} parent=0 // pred_check
    _
  $region7: #{transformer_lm_forward.39} parent=0 // pred_check_branch
    %11 = sbr.rel (0) target = $region9
  $region8: #{transformer_lm_forward.39} parent=0 // pred_region
    _
  $region9: #{transformer_lm_forward.39} parent=0 // pred_fallthru
    _
  // Predicated region
  $region10: #{transformer_lm_forward.39} parent=0 // pred_check
    _
  $region11: #{transformer_lm_forward.39} parent=0 // pred_check_branch
    %13 = sbr.rel (0) target = $region13
  $region12: #{transformer_lm_forward.39} parent=0 // pred_region
    _
  $region13: #{transformer_lm_forward.39} parent=0 // pred_fallthru
    _
  %p15 = scmp.eq.s32.totalorder 0, 0
  // Predicated region
  $region14: #{transformer_lm_forward.39} parent=0 // pred_check
    %p16 = pneg %p15
  $region15: #{transformer_lm_forward.39} parent=0 // pred_check_branch
    %18 = sbr.rel (%p16) target = $region17
  $region16: #{transformer_lm_forward.39} parent=0 // pred_region
    %19 = vst [vmem:[#allocation2] sm:$0xff] 0.0
    %20 = vst [vmem:[#allocation2 + $0x8] sm:$0xff] 0.0
    %21 = vst [vmem:[#allocation2 + $0x10] sm:$0xff] 0.0
    %22 = vst [vmem:[#allocation2 + $0x18] sm:$0xff] 0.0
  $region17: #{transformer_lm_forward.39} parent=0 // pred_fallthru
    _
  %v23 = vld [vmem:[#allocation2] sm:$0xff]
  %v24 = vld [vmem:[#allocation2 + $0x8] sm:$0xff]
  %v25 = vld [vmem:[#allocation2 + $0x10] sm:$0xff]
  %v26 = vld [vmem:[#allocation2 + $0x18] sm:$0xff]
  %v27 = vld [vmem:[%s0] sm:$0xf]
  %v28 = vld [vmem:[%s0 + $0x4] sm:$0xf]
  %v29 = vld [vmem:[%s1] sm:$0xff]
  %v30 = vld [vmem:[%s1 + $0x8] sm:$0xff]
  %v31 = vld [vmem:[%s1 + $0x10] sm:$0xff]
  %v32 = vld [vmem:[%s1 + $0x18] sm:$0xff]
  %v33 = vld [vmem:[%s1 + $0x20] sm:$0xff]
  %v34 = vld [vmem:[%s1 + $0x28] sm:$0xff]
  %v35 = vld [vmem:[%s1 + $0x30] sm:$0xff]
  %v36 = vld [vmem:[%s1 + $0x38] sm:$0xff]
  %v37 = vld [vmem:[%s1 + $0x40] sm:$0xff]
  %v38 = vld [vmem:[%s1 + $0x48] sm:$0xff]
  %v39 = vld [vmem:[%s1 + $0x50] sm:$0xff]
  %v40 = vld [vmem:[%s1 + $0x58] sm:$0xff]
  %v41 = vld [vmem:[%s1 + $0x60] sm:$0xff]
  %v42 = vld [vmem:[%s1 + $0x68] sm:$0xff]
  %v43 = vld [vmem:[%s1 + $0x70] sm:$0xff]
  %v44 = vld [vmem:[%s1 + $0x78] sm:$0xff]
  %v47 = vunpack.c.l.b16 %v27
  %v48 = vunpack.c.l.b16 %v28
  %v49 = vpack.c.b16 %v48, %v47
  %v67 = vunpack.c.l.b16 %v29
  %v68 = vunpack.c.h.b16 %v29
  %v69 = vunpack.c.l.b16 %v30
  %v70 = vunpack.c.h.b16 %v30
  %v71 = vunpack.c.l.b16 %v31
  %v72 = vunpack.c.h.b16 %v31
  %v73 = vunpack.c.l.b16 %v32
  %v74 = vunpack.c.h.b16 %v32
  %v75 = vunpack.c.l.b16 %v33
  %v76 = vunpack.c.h.b16 %v33
  %v77 = vunpack.c.l.b16 %v34
  %v78 = vunpack.c.h.b16 %v34
  %v79 = vunpack.c.l.b16 %v35
  %v80 = vunpack.c.h.b16 %v35
  %v81 = vunpack.c.l.b16 %v36
  %v82 = vunpack.c.h.b16 %v36
  %v83 = vunpack.c.l.b16 %v37
  %v84 = vunpack.c.h.b16 %v37
  %v85 = vunpack.c.l.b16 %v38
  %v86 = vunpack.c.h.b16 %v38
  %v87 = vunpack.c.l.b16 %v39
  %v88 = vunpack.c.h.b16 %v39
  %v89 = vunpack.c.l.b16 %v40
  %v90 = vunpack.c.h.b16 %v40
  %v91 = vunpack.c.l.b16 %v41
  %v92 = vunpack.c.h.b16 %v41
  %v93 = vunpack.c.l.b16 %v42
  %v94 = vunpack.c.h.b16 %v42
  %v95 = vunpack.c.l.b16 %v43
  %v96 = vunpack.c.h.b16 %v43
  %v97 = vunpack.c.l.b16 %v44
  %v98 = vunpack.c.h.b16 %v44
  %v99 = vpack.c.b16 %v69, %v67
  %v100 = vpack.c.b16 %v70, %v68
  %v101 = vpack.c.b16 %v73, %v71
  %v102 = vpack.c.b16 %v74, %v72
  %v103 = vpack.c.b16 %v77, %v75
  %v104 = vpack.c.b16 %v78, %v76
  %v105 = vpack.c.b16 %v81, %v79
  %v106 = vpack.c.b16 %v82, %v80
  %v107 = vpack.c.b16 %v85, %v83
  %v108 = vpack.c.b16 %v86, %v84
  %v109 = vpack.c.b16 %v89, %v87
  %v110 = vpack.c.b16 %v90, %v88
  %v111 = vpack.c.b16 %v93, %v91
  %v112 = vpack.c.b16 %v94, %v92
  %v113 = vpack.c.b16 %v97, %v95
  %v114 = vpack.c.b16 %v98, %v96
  %131 = vmatprep.subr.bf16.mxu0 %v114
  %132 = vmatpush1.bf16.msra.mxu0 %v113
  %133 = vmatprep.subr.bf16.mxu0 %v112
  %134 = vmatpush1.bf16.msra.mxu0 %v111
  %135 = vmatprep.subr.bf16.mxu0 %v110
  %136 = vmatpush1.bf16.msra.mxu0 %v109
  %137 = vmatprep.subr.bf16.mxu0 %v108
  %138 = vmatpush1.bf16.msra.mxu0 %v107
  %139 = vmatprep.subr.bf16.mxu0 %v106
  %140 = vmatpush1.bf16.msra.mxu0 %v105
  %141 = vmatprep.subr.bf16.mxu0 %v104
  %142 = vmatpush1.bf16.msra.mxu0 %v103
  %143 = vmatprep.subr.bf16.mxu0 %v102
  %144 = vmatpush1.bf16.msra.mxu0 %v101
  %145 = vmatprep.subr.bf16.mxu0 %v100
  %146 = vmatpush1.bf16.msra.mxu0 %v99
  %147 = vmatprep.subr.bf16.mxu0 0
  %148 = vmatpush2.bf16.msra.mxu0 0
  %149 = vmatprep.subr.bf16.mxu0 0
  %150 = vmatpush2.bf16.msra.mxu0 0
  %151 = vmatprep.subr.bf16.mxu0 0
  %152 = vmatpush2.bf16.msra.mxu0 0
  %153 = vmatprep.subr.bf16.mxu0 0
  %154 = vmatpush2.bf16.msra.mxu0 0
  %155 = vmatprep.subr.bf16.mxu0 0
  %156 = vmatpush2.bf16.msra.mxu0 0
  %157 = vmatprep.subr.bf16.mxu0 0
  %158 = vmatpush2.bf16.msra.mxu0 0
  %159 = vmatprep.subr.bf16.mxu0 0
  %160 = vmatpush2.bf16.msra.mxu0 0
  %161 = vmatprep.subr.bf16.mxu0 0
  %162 = vmatpush2.bf16.msra.mxu0 0
  %163 = vmatprep.mubr.bf16.mxu0 0
  %164 = vmatmul.mubr.bf16.gmra.mxu0 %v49
  %v165 = vpop.f32.mrf.mxu0
  %v166 = vadd.f32 0.0, %v165
  %v167 = vpop.f32.mrf.mxu0
  %v168 = vadd.f32 0.0, %v167
  %v169 = vpop.f32.mrf.mxu0
  %v170 = vadd.f32 0.0, %v169
  %v171 = vpop.f32.mrf.mxu0
  %v172 = vadd.f32 0.0, %v171
  %173 = vdwg.mxu0
  %v174 = vadd.f32 %v23, %v166
  %v175 = vadd.f32 %v24, %v168
  %v176 = vadd.f32 %v25, %v170
  %v177 = vadd.f32 %v26, %v172
  %178 = vst [vmem:[#allocation2] sm:$0xff] %v174
  %179 = vst [vmem:[#allocation2 + $0x8] sm:$0xff] %v175
  %180 = vst [vmem:[#allocation2 + $0x10] sm:$0xff] %v176
  %181 = vst [vmem:[#allocation2 + $0x18] sm:$0xff] %v177
  // Predicated region
  $region18: #{transformer_lm_forward.39} parent=0 // pred_check
    %p182 = pneg %p15
  $region19: #{transformer_lm_forward.39} parent=0 // pred_check_branch
    %184 = sbr.rel (%p182) target = $region21
  $region20: #{transformer_lm_forward.39} parent=0 // pred_region
    %v185 = vld [vmem:[#allocation2] sm:$0xff]
    %v186 = vld [vmem:[#allocation2 + $0x8] sm:$0xff]
    %v187 = vld [vmem:[#allocation2 + $0x10] sm:$0xff]
    %v188 = vld [vmem:[#allocation2 + $0x18] sm:$0xff]
    %v189 = vld [vmem:[%s2] sm:$0x3]
    %v191 = vlaneseq
    %v192 = vshrl.u32 %v191, 7
    %v193 = vsub.s32 0, %v192
    %v194 = vrot.slane %v189, %v193
    %v195 = vlaneseq
    %v196 = vshrl.u32 %v195, 7
    %v197 = vsub.s32 1, %v196
    %v198 = vrot.slane %v189, %v197
    %v201 = vadd.f32 %v185, %v194
    %v202 = vadd.f32 %v186, %v198
    %v203 = vadd.f32 %v187, %v194
    %v204 = vadd.f32 %v188, %v198
    %v205 = vpack.c.bf16 %v203, %v201
    %v206 = vpack.c.bf16 %v204, %v202
    %v209 = vunpack.c.l.b16 %v205
    %v210 = vunpack.c.l.b16 %v206
    %v211 = vunpack.c.h.b16 %v205
    %v212 = vunpack.c.h.b16 %v206
    %v213 = vpack.c.b16 %v210, %v209
    %v214 = vpack.c.b16 %v212, %v211
    %217 = vst [vmem:[%s3] sm:$0xff] %v213
    %218 = vst [vmem:[%s3 + $0x8] sm:$0xff] %v214
  $region21: #{transformer_lm_forward.39} parent=0 // pred_fallthru
    _
  // Predicated region
  $region22: #{transformer_lm_forward.39} parent=0 // pred_check
    _
  $region23: #{transformer_lm_forward.39} parent=0 // pred_check_branch
    %220 = sbr.rel (0) target = $region25
  $region24: #{transformer_lm_forward.39} parent=0 // pred_region
    _
  $region25: #{transformer_lm_forward.39} parent=0 // pred_fallthru
    _
  // Predicated region
  $region26: #{transformer_lm_forward.39} parent=0 // pred_check
    _
  $region27: #{transformer_lm_forward.39} parent=0 // pred_check_branch
    %222 = sbr.rel (0) target = $region29
  $region28: #{transformer_lm_forward.39} parent=0 // pred_region
    _
  $region29: #{transformer_lm_forward.39} parent=0 // pred_fallthru
    _

// kernel: transformer_lm_forward.38
$region0: #{transformer_lm_forward.38}
  #allocation0 [shape = 'u32[]', space=smem, size = 0x4, offset = 0x4, fixed_abs, tag = 'smem constant byte address 0x4 - core index']
  #allocation1 [shape = 'u32[144,128]{1,0:T(1,128)}', space=vmem, size = 0x12000, scoped, tag = 'internal scratch']
  #allocation2 [shape = 'f32[16,128]{1,0:T(8,128)}', space=vmem, size = 0x2000, scoped, tag = 'scratch operand']
  %s0 = inlined_call_operand.vmem [shape: bf16[16,128], index: 0, kind: input, shape index: {}]
  %s1 = inlined_call_operand.vmem [shape: bf16[128,128], index: 1, kind: input, shape index: {}]
  %s2 = inlined_call_operand.vmem [shape: f32[1,128], index: 2, kind: input, shape index: {}]
  %s3 = inlined_call_operand.vmem [shape: bf16[16,128], index: 3, kind: output, shape index: {}]
  %s4 = sld [smem:[#allocation0]]
  $region30: #{transformer_lm_forward.38} parent=0
    _
  %s6 = ssub.s32 1, %s4
  %s7 = scalar_select 0, %s6, %s4
  // Predicated region
  $region2: #{transformer_lm_forward.38} parent=0 // pred_check
    _
  $region3: #{transformer_lm_forward.38} parent=0 // pred_check_branch
    %9 = sbr.rel (0) target = $region5
  $region4: #{transformer_lm_forward.38} parent=0 // pred_region
    _
  $region5: #{transformer_lm_forward.38} parent=0 // pred_fallthru
    _
  // Predicated region
  $region6: #{transformer_lm_forward.38} parent=0 // pred_check
    _
  $region7: #{transformer_lm_forward.38} parent=0 // pred_check_branch
    %11 = sbr.rel (0) target = $region9
  $region8: #{transformer_lm_forward.38} parent=0 // pred_region
    _
  $region9: #{transformer_lm_forward.38} parent=0 // pred_fallthru
    _
  // Predicated region
  $region10: #{transformer_lm_forward.38} parent=0 // pred_check
    _
  $region11: #{transformer_lm_forward.38} parent=0 // pred_check_branch
    %13 = sbr.rel (0) target = $region13
  $region12: #{transformer_lm_forward.38} parent=0 // pred_region
    _
  $region13: #{transformer_lm_forward.38} parent=0 // pred_fallthru
    _
  %p15 = scmp.eq.s32.totalorder 0, 0
  // Predicated region
  $region14: #{transformer_lm_forward.38} parent=0 // pred_check
    %p16 = pneg %p15
  $region15: #{transformer_lm_forward.38} parent=0 // pred_check_branch
    %18 = sbr.rel (%p16) target = $region17
  $region16: #{transformer_lm_forward.38} parent=0 // pred_region
    %19 = vst [vmem:[#allocation2] sm:$0xff] 0.0
    %20 = vst [vmem:[#allocation2 + $0x8] sm:$0xff] 0.0
  $region17: #{transformer_lm_forward.38} parent=0 // pred_fallthru
    _
  %v21 = vld [vmem:[#allocation2] sm:$0xff]
  %v22 = vld [vmem:[#allocation2 + $0x8] sm:$0xff]
  %v23 = vld [vmem:[%s0] sm:$0xf]
  %v24 = vld [vmem:[%s0 + $0x4] sm:$0xf]
  %v25 = vld [vmem:[%s1] sm:$0xf]
  %v26 = vld [vmem:[%s1 + $0x4] sm:$0xf]
  %v27 = vld [vmem:[%s1 + $0x8] sm:$0xf]
  %v28 = vld [vmem:[%s1 + $0xc] sm:$0xf]
  %v29 = vld [vmem:[%s1 + $0x10] sm:$0xf]
  %v30 = vld [vmem:[%s1 + $0x14] sm:$0xf]
  %v31 = vld [vmem:[%s1 + $0x18] sm:$0xf]
  %v32 = vld [vmem:[%s1 + $0x1c] sm:$0xf]
  %v33 = vld [vmem:[%s1 + $0x20] sm:$0xf]
  %v34 = vld [vmem:[%s1 + $0x24] sm:$0xf]
  %v35 = vld [vmem:[%s1 + $0x28] sm:$0xf]
  %v36 = vld [vmem:[%s1 + $0x2c] sm:$0xf]
  %v37 = vld [vmem:[%s1 + $0x30] sm:$0xf]
  %v38 = vld [vmem:[%s1 + $0x34] sm:$0xf]
  %v39 = vld [vmem:[%s1 + $0x38] sm:$0xf]
  %v40 = vld [vmem:[%s1 + $0x3c] sm:$0xf]
  %v43 = vunpack.c.l.b16 %v23
  %v44 = vunpack.c.l.b16 %v24
  %v45 = vpack.c.b16 %v44, %v43
  %v63 = vunpack.c.l.b16 %v25
  %v64 = vunpack.c.l.b16 %v26
  %v65 = vunpack.c.l.b16 %v27
  %v66 = vunpack.c.l.b16 %v28
  %v67 = vunpack.c.l.b16 %v29
  %v68 = vunpack.c.l.b16 %v30
  %v69 = vunpack.c.l.b16 %v31
  %v70 = vunpack.c.l.b16 %v32
  %v71 = vunpack.c.l.b16 %v33
  %v72 = vunpack.c.l.b16 %v34
  %v73 = vunpack.c.l.b16 %v35
  %v74 = vunpack.c.l.b16 %v36
  %v75 = vunpack.c.l.b16 %v37
  %v76 = vunpack.c.l.b16 %v38
  %v77 = vunpack.c.l.b16 %v39
  %v78 = vunpack.c.l.b16 %v40
  %v79 = vpack.c.b16 %v64, %v63
  %v80 = vpack.c.b16 %v66, %v65
  %v81 = vpack.c.b16 %v68, %v67
  %v82 = vpack.c.b16 %v70, %v69
  %v83 = vpack.c.b16 %v72, %v71
  %v84 = vpack.c.b16 %v74, %v73
  %v85 = vpack.c.b16 %v76, %v75
  %v86 = vpack.c.b16 %v78, %v77
  %95 = vmatprep.subr.bf16.mxu0 0
  %96 = vmatpush1.bf16.msra.mxu0 %v86
  %97 = vmatprep.subr.bf16.mxu0 0
  %98 = vmatpush1.bf16.msra.mxu0 %v85
  %99 = vmatprep.subr.bf16.mxu0 0
  %100 = vmatpush1.bf16.msra.mxu0 %v84
  %101 = vmatprep.subr.bf16.mxu0 0
  %102 = vmatpush1.bf16.msra.mxu0 %v83
  %103 = vmatprep.subr.bf16.mxu0 0
  %104 = vmatpush1.bf16.msra.mxu0 %v82
  %105 = vmatprep.subr.bf16.mxu0 0
  %106 = vmatpush1.bf16.msra.mxu0 %v81
  %107 = vmatprep.subr.bf16.mxu0 0
  %108 = vmatpush1.bf16.msra.mxu0 %v80
  %109 = vmatprep.subr.bf16.mxu0 0
  %110 = vmatpush1.bf16.msra.mxu0 %v79
  %111 = vmatprep.subr.bf16.mxu0 0
  %112 = vmatpush2.bf16.msra.mxu0 0
  %113 = vmatprep.subr.bf16.mxu0 0
  %114 = vmatpush2.bf16.msra.mxu0 0
  %115 = vmatprep.subr.bf16.mxu0 0
  %116 = vmatpush2.bf16.msra.mxu0 0
  %117 = vmatprep.subr.bf16.mxu0 0
  %118 = vmatpush2.bf16.msra.mxu0 0
  %119 = vmatprep.subr.bf16.mxu0 0
  %120 = vmatpush2.bf16.msra.mxu0 0
  %121 = vmatprep.subr.bf16.mxu0 0
  %122 = vmatpush2.bf16.msra.mxu0 0
  %123 = vmatprep.subr.bf16.mxu0 0
  %124 = vmatpush2.bf16.msra.mxu0 0
  %125 = vmatprep.subr.bf16.mxu0 0
  %126 = vmatpush2.bf16.msra.mxu0 0
  %127 = vmatprep.mubr.bf16.mxu0 0
  %128 = vmatmul.mubr.bf16.gmra.mxu0 %v45
  %v129 = vpop.f32.mrf.mxu0
  %v130 = vadd.f32 0.0, %v129
  %v131 = vpop.f32.mrf.mxu0
  %v132 = vpop.f32.mrf.mxu0
  %v133 = vadd.f32 0.0, %v132
  %v134 = vpop.f32.mrf.mxu0
  %135 = vdwg.mxu0
  %v136 = vadd.f32 %v21, %v130
  %v137 = vadd.f32 %v22, %v133
  %138 = vst [vmem:[#allocation2] sm:$0xff] %v136
  %139 = vst [vmem:[#allocation2 + $0x8] sm:$0xff] %v137
  // Predicated region
  $region18: #{transformer_lm_forward.38} parent=0 // pred_check
    %p140 = pneg %p15
  $region19: #{transformer_lm_forward.38} parent=0 // pred_check_branch
    %142 = sbr.rel (%p140) target = $region21
  $region20: #{transformer_lm_forward.38} parent=0 // pred_region
    %v143 = vld [vmem:[#allocation2] sm:$0xff]
    %v144 = vld [vmem:[#allocation2 + $0x8] sm:$0xff]
    %v145 = vld [vmem:[%s2] sm:$0x1]
    %v147 = vlaneseq
    %v148 = vshrl.u32 %v147, 7
    %v149 = vsub.s32 0, %v148
    %v150 = vrot.slane %v145, %v149
    %v152 = vadd.f32 %v143, %v150
    %v153 = vadd.f32 %v144, %v150
    %v154 = vpack.c.bf16 %v153, %v152
    %v156 = vunpack.c.l.b16 %v154
    %v157 = vunpack.c.h.b16 %v154
    %v158 = vpack.c.b16 %v156, %v156
    %v159 = vpack.c.b16 %v157, %v157
    %162 = vst [vmem:[%s3] sm:$0xf] %v158
    %163 = vst [vmem:[%s3 + $0x4] sm:$0xf] %v159
  $region21: #{transformer_lm_forward.38} parent=0 // pred_fallthru
    _
  // Predicated region
  $region22: #{transformer_lm_forward.38} parent=0 // pred_check
    _
  $region23: #{transformer_lm_forward.38} parent=0 // pred_check_branch
    %165 = sbr.rel (0) target = $region25
  $region24: #{transformer_lm_forward.38} parent=0 // pred_region
    _
  $region25: #{transformer_lm_forward.38} parent=0 // pred_fallthru
    _
  // Predicated region
  $region26: #{transformer_lm_forward.38} parent=0 // pred_check
    _
  $region27: #{transformer_lm_forward.38} parent=0 // pred_check_branch
    %167 = sbr.rel (0) target = $region29
  $region28: #{transformer_lm_forward.38} parent=0 // pred_region
    _
  $region29: #{transformer_lm_forward.38} parent=0 // pred_fallthru
    _

// kernel: transformer_lm_forward.40
$region0: #{transformer_lm_forward.40}
  #allocation0 [shape = 'u32[]', space=smem, size = 0x4, offset = 0x4, fixed_abs, tag = 'smem constant byte address 0x4 - core index']
  #allocation1 [shape = 'u32[144,128]{1,0:T(1,128)}', space=vmem, size = 0x12000, scoped, tag = 'internal scratch']
  %s0 = inlined_call_operand.vmem [shape: bf16[2,8,128], index: 0, kind: input, shape index: {}]
  %s1 = inlined_call_operand.vmem [shape: bf16[2,8,256], index: 1, kind: input, shape index: {}, may-alias: {1,2}]
  %s2 = inlined_call_operand.vmem [shape: bf16[2,8,256], index: 2, kind: input, shape index: {}, may-alias: {1,2}]
  %s3 = inlined_call_operand.vmem [shape: bf16[2,8,128], index: 3, kind: output, shape index: {}]
  %s4 = sld [smem:[#allocation0]]
  $region45: #{transformer_lm_forward.40} parent=0
    _
  %s6 = ssub.s32 1, %s4
  %s7 = scalar_select 0, %s6, %s4
  loop: start=0, step=1, limit=4
  $region2: #{transformer_lm_forward.40} parent=0 // loop_pre_header
    _
  $region3: #{transformer_lm_forward.40} parent=0 // loop_header
    %s9 = sphi 0, %s13
    %p10 = scmp.ge.s32.totalorder %s9, 4
    %s16 = sphi 0, %s28
    %s17 = sphi 0, %s24
    %s18 = sphi 0, %s16
    %s19 = sphi 0, %s17
    %s20 = sphi 0, %s18
    %s21 = sphi 0, %s19
    %s33 = sphi 0, %s35
    %s36 = sphi 0, %s33
    %s37 = sphi 0, %s36
    %s53 = sphi 0, %s37
    %s59 = sphi 0, %s61
    %s62 = sphi 0, %s59
    %s63 = sphi 0, %s62
    %s79 = sphi 0, %s63
    %s85 = sphi 0, %s87
    %s88 = sphi 0, %s85
    %s89 = sphi 0, %s88
    %s105 = sphi 0, %s89
    %s113 = sphi 0, %s115
    %s116 = sphi 0, %s113
    %s117 = sphi 0, %s116
    %s133 = sphi 0, %s117
  $region4: #{transformer_lm_forward.40} parent=0 // loop_header_branch
    %12 = sbr.rel (%p10) target = $region8
  $region5: #{transformer_lm_forward.40} parent=0 // loop_body
    %s14 = ssub.s32 %s9, 1
    %s15 = ssub.s32 %s9, 2
    %s22 = sadd.s32 1, %s17
    %p23 = scmp.ge.s32.totalorder %s22, 1
    %s24 = scalar_select %p23, 0, %s22
    %s25 = sadd.s32 1, %s16
    %s26 = scalar_select %p23, %s25, %s16
    %p27 = scmp.ge.s32.totalorder %s26, 2
    %s28 = scalar_select %p27, 0, %s26
    %s29 = ssub.s32 %s16, %s28
    %s30 = ssub.s32 %s17, %s24
    %s31 = sor.u32 %s29, %s30
    %p32 = scmp.eq.s32.totalorder %s31, 0
    %s34 = sadd.s32 %s33, 1
    %s35 = scalar_select %p32, %s33, %s34
    %p38 = pneg %p32
    %p39 = scmp.eq.s32.totalorder %s9, 1
    %p40 = por %p38, %p39
    %p41 = scmp.ne.s32.totalorder %s33, %s36
    %p42 = scmp.eq.s32.totalorder %s9, 0
    %p43 = por %p41, %p42
    %p44 = scmp.ne.s32.totalorder %s33, %s36
    %p45 = scmp.eq.s32.totalorder %s14, 1
    %p46 = por %p44, %p45
    %p47 = scmp.ne.s32.totalorder %s36, %s37
    %p48 = scmp.eq.s32.totalorder %s14, 0
    %p49 = por %p47, %p48
    %p50 = scmp.ne.s32.totalorder %s36, %s37
    %p51 = scmp.eq.s32.totalorder %s15, 1
    %p52 = por %p50, %p51
    %p54 = scmp.ne.s32.totalorder %s37, %s53
    %p55 = scmp.eq.s32.totalorder %s15, 0
    %p56 = por %p54, %p55
    %s57 = ssub.s32 %s16, %s28
    %p58 = scmp.eq.s32.totalorder %s57, 0
    %s60 = sadd.s32 %s59, 1
    %s61 = scalar_select %p58, %s59, %s60
    %p64 = pneg %p58
    %p65 = scmp.eq.s32.totalorder %s9, 1
    %p66 = por %p64, %p65
    %p67 = scmp.ne.s32.totalorder %s59, %s62
    %p68 = scmp.eq.s32.totalorder %s9, 0
    %p69 = por %p67, %p68
    %p70 = scmp.ne.s32.totalorder %s59, %s62
    %p71 = scmp.eq.s32.totalorder %s14, 1
    %p72 = por %p70, %p71
    %p73 = scmp.ne.s32.totalorder %s62, %s63
    %p74 = scmp.eq.s32.totalorder %s14, 0
    %p75 = por %p73, %p74
    %p76 = scmp.ne.s32.totalorder %s62, %s63
    %p77 = scmp.eq.s32.totalorder %s15, 1
    %p78 = por %p76, %p77
    %p80 = scmp.ne.s32.totalorder %s63, %s79
    %p81 = scmp.eq.s32.totalorder %s15, 0
    %p82 = por %p80, %p81
    %s83 = ssub.s32 %s16, %s28
    %p84 = scmp.eq.s32.totalorder %s83, 0
    %s86 = sadd.s32 %s85, 1
    %s87 = scalar_select %p84, %s85, %s86
    %p90 = pneg %p84
    %p91 = scmp.eq.s32.totalorder %s9, 1
    %p92 = por %p90, %p91
    %p93 = scmp.ne.s32.totalorder %s85, %s88
    %p94 = scmp.eq.s32.totalorder %s9, 0
    %p95 = por %p93, %p94
    %p96 = scmp.ne.s32.totalorder %s85, %s88
    %p97 = scmp.eq.s32.totalorder %s14, 1
    %p98 = por %p96, %p97
    %p99 = scmp.ne.s32.totalorder %s88, %s89
    %p100 = scmp.eq.s32.totalorder %s14, 0
    %p101 = por %p99, %p100
    %p102 = scmp.ne.s32.totalorder %s88, %s89
    %p103 = scmp.eq.s32.totalorder %s15, 1
    %p104 = por %p102, %p103
    %p106 = scmp.ne.s32.totalorder %s89, %s105
    %p107 = scmp.eq.s32.totalorder %s15, 0
    %p108 = por %p106, %p107
    %s109 = ssub.s32 %s16, %s28
    %s110 = ssub.s32 %s17, %s24
    %s111 = sor.u32 %s109, %s110
    %p112 = scmp.eq.s32.totalorder %s111, 0
    %s114 = sadd.s32 %s113, 1
    %s115 = scalar_select %p112, %s113, %s114
    %p118 = pneg %p112
    %p119 = scmp.eq.s32.totalorder %s9, 1
    %p120 = por %p118, %p119
    %p121 = scmp.ne.s32.totalorder %s113, %s116
    %p122 = scmp.eq.s32.totalorder %s9, 0
    %p123 = por %p121, %p122
    %p124 = scmp.ne.s32.totalorder %s113, %s116
    %p125 = scmp.eq.s32.totalorder %s14, 1
    %p126 = por %p124, %p125
    %p127 = scmp.ne.s32.totalorder %s116, %s117
    %p128 = scmp.eq.s32.totalorder %s14, 0
    %p129 = por %p127, %p128
    %p130 = scmp.ne.s32.totalorder %s116, %s117
    %p131 = scmp.eq.s32.totalorder %s15, 1
    %p132 = por %p130, %p131
    %p134 = scmp.ne.s32.totalorder %s117, %s133
    %p135 = scmp.eq.s32.totalorder %s15, 0
    %p136 = por %p134, %p135
    %p137 = scmp.le.s32.totalorder 1, %s9
    %p138 = scmp.lt.s32.totalorder %s9, 3
    %p139 = pnand %p137, %p138
    %p140 = pneg %p139
    // Predicated region
    $region9: #{transformer_lm_forward.40} parent=5 // pred_check
      _
    $region10: #{transformer_lm_forward.40} parent=5 // pred_check_branch
      %142 = sbr.rel (%p139) target = $region12
    $region11: #{transformer_lm_forward.40} parent=5 // pred_region
      %s143 = ssub.s32 %s9, 1
    $region12: #{transformer_lm_forward.40} parent=5 // pred_fallthru
      _
    %p144 = scmp.lt.s32.totalorder %s9, 2
    // Predicated region
    $region13: #{transformer_lm_forward.40} parent=5 // pred_check
      %p145 = pneg %p144
    $region14: #{transformer_lm_forward.40} parent=5 // pred_check_branch
      %147 = sbr.rel (%p145) target = $region16
    $region15: #{transformer_lm_forward.40} parent=5 // pred_region
      // Predicated region
      $region17: #{transformer_lm_forward.40} parent=15 // pred_check
        %p148 = pneg %p43
      $region18: #{transformer_lm_forward.40} parent=15 // pred_check_branch
        %150 = sbr.rel (%p148) target = $region20
      $region19: #{transformer_lm_forward.40} parent=15 // pred_region
        %p151 = scmp.lt.s32.totalorder %s16, 1
        %s152 = scalar_select %p151, %s16, 1
        %p153 = scmp.lt.s32.totalorder %s17, 0
        %s154 = scalar_select %p153, %s17, 0
        %s155 = sadd.s32 %s154, %s152
        %s156 = smul.addr %s155, 4
        %s157 = scalar_lea.vmem %s0, %s156
      $region20: #{transformer_lm_forward.40} parent=15 // pred_fallthru
        _
      // Predicated region
      $region21: #{transformer_lm_forward.40} parent=15 // pred_check
        %p158 = pneg %p69
      $region22: #{transformer_lm_forward.40} parent=15 // pred_check_branch
        %160 = sbr.rel (%p158) target = $region24
      $region23: #{transformer_lm_forward.40} parent=15 // pred_region
        %p161 = scmp.lt.s32.totalorder %s16, 1
        %s162 = scalar_select %p161, %s16, 1
        %s163 = smul.addr %s162, 2
        %s164 = smul.addr %s163, 4
        %s165 = scalar_lea.vmem %s1, %s164
      $region24: #{transformer_lm_forward.40} parent=15 // pred_fallthru
        _
      // Predicated region
      $region25: #{transformer_lm_forward.40} parent=15 // pred_check
        %p166 = pneg %p95
      $region26: #{transformer_lm_forward.40} parent=15 // pred_check_branch
        %168 = sbr.rel (%p166) target = $region28
      $region27: #{transformer_lm_forward.40} parent=15 // pred_region
        %p169 = scmp.lt.s32.totalorder %s16, 1
        %s170 = scalar_select %p169, %s16, 1
        %s171 = smul.addr %s170, 2
        %s172 = sadd.s32 1, %s171
        %s173 = smul.addr %s172, 4
        %s174 = scalar_lea.vmem %s2, %s173
      $region28: #{transformer_lm_forward.40} parent=15 // pred_fallthru
        _
    $region16: #{transformer_lm_forward.40} parent=5 // pred_fallthru
      _
    %p175 = scmp.le.s32.totalorder 1, %s9
    %p176 = scmp.lt.s32.totalorder %s9, 3
    %p177 = pnand %p175, %p176
    %p178 = pneg %p177
    // Predicated region
    $region29: #{transformer_lm_forward.40} parent=5 // pred_check
      _
    $region30: #{transformer_lm_forward.40} parent=5 // pred_check_branch
      %180 = sbr.rel (%p177) target = $region32
    $region31: #{transformer_lm_forward.40} parent=5 // pred_region
      %s181 = ssub.s32 %s9, 1
      %p182 = scmp.lt.s32.totalorder %s18, 1
      %s183 = scalar_select %p182, %s18, 1
      %p184 = scmp.lt.s32.totalorder %s19, 0
      %s185 = scalar_select %p184, %s19, 0
      %s186 = sadd.s32 %s185, %s183
      %s187 = smul.addr %s186, 4
      %s188 = scalar_lea.vmem %s0, %s187
      %p189 = pneg %p49
      %p190 = pneg %p46
      %p191 = scmp.lt.s32.totalorder %s18, 1
      %s192 = scalar_select %p191, %s18, 1
      %s193 = smul.addr %s192, 2
      %s194 = smul.addr %s193, 4
      %s195 = scalar_lea.vmem %s1, %s194
      %p196 = pneg %p75
      %p197 = pneg %p72
      %p198 = scmp.lt.s32.totalorder %s18, 1
      %s199 = scalar_select %p198, %s18, 1
      %s200 = smul.addr %s199, 2
      %s201 = sadd.s32 1, %s200
      %s202 = smul.addr %s201, 4
      %s203 = scalar_lea.vmem %s2, %s202
      %p204 = pneg %p101
      %p205 = pneg %p98
      %p206 = pneg %p129
      %p207 = pneg %p126
      %p208 = scmp.lt.s32.totalorder %s18, 1
      %s209 = scalar_select %p208, %s18, 1
      %p210 = scmp.lt.s32.totalorder %s19, 0
      %s211 = scalar_select %p210, %s19, 0
      %s212 = sadd.s32 %s211, %s209
      %s213 = smul.addr %s212, 4
      %s214 = scalar_lea.vmem %s3, %s213
      %p215 = scmp.lt.s32.totalorder %s18, 1
      %s216 = scalar_select %p215, %s18, 1
      %p217 = scmp.lt.s32.totalorder %s19, 0
      %s218 = scalar_select %p217, %s19, 0
      %s219 = sadd.s32 %s218, %s216
      %s220 = smul.addr %s219, 4
      %s221 = scalar_lea.vmem %s0, %s220
      %p222 = scmp.lt.s32.totalorder %s18, 1
      %s223 = scalar_select %p222, %s18, 1
      %s224 = smul.addr %s223, 2
      %s225 = smul.addr %s224, 4
      %s226 = scalar_lea.vmem %s1, %s225
      %p227 = scmp.lt.s32.totalorder %s18, 1
      %s228 = scalar_select %p227, %s18, 1
      %s229 = smul.addr %s228, 2
      %s230 = sadd.s32 1, %s229
      %s231 = smul.addr %s230, 4
      %s232 = scalar_lea.vmem %s2, %s231
      %p233 = scmp.lt.s32.totalorder %s18, 1
      %s234 = scalar_select %p233, %s18, 1
      %p235 = scmp.lt.s32.totalorder %s19, 0
      %s236 = scalar_select %p235, %s19, 0
      %s237 = sadd.s32 %s236, %s234
      %s238 = smul.addr %s237, 4
      %s239 = scalar_lea.vmem %s3, %s238
      %v241 = vld [vmem:[%s221] sm:$0xf]
      %v242 = vld [vmem:[%s226] sm:$0xf]
      %v243 = vld [vmem:[%s232] sm:$0xf]
      %vm244 = vcmask 261120
      %v246 = vsel %vm244, %v241, 0
      %v249 = vsel %vm244, %v242, 0
      %251 = vmatprep.subr.bf16.mxu0 0
      %252 = vmatpush1.bf16.xpose.msra.mxu0 0
      %253 = vmatprep.subr.bf16.mxu0 0
      %254 = vmatpush1.bf16.xpose.msra.mxu0 0
      %255 = vmatprep.subr.bf16.mxu0 0
      %256 = vmatpush1.bf16.xpose.msra.mxu0 0
      %257 = vmatprep.subr.bf16.mxu0 0
      %258 = vmatpush1.bf16.xpose.msra.mxu0 0
      %259 = vmatprep.subr.bf16.mxu0 0
      %260 = vmatpush1.bf16.xpose.msra.mxu0 0
      %261 = vmatprep.subr.bf16.mxu0 0
      %262 = vmatpush1.bf16.xpose.msra.mxu0 0
      %263 = vmatprep.subr.bf16.mxu0 0
      %264 = vmatpush1.bf16.xpose.msra.mxu0 0
      %265 = vmatprep.subr.bf16.mxu0 0
      %266 = vmatpush1.bf16.xpose.msra.mxu0 %v249
      %267 = vmatprep.subr.bf16.mxu0 0
      %268 = vmatpush2.bf16.xpose.msra.mxu0 0
      %269 = vmatprep.subr.bf16.mxu0 0
      %270 = vmatpush2.bf16.xpose.msra.mxu0 0
      %271 = vmatprep.subr.bf16.mxu0 0
      %272 = vmatpush2.bf16.xpose.msra.mxu0 0
      %273 = vmatprep.subr.bf16.mxu0 0
      %274 = vmatpush2.bf16.xpose.msra.mxu0 0
      %275 = vmatprep.subr.bf16.mxu0 0
      %276 = vmatpush2.bf16.xpose.msra.mxu0 0
      %277 = vmatprep.subr.bf16.mxu0 0
      %278 = vmatpush2.bf16.xpose.msra.mxu0 0
      %279 = vmatprep.subr.bf16.mxu0 0
      %280 = vmatpush2.bf16.xpose.msra.mxu0 0
      %281 = vmatprep.subr.bf16.mxu0 0
      %282 = vmatpush2.bf16.xpose.msra.mxu0 0
      %283 = vmatprep.mubr.bf16.mxu0 0
      %284 = vmatmul.mubr.bf16.gmra.mxu0 %v246
      %v285 = vpop.f32.mrf.mxu0
      %v286 = vadd.f32 0.0, %v285
      %v287 = vpop.f32.mrf.mxu0
      %v288 = vpop.f32.mrf.mxu0
      %v289 = vpop.f32.mrf.mxu0
      %290 = vdwg.mxu0
      %v291 = vmul.f32 %v286, 0.17677669
      %vm292 = vcmask 64512
      %v293 = vsel %vm292, %v291, -inf
      %294 = vmax.xlane.f32.xlu0 %v293
      %v295 = vpop.xlane.xlu0 %294
      %v296 = vsub.f32 %v291, %v295
      %v297 = vmul.f32 %v296, 1.442695
      %v298 = vpow.pop %v297
      %v299 = vsel %vm292, %v298, 0.0
      %300 = vadd.xlane.f32.xlu0 %v299
      %v301 = vpop.xlane.xlu0 %300
      %v302 = vrcp.pop %v301
      %v303 = vmul.f32 %v298, %v302
      %v304 = vpack.c.bf16 %v303, %v303
      %v306 = vsel %vm292, %v304, 0
      %vm308 = vcmask 1043456
      %v310 = vsel %vm308, %v243, 0
      %312 = vmatprep.subr.bf16.mxu0 0
      %313 = vmatpush1.bf16.msra.mxu0 0
      %314 = vmatprep.subr.bf16.mxu0 0
      %315 = vmatpush1.bf16.msra.mxu0 0
      %316 = vmatprep.subr.bf16.mxu0 0
      %317 = vmatpush1.bf16.msra.mxu0 0
      %318 = vmatprep.subr.bf16.mxu0 0
      %319 = vmatpush1.bf16.msra.mxu0 0
      %320 = vmatprep.subr.bf16.mxu0 0
      %321 = vmatpush1.bf16.msra.mxu0 0
      %322 = vmatprep.subr.bf16.mxu0 0
      %323 = vmatpush1.bf16.msra.mxu0 0
      %324 = vmatprep.subr.bf16.mxu0 0
      %325 = vmatpush1.bf16.msra.mxu0 0
      %326 = vmatprep.subr.bf16.mxu0 0
      %327 = vmatpush1.bf16.msra.mxu0 %v310
      %328 = vmatprep.subr.bf16.mxu0 0
      %329 = vmatpush2.bf16.msra.mxu0 0
      %330 = vmatprep.subr.bf16.mxu0 0
      %331 = vmatpush2.bf16.msra.mxu0 0
      %332 = vmatprep.subr.bf16.mxu0 0
      %333 = vmatpush2.bf16.msra.mxu0 0
      %334 = vmatprep.subr.bf16.mxu0 0
      %335 = vmatpush2.bf16.msra.mxu0 0
      %336 = vmatprep.subr.bf16.mxu0 0
      %337 = vmatpush2.bf16.msra.mxu0 0
      %338 = vmatprep.subr.bf16.mxu0 0
      %339 = vmatpush2.bf16.msra.mxu0 0
      %340 = vmatprep.subr.bf16.mxu0 0
      %341 = vmatpush2.bf16.msra.mxu0 0
      %342 = vmatprep.subr.bf16.mxu0 0
      %343 = vmatpush2.bf16.msra.mxu0 0
      %344 = vmatprep.mubr.bf16.mxu0 0
      %345 = vmatmul.mubr.bf16.gmra.mxu0 %v306
      %v346 = vpop.f32.mrf.mxu0
      %v347 = vadd.f32 0.0, %v346
      %v348 = vpop.f32.mrf.mxu0
      %v349 = vpop.f32.mrf.mxu0
      %v350 = vpop.f32.mrf.mxu0
      %351 = vdwg.mxu0
      %v353 = vunpack.c.l.b16 %v241
      %v354 = vpack.c.b16 %v353, %v353
      %355 = vrot.lane.b32.xlu0 %v354, 96
      %v356 = vpop.permute.xlu0 %355
      %v358 = vunpack.c.l.b16 %v242
      %v359 = vpack.c.b16 %v358, %v358
      %360 = vrot.lane.b32.xlu0 %v359, 96
      %v361 = vpop.permute.xlu0 %360
      %v363 = vsel %vm244, %v356, 0
      %v366 = vsel %vm244, %v361, 0
      %368 = vmatprep.subr.bf16.mxu0 0
      %369 = vmatpush1.bf16.xpose.msra.mxu0 0
      %370 = vmatprep.subr.bf16.mxu0 0
      %371 = vmatpush1.bf16.xpose.msra.mxu0 0
      %372 = vmatprep.subr.bf16.mxu0 0
      %373 = vmatpush1.bf16.xpose.msra.mxu0 0
      %374 = vmatprep.subr.bf16.mxu0 0
      %375 = vmatpush1.bf16.xpose.msra.mxu0 0
      %376 = vmatprep.subr.bf16.mxu0 0
      %377 = vmatpush1.bf16.xpose.msra.mxu0 0
      %378 = vmatprep.subr.bf16.mxu0 0
      %379 = vmatpush1.bf16.xpose.msra.mxu0 0
      %380 = vmatprep.subr.bf16.mxu0 0
      %381 = vmatpush1.bf16.xpose.msra.mxu0 0
      %382 = vmatprep.subr.bf16.mxu0 0
      %383 = vmatpush1.bf16.xpose.msra.mxu0 %v366
      %384 = vmatprep.subr.bf16.mxu0 0
      %385 = vmatpush2.bf16.xpose.msra.mxu0 0
      %386 = vmatprep.subr.bf16.mxu0 0
      %387 = vmatpush2.bf16.xpose.msra.mxu0 0
      %388 = vmatprep.subr.bf16.mxu0 0
      %389 = vmatpush2.bf16.xpose.msra.mxu0 0
      %390 = vmatprep.subr.bf16.mxu0 0
      %391 = vmatpush2.bf16.xpose.msra.mxu0 0
      %392 = vmatprep.subr.bf16.mxu0 0
      %393 = vmatpush2.bf16.xpose.msra.mxu0 0
      %394 = vmatprep.subr.bf16.mxu0 0
      %395 = vmatpush2.bf16.xpose.msra.mxu0 0
      %396 = vmatprep.subr.bf16.mxu0 0
      %397 = vmatpush2.bf16.xpose.msra.mxu0 0
      %398 = vmatprep.subr.bf16.mxu0 0
      %399 = vmatpush2.bf16.xpose.msra.mxu0 0
      %400 = vmatprep.mubr.bf16.mxu0 0
      %401 = vmatmul.mubr.bf16.gmra.mxu0 %v363
      %v402 = vpop.f32.mrf.mxu0
      %v403 = vadd.f32 0.0, %v402
      %v404 = vpop.f32.mrf.mxu0
      %v405 = vpop.f32.mrf.mxu0
      %v406 = vpop.f32.mrf.mxu0
      %407 = vdwg.mxu0
      %v408 = vmul.f32 %v403, 0.17677669
      %v409 = vsel %vm292, %v408, -inf
      %410 = vmax.xlane.f32.xlu0 %v409
      %v411 = vpop.xlane.xlu0 %410
      %v412 = vsub.f32 %v408, %v411
      %v413 = vmul.f32 %v412, 1.442695
      %v414 = vpow.pop %v413
      %v415 = vsel %vm292, %v414, 0.0
      %416 = vadd.xlane.f32.xlu0 %v415
      %v417 = vpop.xlane.xlu0 %416
      %v418 = vrcp.pop %v417
      %v419 = vmul.f32 %v414, %v418
      %v420 = vpack.c.bf16 %v419, %v419
      %v422 = vunpack.c.l.b16 %v243
      %v423 = vpack.c.b16 %v422, %v422
      %424 = vrot.lane.b32.xlu0 %v423, 96
      %v425 = vpop.permute.xlu0 %424
      %v427 = vsel %vm292, %v420, 0
      %v430 = vsel %vm308, %v425, 0
      %432 = vmatprep.subr.bf16.mxu0 0
      %433 = vmatpush1.bf16.msra.mxu0 0
      %434 = vmatprep.subr.bf16.mxu0 0
      %435 = vmatpush1.bf16.msra.mxu0 0
      %436 = vmatprep.subr.bf16.mxu0 0
      %437 = vmatpush1.bf16.msra.mxu0 0
      %438 = vmatprep.subr.bf16.mxu0 0
      %439 = vmatpush1.bf16.msra.mxu0 0
      %440 = vmatprep.subr.bf16.mxu0 0
      %441 = vmatpush1.bf16.msra.mxu0 0
      %442 = vmatprep.subr.bf16.mxu0 0
      %443 = vmatpush1.bf16.msra.mxu0 0
      %444 = vmatprep.subr.bf16.mxu0 0
      %445 = vmatpush1.bf16.msra.mxu0 0
      %446 = vmatprep.subr.bf16.mxu0 0
      %447 = vmatpush1.bf16.msra.mxu0 %v430
      %448 = vmatprep.subr.bf16.mxu0 0
      %449 = vmatpush2.bf16.msra.mxu0 0
      %450 = vmatprep.subr.bf16.mxu0 0
      %451 = vmatpush2.bf16.msra.mxu0 0
      %452 = vmatprep.subr.bf16.mxu0 0
      %453 = vmatpush2.bf16.msra.mxu0 0
      %454 = vmatprep.subr.bf16.mxu0 0
      %455 = vmatpush2.bf16.msra.mxu0 0
      %456 = vmatprep.subr.bf16.mxu0 0
      %457 = vmatpush2.bf16.msra.mxu0 0
      %458 = vmatprep.subr.bf16.mxu0 0
      %459 = vmatpush2.bf16.msra.mxu0 0
      %460 = vmatprep.subr.bf16.mxu0 0
      %461 = vmatpush2.bf16.msra.mxu0 0
      %462 = vmatprep.subr.bf16.mxu0 0
      %463 = vmatpush2.bf16.msra.mxu0 0
      %464 = vmatprep.mubr.bf16.mxu0 0
      %465 = vmatmul.mubr.bf16.gmra.mxu0 %v427
      %v466 = vpop.f32.mrf.mxu0
      %v467 = vadd.f32 0.0, %v466
      %v468 = vpop.f32.mrf.mxu0
      %v469 = vpop.f32.mrf.mxu0
      %v470 = vpop.f32.mrf.mxu0
      %471 = vdwg.mxu0
      %472 = vrot.lane.b32.xlu0 %v354, 64
      %v473 = vpop.permute.xlu0 %472
      %474 = vrot.lane.b32.xlu0 %v359, 64
      %v475 = vpop.permute.xlu0 %474
      %v477 = vsel %vm244, %v473, 0
      %v480 = vsel %vm244, %v475, 0
      %482 = vmatprep.subr.bf16.mxu0 0
      %483 = vmatpush1.bf16.xpose.msra.mxu0 0
      %484 = vmatprep.subr.bf16.mxu0 0
      %485 = vmatpush1.bf16.xpose.msra.mxu0 0
      %486 = vmatprep.subr.bf16.mxu0 0
      %487 = vmatpush1.bf16.xpose.msra.mxu0 0
      %488 = vmatprep.subr.bf16.mxu0 0
      %489 = vmatpush1.bf16.xpose.msra.mxu0 0
      %490 = vmatprep.subr.bf16.mxu0 0
      %491 = vmatpush1.bf16.xpose.msra.mxu0 0
      %492 = vmatprep.subr.bf16.mxu0 0
      %493 = vmatpush1.bf16.xpose.msra.mxu0 0
      %494 = vmatprep.subr.bf16.mxu0 0
      %495 = vmatpush1.bf16.xpose.msra.mxu0 0
      %496 = vmatprep.subr.bf16.mxu0 0
      %497 = vmatpush1.bf16.xpose.msra.mxu0 %v480
      %498 = vmatprep.subr.bf16.mxu0 0
      %499 = vmatpush2.bf16.xpose.msra.mxu0 0
      %500 = vmatprep.subr.bf16.mxu0 0
      %501 = vmatpush2.bf16.xpose.msra.mxu0 0
      %502 = vmatprep.subr.bf16.mxu0 0
      %503 = vmatpush2.bf16.xpose.msra.mxu0 0
      %504 = vmatprep.subr.bf16.mxu0 0
      %505 = vmatpush2.bf16.xpose.msra.mxu0 0
      %506 = vmatprep.subr.bf16.mxu0 0
      %507 = vmatpush2.bf16.xpose.msra.mxu0 0
      %508 = vmatprep.subr.bf16.mxu0 0
      %509 = vmatpush2.bf16.xpose.msra.mxu0 0
      %510 = vmatprep.subr.bf16.mxu0 0
      %511 = vmatpush2.bf16.xpose.msra.mxu0 0
      %512 = vmatprep.subr.bf16.mxu0 0
      %513 = vmatpush2.bf16.xpose.msra.mxu0 0
      %514 = vmatprep.mubr.bf16.mxu0 0
      %515 = vmatmul.mubr.bf16.gmra.mxu0 %v477
      %v516 = vpop.f32.mrf.mxu0
      %v517 = vadd.f32 0.0, %v516
      %v518 = vpop.f32.mrf.mxu0
      %v519 = vpop.f32.mrf.mxu0
      %v520 = vpop.f32.mrf.mxu0
      %521 = vdwg.mxu0
      %v522 = vmul.f32 %v517, 0.17677669
      %v523 = vsel %vm292, %v522, -inf
      %524 = vmax.xlane.f32.xlu0 %v523
      %v525 = vpop.xlane.xlu0 %524
      %v526 = vsub.f32 %v522, %v525
      %v527 = vmul.f32 %v526, 1.442695
      %v528 = vpow.pop %v527
      %v529 = vsel %vm292, %v528, 0.0
      %530 = vadd.xlane.f32.xlu0 %v529
      %v531 = vpop.xlane.xlu0 %530
      %v532 = vrcp.pop %v531
      %v533 = vmul.f32 %v528, %v532
      %v534 = vpack.c.bf16 %v533, %v533
      %535 = vrot.lane.b32.xlu0 %v423, 64
      %v536 = vpop.permute.xlu0 %535
      %v538 = vsel %vm292, %v534, 0
      %v541 = vsel %vm308, %v536, 0
      %543 = vmatprep.subr.bf16.mxu0 0
      %544 = vmatpush1.bf16.msra.mxu0 0
      %545 = vmatprep.subr.bf16.mxu0 0
      %546 = vmatpush1.bf16.msra.mxu0 0
      %547 = vmatprep.subr.bf16.mxu0 0
      %548 = vmatpush1.bf16.msra.mxu0 0
      %549 = vmatprep.subr.bf16.mxu0 0
      %550 = vmatpush1.bf16.msra.mxu0 0
      %551 = vmatprep.subr.bf16.mxu0 0
      %552 = vmatpush1.bf16.msra.mxu0 0
      %553 = vmatprep.subr.bf16.mxu0 0
      %554 = vmatpush1.bf16.msra.mxu0 0
      %555 = vmatprep.subr.bf16.mxu0 0
      %556 = vmatpush1.bf16.msra.mxu0 0
      %557 = vmatprep.subr.bf16.mxu0 0
      %558 = vmatpush1.bf16.msra.mxu0 %v541
      %559 = vmatprep.subr.bf16.mxu0 0
      %560 = vmatpush2.bf16.msra.mxu0 0
      %561 = vmatprep.subr.bf16.mxu0 0
      %562 = vmatpush2.bf16.msra.mxu0 0
      %563 = vmatprep.subr.bf16.mxu0 0
      %564 = vmatpush2.bf16.msra.mxu0 0
      %565 = vmatprep.subr.bf16.mxu0 0
      %566 = vmatpush2.bf16.msra.mxu0 0
      %567 = vmatprep.subr.bf16.mxu0 0
      %568 = vmatpush2.bf16.msra.mxu0 0
      %569 = vmatprep.subr.bf16.mxu0 0
      %570 = vmatpush2.bf16.msra.mxu0 0
      %571 = vmatprep.subr.bf16.mxu0 0
      %572 = vmatpush2.bf16.msra.mxu0 0
      %573 = vmatprep.subr.bf16.mxu0 0
      %574 = vmatpush2.bf16.msra.mxu0 0
      %575 = vmatprep.mubr.bf16.mxu0 0
      %576 = vmatmul.mubr.bf16.gmra.mxu0 %v538
      %v577 = vpop.f32.mrf.mxu0
      %v578 = vadd.f32 0.0, %v577
      %v579 = vpop.f32.mrf.mxu0
      %v580 = vpop.f32.mrf.mxu0
      %v581 = vpop.f32.mrf.mxu0
      %582 = vdwg.mxu0
      %583 = vrot.lane.b32.xlu0 %v354, 32
      %v584 = vpop.permute.xlu0 %583
      %585 = vrot.lane.b32.xlu0 %v359, 32
      %v586 = vpop.permute.xlu0 %585
      %v588 = vsel %vm244, %v584, 0
      %v591 = vsel %vm244, %v586, 0
      %593 = vmatprep.subr.bf16.mxu0 0
      %594 = vmatpush1.bf16.xpose.msra.mxu0 0
      %595 = vmatprep.subr.bf16.mxu0 0
      %596 = vmatpush1.bf16.xpose.msra.mxu0 0
      %597 = vmatprep.subr.bf16.mxu0 0
      %598 = vmatpush1.bf16.xpose.msra.mxu0 0
      %599 = vmatprep.subr.bf16.mxu0 0
      %600 = vmatpush1.bf16.xpose.msra.mxu0 0
      %601 = vmatprep.subr.bf16.mxu0 0
      %602 = vmatpush1.bf16.xpose.msra.mxu0 0
      %603 = vmatprep.subr.bf16.mxu0 0
      %604 = vmatpush1.bf16.xpose.msra.mxu0 0
      %605 = vmatprep.subr.bf16.mxu0 0
      %606 = vmatpush1.bf16.xpose.msra.mxu0 0
      %607 = vmatprep.subr.bf16.mxu0 0
      %608 = vmatpush1.bf16.xpose.msra.mxu0 %v591
      %609 = vmatprep.subr.bf16.mxu0 0
      %610 = vmatpush2.bf16.xpose.msra.mxu0 0
      %611 = vmatprep.subr.bf16.mxu0 0
      %612 = vmatpush2.bf16.xpose.msra.mxu0 0
      %613 = vmatprep.subr.bf16.mxu0 0
      %614 = vmatpush2.bf16.xpose.msra.mxu0 0
      %615 = vmatprep.subr.bf16.mxu0 0
      %616 = vmatpush2.bf16.xpose.msra.mxu0 0
      %617 = vmatprep.subr.bf16.mxu0 0
      %618 = vmatpush2.bf16.xpose.msra.mxu0 0
      %619 = vmatprep.subr.bf16.mxu0 0
      %620 = vmatpush2.bf16.xpose.msra.mxu0 0
      %621 = vmatprep.subr.bf16.mxu0 0
      %622 = vmatpush2.bf16.xpose.msra.mxu0 0
      %623 = vmatprep.subr.bf16.mxu0 0
      %624 = vmatpush2.bf16.xpose.msra.mxu0 0
      %625 = vmatprep.mubr.bf16.mxu0 0
      %626 = vmatmul.mubr.bf16.gmra.mxu0 %v588
      %v627 = vpop.f32.mrf.mxu0
      %v628 = vadd.f32 0.0, %v627
      %v629 = vpop.f32.mrf.mxu0
      %v630 = vpop.f32.mrf.mxu0
      %v631 = vpop.f32.mrf.mxu0
      %632 = vdwg.mxu0
      %v633 = vmul.f32 %v628, 0.17677669
      %v634 = vsel %vm292, %v633, -inf
      %635 = vmax.xlane.f32.xlu0 %v634
      %v636 = vpop.xlane.xlu0 %635
      %v637 = vsub.f32 %v633, %v636
      %v638 = vmul.f32 %v637, 1.442695
      %v639 = vpow.pop %v638
      %v640 = vsel %vm292, %v639, 0.0
      %641 = vadd.xlane.f32.xlu0 %v640
      %v642 = vpop.xlane.xlu0 %641
      %v643 = vrcp.pop %v642
      %v644 = vmul.f32 %v639, %v643
      %v645 = vpack.c.bf16 %v644, %v644
      %646 = vrot.lane.b32.xlu0 %v423, 32
      %v647 = vpop.permute.xlu0 %646
      %v649 = vsel %vm292, %v645, 0
      %v652 = vsel %vm308, %v647, 0
      %654 = vmatprep.subr.bf16.mxu0 0
      %655 = vmatpush1.bf16.msra.mxu0 0
      %656 = vmatprep.subr.bf16.mxu0 0
      %657 = vmatpush1.bf16.msra.mxu0 0
      %658 = vmatprep.subr.bf16.mxu0 0
      %659 = vmatpush1.bf16.msra.mxu0 0
      %660 = vmatprep.subr.bf16.mxu0 0
      %661 = vmatpush1.bf16.msra.mxu0 0
      %662 = vmatprep.subr.bf16.mxu0 0
      %663 = vmatpush1.bf16.msra.mxu0 0
      %664 = vmatprep.subr.bf16.mxu0 0
      %665 = vmatpush1.bf16.msra.mxu0 0
      %666 = vmatprep.subr.bf16.mxu0 0
      %667 = vmatpush1.bf16.msra.mxu0 0
      %668 = vmatprep.subr.bf16.mxu0 0
      %669 = vmatpush1.bf16.msra.mxu0 %v652
      %670 = vmatprep.subr.bf16.mxu0 0
      %671 = vmatpush2.bf16.msra.mxu0 0
      %672 = vmatprep.subr.bf16.mxu0 0
      %673 = vmatpush2.bf16.msra.mxu0 0
      %674 = vmatprep.subr.bf16.mxu0 0
      %675 = vmatpush2.bf16.msra.mxu0 0
      %676 = vmatprep.subr.bf16.mxu0 0
      %677 = vmatpush2.bf16.msra.mxu0 0
      %678 = vmatprep.subr.bf16.mxu0 0
      %679 = vmatpush2.bf16.msra.mxu0 0
      %680 = vmatprep.subr.bf16.mxu0 0
      %681 = vmatpush2.bf16.msra.mxu0 0
      %682 = vmatprep.subr.bf16.mxu0 0
      %683 = vmatpush2.bf16.msra.mxu0 0
      %684 = vmatprep.subr.bf16.mxu0 0
      %685 = vmatpush2.bf16.msra.mxu0 0
      %686 = vmatprep.mubr.bf16.mxu0 0
      %687 = vmatmul.mubr.bf16.gmra.mxu0 %v649
      %v688 = vpop.f32.mrf.mxu0
      %v689 = vadd.f32 0.0, %v688
      %v690 = vpop.f32.mrf.mxu0
      %v691 = vpop.f32.mrf.mxu0
      %v692 = vpop.f32.mrf.mxu0
      %693 = vdwg.mxu0
      %695 = vrot.lane.b32.xlu0 %v467, 32
      %v696 = vpop.permute.xlu0 %695
      %699 = vrot.lane.b32.xlu0 %v578, 64
      %v700 = vpop.permute.xlu0 %699
      %703 = vrot.lane.b32.xlu0 %v689, 96
      %v704 = vpop.permute.xlu0 %703
      %v706 = vsel %vm244, %v347, %v696
      %vm707 = vcmask 523264
      %v708 = vsel %vm707, %v706, %v700
      %vm709 = vcmask 785408
      %v710 = vsel %vm709, %v708, %v704
      %v711 = vpack.c.bf16 %v710, %v710
      %712 = vst [vmem:[%s239] sm:$0xf] %v711
      %p713 = scmp.lt.s32.totalorder %s18, 1
      %s714 = scalar_select %p713, %s18, 1
      %p715 = scmp.lt.s32.totalorder %s19, 0
      %s716 = scalar_select %p715, %s19, 0
      %s717 = sadd.s32 %s716, %s714
      %s718 = smul.addr %s717, 4
      %s719 = scalar_lea.vmem %s3, %s718
      // Predicated region
      $region33: #{transformer_lm_forward.40} parent=31 // pred_check
        %p720 = pneg %p126
      $region34: #{transformer_lm_forward.40} parent=31 // pred_check_branch
        %722 = sbr.rel (%p720) target = $region36
      $region35: #{transformer_lm_forward.40} parent=31 // pred_region
        _
      $region36: #{transformer_lm_forward.40} parent=31 // pred_fallthru
        _
    $region32: #{transformer_lm_forward.40} parent=5 // pred_fallthru
      _
    %p723 = scmp.le.s32.totalorder 2, %s9
    // Predicated region
    $region37: #{transformer_lm_forward.40} parent=5 // pred_check
      %p724 = pneg %p723
    $region38: #{transformer_lm_forward.40} parent=5 // pred_check_branch
      %726 = sbr.rel (%p724) target = $region40
    $region39: #{transformer_lm_forward.40} parent=5 // pred_region
      %s727 = ssub.s32 %s9, 2
      // Predicated region
      $region41: #{transformer_lm_forward.40} parent=39 // pred_check
        %p728 = pneg %p132
      $region42: #{transformer_lm_forward.40} parent=39 // pred_check_branch
        %730 = sbr.rel (%p728) target = $region44
      $region43: #{transformer_lm_forward.40} parent=39 // pred_region
        %p731 = scmp.lt.s32.totalorder %s20, 1
        %s732 = scalar_select %p731, %s20, 1
        %p733 = scmp.lt.s32.totalorder %s21, 0
        %s734 = scalar_select %p733, %s21, 0
        %s735 = sadd.s32 %s734, %s732
        %s736 = smul.addr %s735, 4
        %s737 = scalar_lea.vmem %s3, %s736
      $region44: #{transformer_lm_forward.40} parent=39 // pred_fallthru
        _
    $region40: #{transformer_lm_forward.40} parent=5 // pred_fallthru
      _
  $region6: #{transformer_lm_forward.40} parent=0 // loop_footer
    %s13 = sadd.s32 1, %s9
  $region7: #{transformer_lm_forward.40} parent=0 // loop_footer_branch
    %8 = sbr.rel target = $region3
  $region8: #{transformer_lm_forward.40} parent=0 // loop_exit
    _

// kernel: transformer_lm_forward.51
$region0: #{transformer_lm_forward.51}
  #allocation0 [shape = 'u32[]', space=smem, size = 0x4, offset = 0x4, fixed_abs, tag = 'smem constant byte address 0x4 - core index']
  #allocation1 [shape = 'u32[144,128]{1,0:T(1,128)}', space=vmem, size = 0x12000, scoped, tag = 'internal scratch']
  %s0 = inlined_call_operand.vmem [shape: bf16[16,128], index: 0, kind: input, shape index: {}]
  %s1 = inlined_call_operand.vmem [shape: f32[1,128], index: 1, kind: input, shape index: {}]
  %s2 = inlined_call_operand.vmem [shape: f32[1,128], index: 2, kind: input, shape index: {}]
  %s3 = inlined_call_operand.vmem [shape: bf16[128,256], index: 3, kind: input, shape index: {}]
  %s4 = inlined_call_operand.vmem [shape: f32[1,256], index: 4, kind: input, shape index: {}]
  %s5 = inlined_call_operand.vmem [shape: f32[16,256], index: 5, kind: output, shape index: {}]
  %s6 = sld [smem:[#allocation0]]
  $region30: #{transformer_lm_forward.51} parent=0
    _
  %s8 = ssub.s32 1, %s6
  %s9 = scalar_select 0, %s8, %s6
  // Predicated region
  $region2: #{transformer_lm_forward.51} parent=0 // pred_check
    _
  $region3: #{transformer_lm_forward.51} parent=0 // pred_check_branch
    %11 = sbr.rel (0) target = $region5
  $region4: #{transformer_lm_forward.51} parent=0 // pred_region
    _
  $region5: #{transformer_lm_forward.51} parent=0 // pred_fallthru
    _
  // Predicated region
  $region6: #{transformer_lm_forward.51} parent=0 // pred_check
    _
  $region7: #{transformer_lm_forward.51} parent=0 // pred_check_branch
    %13 = sbr.rel (0) target = $region9
  $region8: #{transformer_lm_forward.51} parent=0 // pred_region
    _
  $region9: #{transformer_lm_forward.51} parent=0 // pred_fallthru
    _
  // Predicated region
  $region10: #{transformer_lm_forward.51} parent=0 // pred_check
    _
  $region11: #{transformer_lm_forward.51} parent=0 // pred_check_branch
    %15 = sbr.rel (0) target = $region13
  $region12: #{transformer_lm_forward.51} parent=0 // pred_region
    _
  $region13: #{transformer_lm_forward.51} parent=0 // pred_fallthru
    _
  // Predicated region
  $region14: #{transformer_lm_forward.51} parent=0 // pred_check
    _
  $region15: #{transformer_lm_forward.51} parent=0 // pred_check_branch
    %17 = sbr.rel (0) target = $region17
  $region16: #{transformer_lm_forward.51} parent=0 // pred_region
    _
  $region17: #{transformer_lm_forward.51} parent=0 // pred_fallthru
    _
  // Predicated region
  $region18: #{transformer_lm_forward.51} parent=0 // pred_check
    _
  $region19: #{transformer_lm_forward.51} parent=0 // pred_check_branch
    %19 = sbr.rel (0) target = $region21
  $region20: #{transformer_lm_forward.51} parent=0 // pred_region
    _
  $region21: #{transformer_lm_forward.51} parent=0 // pred_fallthru
    _
  %v21 = vld [vmem:[%s0] sm:$0xf]
  %v22 = vld [vmem:[%s0 + $0x4] sm:$0xf]
  %v23 = vunpack.c.l.bf16 %v21
  %v24 = vunpack.c.l.bf16 %v22
  %25 = vadd.xlane.f32.xlu0 %v23
  %v26 = vpop.xlane.xlu0 %25
  %27 = vadd.xlane.f32.xlu0 %v24
  %v28 = vpop.xlane.xlu0 %27
  %v29 = vrcp.pop 128.0
  %v30 = vmul.f32 %v26, %v29
  %v31 = vmul.f32 %v28, %v29
  %v32 = vsub.f32 %v23, %v30
  %v33 = vsub.f32 %v24, %v31
  %v34 = vmul.f32 %v32, %v32
  %v35 = vmul.f32 %v33, %v33
  %36 = vadd.xlane.f32.xlu0 %v34
  %v37 = vpop.xlane.xlu0 %36
  %38 = vadd.xlane.f32.xlu0 %v35
  %v39 = vpop.xlane.xlu0 %38
  %v40 = vmul.f32 %v37, %v29
  %v41 = vmul.f32 %v39, %v29
  %v42 = vadd.f32 %v40, 1e-05
  %v43 = vadd.f32 %v41, 1e-05
  %v44 = vrsqrt.pop %v42
  %v45 = vrsqrt.pop %v43
  %v46 = vmul.f32 %v32, %v44
  %v47 = vmul.f32 %v33, %v45
  %v48 = vld [vmem:[%s1] sm:$0x1]
  %v50 = vlaneseq
  %v51 = vshrl.u32 %v50, 7
  %v52 = vsub.s32 0, %v51
  %v53 = vrot.slane %v48, %v52
  %v55 = vmul.f32 %v46, %v53
  %v56 = vmul.f32 %v47, %v53
  %v57 = vld [vmem:[%s2] sm:$0x1]
  %v59 = vlaneseq
  %v60 = vshrl.u32 %v59, 7
  %v61 = vsub.s32 0, %v60
  %v62 = vrot.slane %v57, %v61
  %v64 = vadd.f32 %v55, %v62
  %v65 = vadd.f32 %v56, %v62
  %v66 = vpack.c.bf16 %v65, %v64
  %v67 = vld [vmem:[%s3] sm:$0xff]
  %v68 = vld [vmem:[%s3 + $0x8] sm:$0xff]
  %v69 = vld [vmem:[%s3 + $0x10] sm:$0xff]
  %v70 = vld [vmem:[%s3 + $0x18] sm:$0xff]
  %v71 = vld [vmem:[%s3 + $0x20] sm:$0xff]
  %v72 = vld [vmem:[%s3 + $0x28] sm:$0xff]
  %v73 = vld [vmem:[%s3 + $0x30] sm:$0xff]
  %v74 = vld [vmem:[%s3 + $0x38] sm:$0xff]
  %v75 = vld [vmem:[%s3 + $0x40] sm:$0xff]
  %v76 = vld [vmem:[%s3 + $0x48] sm:$0xff]
  %v77 = vld [vmem:[%s3 + $0x50] sm:$0xff]
  %v78 = vld [vmem:[%s3 + $0x58] sm:$0xff]
  %v79 = vld [vmem:[%s3 + $0x60] sm:$0xff]
  %v80 = vld [vmem:[%s3 + $0x68] sm:$0xff]
  %v81 = vld [vmem:[%s3 + $0x70] sm:$0xff]
  %v82 = vld [vmem:[%s3 + $0x78] sm:$0xff]
  %v83 = vld [vmem:[%s4] sm:$0x3]
  %v85 = vlaneseq
  %v86 = vshrl.u32 %v85, 7
  %v87 = vsub.s32 0, %v86
  %v88 = vrot.slane %v83, %v87
  %v89 = vlaneseq
  %v90 = vshrl.u32 %v89, 7
  %v91 = vsub.s32 1, %v90
  %v92 = vrot.slane %v83, %v91
  %v111 = vunpack.c.l.b16 %v67
  %v112 = vunpack.c.h.b16 %v67
  %v113 = vunpack.c.l.b16 %v68
  %v114 = vunpack.c.h.b16 %v68
  %v115 = vunpack.c.l.b16 %v69
  %v116 = vunpack.c.h.b16 %v69
  %v117 = vunpack.c.l.b16 %v70
  %v118 = vunpack.c.h.b16 %v70
  %v119 = vunpack.c.l.b16 %v71
  %v120 = vunpack.c.h.b16 %v71
  %v121 = vunpack.c.l.b16 %v72
  %v122 = vunpack.c.h.b16 %v72
  %v123 = vunpack.c.l.b16 %v73
  %v124 = vunpack.c.h.b16 %v73
  %v125 = vunpack.c.l.b16 %v74
  %v126 = vunpack.c.h.b16 %v74
  %v127 = vunpack.c.l.b16 %v75
  %v128 = vunpack.c.h.b16 %v75
  %v129 = vunpack.c.l.b16 %v76
  %v130 = vunpack.c.h.b16 %v76
  %v131 = vunpack.c.l.b16 %v77
  %v132 = vunpack.c.h.b16 %v77
  %v133 = vunpack.c.l.b16 %v78
  %v134 = vunpack.c.h.b16 %v78
  %v135 = vunpack.c.l.b16 %v79
  %v136 = vunpack.c.h.b16 %v79
  %v137 = vunpack.c.l.b16 %v80
  %v138 = vunpack.c.h.b16 %v80
  %v139 = vunpack.c.l.b16 %v81
  %v140 = vunpack.c.h.b16 %v81
  %v141 = vunpack.c.l.b16 %v82
  %v142 = vunpack.c.h.b16 %v82
  %v143 = vpack.c.b16 %v113, %v111
  %v144 = vpack.c.b16 %v114, %v112
  %v145 = vpack.c.b16 %v117, %v115
  %v146 = vpack.c.b16 %v118, %v116
  %v147 = vpack.c.b16 %v121, %v119
  %v148 = vpack.c.b16 %v122, %v120
  %v149 = vpack.c.b16 %v125, %v123
  %v150 = vpack.c.b16 %v126, %v124
  %v151 = vpack.c.b16 %v129, %v127
  %v152 = vpack.c.b16 %v130, %v128
  %v153 = vpack.c.b16 %v133, %v131
  %v154 = vpack.c.b16 %v134, %v132
  %v155 = vpack.c.b16 %v137, %v135
  %v156 = vpack.c.b16 %v138, %v136
  %v157 = vpack.c.b16 %v141, %v139
  %v158 = vpack.c.b16 %v142, %v140
  %175 = vmatprep.subr.bf16.mxu0 %v158
  %176 = vmatpush1.bf16.msra.mxu0 %v157
  %177 = vmatprep.subr.bf16.mxu0 %v156
  %178 = vmatpush1.bf16.msra.mxu0 %v155
  %179 = vmatprep.subr.bf16.mxu0 %v154
  %180 = vmatpush1.bf16.msra.mxu0 %v153
  %181 = vmatprep.subr.bf16.mxu0 %v152
  %182 = vmatpush1.bf16.msra.mxu0 %v151
  %183 = vmatprep.subr.bf16.mxu0 %v150
  %184 = vmatpush1.bf16.msra.mxu0 %v149
  %185 = vmatprep.subr.bf16.mxu0 %v148
  %186 = vmatpush1.bf16.msra.mxu0 %v147
  %187 = vmatprep.subr.bf16.mxu0 %v146
  %188 = vmatpush1.bf16.msra.mxu0 %v145
  %189 = vmatprep.subr.bf16.mxu0 %v144
  %190 = vmatpush1.bf16.msra.mxu0 %v143
  %191 = vmatprep.subr.bf16.mxu0 0
  %192 = vmatpush2.bf16.msra.mxu0 0
  %193 = vmatprep.subr.bf16.mxu0 0
  %194 = vmatpush2.bf16.msra.mxu0 0
  %195 = vmatprep.subr.bf16.mxu0 0
  %196 = vmatpush2.bf16.msra.mxu0 0
  %197 = vmatprep.subr.bf16.mxu0 0
  %198 = vmatpush2.bf16.msra.mxu0 0
  %199 = vmatprep.subr.bf16.mxu0 0
  %200 = vmatpush2.bf16.msra.mxu0 0
  %201 = vmatprep.subr.bf16.mxu0 0
  %202 = vmatpush2.bf16.msra.mxu0 0
  %203 = vmatprep.subr.bf16.mxu0 0
  %204 = vmatpush2.bf16.msra.mxu0 0
  %205 = vmatprep.subr.bf16.mxu0 0
  %206 = vmatpush2.bf16.msra.mxu0 0
  %207 = vmatprep.mubr.bf16.mxu0 0
  %208 = vmatmul.mubr.bf16.gmra.mxu0 %v66
  %v209 = vpop.f32.mrf.mxu0
  %v210 = vadd.f32 %v88, %v209
  %v211 = vpop.f32.mrf.mxu0
  %v212 = vadd.f32 %v92, %v211
  %v213 = vpop.f32.mrf.mxu0
  %v214 = vadd.f32 %v88, %v213
  %v215 = vpop.f32.mrf.mxu0
  %v216 = vadd.f32 %v92, %v215
  %217 = vdwg.mxu0
  %218 = vst [vmem:[%s5] sm:$0xff] %v210
  %219 = vst [vmem:[%s5 + $0x8] sm:$0xff] %v212
  %220 = vst [vmem:[%s5 + $0x10] sm:$0xff] %v214
  %221 = vst [vmem:[%s5 + $0x18] sm:$0xff] %v216
  // Predicated region
  $region22: #{transformer_lm_forward.51} parent=0 // pred_check
    _
  $region23: #{transformer_lm_forward.51} parent=0 // pred_check_branch
    %223 = sbr.rel (0) target = $region25
  $region24: #{transformer_lm_forward.51} parent=0 // pred_region
    _
  $region25: #{transformer_lm_forward.51} parent=0 // pred_fallthru
    _
  // Predicated region
  $region26: #{transformer_lm_forward.51} parent=0 // pred_check
    _
  $region27: #{transformer_lm_forward.51} parent=0 // pred_check_branch
    %225 = sbr.rel (0) target = $region29
  $region28: #{transformer_lm_forward.51} parent=0 // pred_region
    _
  $region29: #{transformer_lm_forward.51} parent=0 // pred_fallthru
    _

</llo_original>
